<compile_context>
chip_gen: v6e
topology: v6e:2x2x1
jax: 0.10.0
libtpu: 0.0.40
codegen_flags: <defaults>
</compile_context>

<pallas_src>
import math
import jax
import jax.numpy as jnp
from jax import lax
from jax.experimental import pallas as pl
from jax.experimental.pallas import tpu as pltpu

# ---- static model configuration (small, consistent with the module) ----
S, B, D = 8, 2, 32          # seq, batch, d_model (input_dim)
H = 8                       # num_heads -> head_dim = 4
DH = D // H
FF = 64                     # dim_feedforward (hidden_dim)
L = 2                       # num_layers
MAX_LEN = 128
EPS = 1e-5                  # PyTorch LayerNorm default
SB = S * B                  # 16 flattened (seq, batch) rows
R = H * SB                  # 128 head-packed rows (full sublane occupancy)


def _layer_norm(x, w, b):
    mu = jnp.mean(x, axis=-1, keepdims=True)
    var = jnp.mean((x - mu) ** 2, axis=-1, keepdims=True)
    return (x - mu) * lax.rsqrt(var + EPS) * w + b


def _gelu(x):
    # exact (erf-based) GELU, matching PyTorch activation='gelu'
    return 0.5 * x * (1.0 + lax.erf(x * (1.0 / math.sqrt(2.0))))


def transformer_kernel(x_ref, pe_ref, amask_ref, hmask_ref,
                       inw_ref, inb_ref, ow_ref, ob_ref,
                       ln1w_ref, ln1b_ref, ln2w_ref, ln2b_ref,
                       f1w_ref, f1b_ref, f2w_ref, f2b_ref,
                       finw_ref, finb_ref, o_ref):
    # positional encoding (pe broadcast over batch); keep the residual stream
    # as a 2-D (S*B, D) slab for every matmul / layer-norm.
    x = (x_ref[...] + pe_ref[...]).reshape(SB, D)       # f32 residual stream
    amask = amask_ref[...]                              # (R, SB) additive: 0 same-batch / -1e30
    hmask = hmask_ref[...]                              # (R, D)  multiplicative head selector

    bf = jnp.bfloat16

    def mm(a, w, bias):
        # bf16 operands on the MXU, f32 accumulation, f32 bias.
        # Weights are already pre-transposed (and bf16) on the host: no .T here.
        return jnp.dot(a.astype(bf), w, preferred_element_type=jnp.float32) + bias

    for l in range(L):                                  # static unrolled layer loop
        # --- multi-head self-attention (post-norm encoder layer) ---
        # 1/sqrt(head_dim) is folded into Wq / bq on the host.
        qkv = mm(x, inw_ref[l], inb_ref[l])             # (SB, 3D) f32
        q = qkv[:, :D]                                  # (SB, D)
        k = qkv[:, D:2 * D].astype(bf)                  # (SB, D)
        v = qkv[:, 2 * D:].astype(bf)                   # (SB, D)

        # Head-packed queries: row r = h*SB + i holds q_i with only head-h lanes kept,
        # so one dense matmul produces every head's score matrix stacked along sublanes.
        qb = (jnp.concatenate([q] * H, axis=0) * hmask).astype(bf)          # (R, D)
        s = lax.dot_general(qb, k, (((1,), (1,)), ((), ())),
                            preferred_element_type=jnp.float32)             # (R, SB)
        s = s + amask                                   # kill cross-batch keys
        s = s - jnp.max(s, axis=-1, keepdims=True)
        p = jnp.exp(s)
        p = p * pl.reciprocal(jnp.sum(p, axis=-1, keepdims=True), approx=True)

        ctx = jnp.dot(p.astype(bf), v, preferred_element_type=jnp.float32)  # (R, D)
        # keep only each row-block's own head lanes, then collapse the head blocks
        ctx = (ctx * hmask).reshape(H, SB, D).sum(axis=0)                   # (SB, D)

        attn = mm(ctx, ow_ref[l], ob_ref[l])
        # TODO(synk): dropout omitted (inference / eval-mode semantics)
        x = _layer_norm(x + attn, ln1w_ref[l], ln1b_ref[l])

        # --- feed-forward: linear -> gelu -> linear ---
        h1 = _gelu(mm(x, f1w_ref[l], f1b_ref[l]))        # (SB, FF)
        h2 = mm(h1, f2w_ref[l], f2b_ref[l])              # (SB, D)
        x = _layer_norm(x + h2, ln2w_ref[l], ln2b_ref[l])

    # --- final output linear ---
    y = mm(x, finw_ref[...], finb_ref[...])
    o_ref[...] = y.reshape(S, B, D)


def custom_transformer(x, params):
    n_in = 1 + len(params)
    return pl.pallas_call(
        transformer_kernel,
        out_shape=jax.ShapeDtypeStruct((S, B, D), jnp.float32),
        # no grid: every operand is a full-array block resident in VMEM
        in_specs=[pl.BlockSpec(memory_space=pltpu.MemorySpace.VMEM)] * n_in,
        out_specs=pl.BlockSpec(memory_space=pltpu.MemorySpace.VMEM),
    )(x, *params)


def make_positional_encoding():
    position = jnp.arange(0, MAX_LEN, dtype=jnp.float32)[:, None]
    div_term = jnp.exp(jnp.arange(0, D, 2, dtype=jnp.float32) *
                       (-math.log(10000.0) / D))
    pe = jnp.zeros((MAX_LEN, D), jnp.float32)
    pe = pe.at[:, 0::2].set(jnp.sin(position * div_term))
    pe = pe.at[:, 1::2].set(jnp.cos(position * div_term))
    return pe[:S][:, None, :]                # (S, 1, D) — broadcast over batch


def make_params(key):
    """Raw parameters in PyTorch layout (W applied as x @ W.T)."""
    ks = jax.random.split(key, 10)
    sc = 0.02
    return dict(
        inw=sc * jax.random.normal(ks[0], (L, 3 * D, D), jnp.float32),   # in_proj_weight
        inb=sc * jax.random.normal(ks[1], (L, 3 * D), jnp.float32),
        ow=sc * jax.random.normal(ks[2], (L, D, D), jnp.float32),        # out_proj.weight
        ob=sc * jax.random.normal(ks[3], (L, D), jnp.float32),
        ln1w=jnp.ones((L, D), jnp.float32), ln1b=jnp.zeros((L, D), jnp.float32),
        ln2w=jnp.ones((L, D), jnp.float32), ln2b=jnp.zeros((L, D), jnp.float32),
        f1w=sc * jax.random.normal(ks[4], (L, FF, D), jnp.float32),
        f1b=sc * jax.random.normal(ks[5], (L, FF), jnp.float32),
        f2w=sc * jax.random.normal(ks[6], (L, D, FF), jnp.float32),
        f2b=sc * jax.random.normal(ks[7], (L, D), jnp.float32),
        finw=sc * jax.random.normal(ks[8], (D, D), jnp.float32),
        finb=sc * jax.random.normal(ks[9], (D,), jnp.float32),
    )


def prepare_params(raw):
    """Host-side prep: pre-transpose weights, fold the query scale, cast matmul
    weights to bf16, build the positional encoding and both attention masks."""
    scale = 1.0 / math.sqrt(DH)

    inwT = jnp.transpose(raw['inw'], (0, 2, 1))          # (L, D, 3D)
    inb = raw['inb']
    inwT = inwT.at[:, :, :D].multiply(scale)             # fold 1/sqrt(DH) into Wq
    inb = inb.at[:, :D].multiply(scale)                  # ... and bq

    owT = jnp.transpose(raw['ow'], (0, 2, 1))            # (L, D, D)
    f1wT = jnp.transpose(raw['f1w'], (0, 2, 1))          # (L, D, FF)
    f2wT = jnp.transpose(raw['f2w'], (0, 2, 1))          # (L, FF, D)
    finwT = raw['finw'].T                                # (D, D)

    pe = make_positional_encoding()

    # Flattened residual-stream rows are ordered i = s*B + b.  Head-packed score rows are
    # r = h*SB + i, so row r's batch is r % B; queries only attend to same-batch keys.
    rows = jnp.arange(R)
    cols = jnp.arange(SB)
    amask = jnp.where((rows[:, None] % B) == (cols[None, :] % B),
                      0.0, -1e30).astype(jnp.float32)                    # (R, SB)
    # Head selector: row block h keeps only lanes of head h (c // DH == h).
    lanes = jnp.arange(D)
    hmask = ((rows[:, None] // SB) == (lanes[None, :] // DH)).astype(jnp.float32)  # (R, D)

    bf = jnp.bfloat16
    return (pe, amask, hmask,
            inwT.astype(bf), inb.reshape(L, 1, 3 * D),
            owT.astype(bf), raw['ob'].reshape(L, 1, D),
            raw['ln1w'].reshape(L, 1, D), raw['ln1b'].reshape(L, 1, D),
            raw['ln2w'].reshape(L, 1, D), raw['ln2b'].reshape(L, 1, D),
            f1wT.astype(bf), raw['f1b'].reshape(L, 1, FF),
            f2wT.astype(bf), raw['f2b'].reshape(L, 1, D),
            finwT.astype(bf), raw['finb'].reshape(1, D))


if __name__ == "__main__":
    key = jax.random.PRNGKey(0)
    k_x, k_p = jax.random.split(key)
    x = jax.random.normal(k_x, (S, B, D), jnp.float32)   # (seq, batch, d_model)
    params = prepare_params(make_params(k_p))
    out = custom_transformer(x, params)
    out = jax.block_until_ready(out)
    assert out.shape == (S, B, D)
    assert bool(jnp.all(jnp.isfinite(out)))
    print("KERNEL_OK")
</pallas_src>

<mosaic_0001>
module attributes {stable_mosaic.version = 11 : i64} {
  func.func @transformer_kernel(%arg0: memref<8x2x32xf32, #tpu.memory_space<vmem>>, %arg1: memref<8x1x32xf32, #tpu.memory_space<vmem>>, %arg2: memref<128x16xf32, #tpu.memory_space<vmem>>, %arg3: memref<128x32xf32, #tpu.memory_space<vmem>>, %arg4: memref<2x32x96xbf16, #tpu.memory_space<vmem>>, %arg5: memref<2x1x96xf32, #tpu.memory_space<vmem>>, %arg6: memref<2x32x32xbf16, #tpu.memory_space<vmem>>, %arg7: memref<2x1x32xf32, #tpu.memory_space<vmem>>, %arg8: memref<2x1x32xf32, #tpu.memory_space<vmem>>, %arg9: memref<2x1x32xf32, #tpu.memory_space<vmem>>, %arg10: memref<2x1x32xf32, #tpu.memory_space<vmem>>, %arg11: memref<2x1x32xf32, #tpu.memory_space<vmem>>, %arg12: memref<2x32x64xbf16, #tpu.memory_space<vmem>>, %arg13: memref<2x1x64xf32, #tpu.memory_space<vmem>>, %arg14: memref<2x64x32xbf16, #tpu.memory_space<vmem>>, %arg15: memref<2x1x32xf32, #tpu.memory_space<vmem>>, %arg16: memref<32x32xbf16, #tpu.memory_space<vmem>>, %arg17: memref<1x32xf32, #tpu.memory_space<vmem>>, %arg18: memref<8x2x32xf32, #tpu.memory_space<vmem>>) attributes {dimension_semantics = [], scalar_prefetch = 0 : i64, scratch_operands = 0 : i64, tpu.core_type = #tpu.core_type<tc>} {
    %c0 = arith.constant 0 : index
    %c0_0 = arith.constant 0 : index
    %c0_1 = arith.constant 0 : index
    %0 = vector.load %arg0[%c0, %c0_0, %c0_1] : memref<8x2x32xf32, #tpu.memory_space<vmem>>, vector<8x2x32xf32>
    %c0_2 = arith.constant 0 : index
    %c0_3 = arith.constant 0 : index
    %c0_4 = arith.constant 0 : index
    %1 = vector.load %arg1[%c0_2, %c0_3, %c0_4] : memref<8x1x32xf32, #tpu.memory_space<vmem>>, vector<8x1x32xf32>
    %2 = vector.broadcast %1 : vector<8x1x32xf32> to vector<8x2x32xf32>
    %3 = arith.addf %0, %2 : vector<8x2x32xf32>
    %4 = vector.shape_cast %3 : vector<8x2x32xf32> to vector<16x32xf32>
    %c0_5 = arith.constant 0 : index
    %c0_6 = arith.constant 0 : index
    %5 = vector.load %arg2[%c0_5, %c0_6] : memref<128x16xf32, #tpu.memory_space<vmem>>, vector<128x16xf32>
    %c0_7 = arith.constant 0 : index
    %c0_8 = arith.constant 0 : index
    %6 = vector.load %arg3[%c0_7, %c0_8] : memref<128x32xf32, #tpu.memory_space<vmem>>, vector<128x32xf32>
    %c0_9 = arith.constant 0 : index
    %c0_10 = arith.constant 0 : index
    %c0_11 = arith.constant 0 : index
    %7 = vector.load %arg4[%c0_9, %c0_10, %c0_11] : memref<2x32x96xbf16, #tpu.memory_space<vmem>>, vector<1x32x96xbf16>
    %8 = vector.shape_cast %7 : vector<1x32x96xbf16> to vector<32x96xbf16>
    %c0_12 = arith.constant 0 : index
    %c0_13 = arith.constant 0 : index
    %c0_14 = arith.constant 0 : index
    %9 = vector.load %arg5[%c0_12, %c0_13, %c0_14] : memref<2x1x96xf32, #tpu.memory_space<vmem>>, vector<1x1x96xf32>
    %10 = vector.shape_cast %9 : vector<1x1x96xf32> to vector<1x96xf32>
    %11 = arith.truncf %4 : vector<16x32xf32> to vector<16x32xbf16>
    %cst = arith.constant dense<0.000000e+00> : vector<16x96xf32>
    %12 = tpu.matmul %11, %8, %cst {dimension_numbers = #tpu.dot_dimension_numbers<[1], [0], [0], [1], [0, 0, 1, 1], [], []>} : vector<16x32xbf16>, vector<32x96xbf16>, vector<16x96xf32> -> vector<16x96xf32>
    %13 = vector.broadcast %10 : vector<1x96xf32> to vector<16x96xf32>
    %14 = arith.addf %12, %13 : vector<16x96xf32>
    %15 = vector.extract_strided_slice %14 {offsets = [0, 0], sizes = [16, 32], strides = [1, 1]} : vector<16x96xf32> to vector<16x32xf32>
    %16 = vector.extract_strided_slice %14 {offsets = [0, 32], sizes = [16, 32], strides = [1, 1]} : vector<16x96xf32> to vector<16x32xf32>
    %17 = arith.truncf %16 : vector<16x32xf32> to vector<16x32xbf16>
    %18 = vector.extract_strided_slice %14 {offsets = [0, 64], sizes = [16, 32], strides = [1, 1]} : vector<16x96xf32> to vector<16x32xf32>
    %19 = arith.truncf %18 : vector<16x32xf32> to vector<16x32xbf16>
    %20 = tpu.concatenate %15, %15, %15, %15, %15, %15, %15, %15 in 0 : vector<16x32xf32>, vector<16x32xf32>, vector<16x32xf32>, vector<16x32xf32>, vector<16x32xf32>, vector<16x32xf32>, vector<16x32xf32>, vector<16x32xf32> -> vector<128x32xf32>
    %21 = arith.mulf %20, %6 : vector<128x32xf32>
    %22 = arith.truncf %21 : vector<128x32xf32> to vector<128x32xbf16>
    %cst_15 = arith.constant dense<0.000000e+00> : vector<128x16xf32>
    %23 = tpu.matmul %22, %17, %cst_15 {dimension_numbers = #tpu.dot_dimension_numbers<[1], [1], [0], [0], [0, 0, 1, 0], [], []>} : vector<128x32xbf16>, vector<16x32xbf16>, vector<128x16xf32> -> vector<128x16xf32>
    %24 = arith.addf %23, %5 : vector<128x16xf32>
    %cst_16 = arith.constant dense<0xFF800000> : vector<128xf32>
    %25 = vector.multi_reduction <maximumf>, %24, %cst_16 [1] : vector<128x16xf32> to vector<128xf32>
    %26 = vector.shape_cast %25 : vector<128xf32> to vector<128x1xf32>
    %27 = vector.broadcast %26 : vector<128x1xf32> to vector<128x16xf32>
    %28 = arith.subf %24, %27 : vector<128x16xf32>
    %29 = math.exp %28 : vector<128x16xf32>
    %cst_17 = arith.constant dense<0.000000e+00> : vector<128xf32>
    %30 = vector.multi_reduction <add>, %29, %cst_17 [1] : vector<128x16xf32> to vector<128xf32>
    %31 = vector.shape_cast %30 : vector<128xf32> to vector<128x1xf32>
    %32 = tpu.reciprocal %31 {approx = true} : vector<128x1xf32> -> vector<128x1xf32>
    %33 = vector.broadcast %32 : vector<128x1xf32> to vector<128x16xf32>
    %34 = arith.mulf %29, %33 : vector<128x16xf32>
    %35 = arith.truncf %34 : vector<128x16xf32> to vector<128x16xbf16>
    %cst_18 = arith.constant dense<0.000000e+00> : vector<128x32xf32>
    %36 = tpu.matmul %35, %19, %cst_18 {dimension_numbers = #tpu.dot_dimension_numbers<[1], [0], [0], [1], [0, 0, 1, 1], [], []>} : vector<128x16xbf16>, vector<16x32xbf16>, vector<128x32xf32> -> vector<128x32xf32>
    %37 = arith.mulf %36, %6 : vector<128x32xf32>
    %38 = vector.shape_cast %37 : vector<128x32xf32> to vector<8x16x32xf32>
    %cst_19 = arith.constant dense<0.000000e+00> : vector<16x32xf32>
    %39 = vector.multi_reduction <add>, %38, %cst_19 [0] : vector<8x16x32xf32> to vector<16x32xf32>
    %c0_20 = arith.constant 0 : index
    %c0_21 = arith.constant 0 : index
    %c0_22 = arith.constant 0 : index
    %40 = vector.load %arg6[%c0_20, %c0_21, %c0_22] : memref<2x32x32xbf16, #tpu.memory_space<vmem>>, vector<1x32x32xbf16>
    %41 = vector.shape_cast %40 : vector<1x32x32xbf16> to vector<32x32xbf16>
    %c0_23 = arith.constant 0 : index
    %c0_24 = arith.constant 0 : index
    %c0_25 = arith.constant 0 : index
    %42 = vector.load %arg7[%c0_23, %c0_24, %c0_25] : memref<2x1x32xf32, #tpu.memory_space<vmem>>, vector<1x1x32xf32>
    %43 = vector.shape_cast %42 : vector<1x1x32xf32> to vector<1x32xf32>
    %44 = arith.truncf %39 : vector<16x32xf32> to vector<16x32xbf16>
    %cst_26 = arith.constant dense<0.000000e+00> : vector<16x32xf32>
    %45 = tpu.matmul %44, %41, %cst_26 {dimension_numbers = #tpu.dot_dimension_numbers<[1], [0], [0], [1], [0, 0, 1, 1], [], []>} : vector<16x32xbf16>, vector<32x32xbf16>, vector<16x32xf32> -> vector<16x32xf32>
    %46 = vector.broadcast %43 : vector<1x32xf32> to vector<16x32xf32>
    %47 = arith.addf %45, %46 : vector<16x32xf32>
    %48 = arith.addf %4, %47 : vector<16x32xf32>
    %c0_27 = arith.constant 0 : index
    %c0_28 = arith.constant 0 : index
    %c0_29 = arith.constant 0 : index
    %49 = vector.load %arg8[%c0_27, %c0_28, %c0_29] : memref<2x1x32xf32, #tpu.memory_space<vmem>>, vector<1x1x32xf32>
    %50 = vector.shape_cast %49 : vector<1x1x32xf32> to vector<1x32xf32>
    %c0_30 = arith.constant 0 : index
    %c0_31 = arith.constant 0 : index
    %c0_32 = arith.constant 0 : index
    %51 = vector.load %arg9[%c0_30, %c0_31, %c0_32] : memref<2x1x32xf32, #tpu.memory_space<vmem>>, vector<1x1x32xf32>
    %52 = vector.shape_cast %51 : vector<1x1x32xf32> to vector<1x32xf32>
    %cst_33 = arith.constant dense<0.000000e+00> : vector<16xf32>
    %53 = vector.multi_reduction <add>, %48, %cst_33 [1] : vector<16x32xf32> to vector<16xf32>
    %54 = vector.shape_cast %53 : vector<16xf32> to vector<16x1xf32>
    %cst_34 = arith.constant 3.200000e+01 : f32
    %55 = vector.broadcast %cst_34 : f32 to vector<16x1xf32>
    %56 = arith.divf %54, %55 : vector<16x1xf32>
    %57 = vector.broadcast %56 : vector<16x1xf32> to vector<16x32xf32>
    %58 = arith.subf %48, %57 : vector<16x32xf32>
    %59 = arith.mulf %58, %58 : vector<16x32xf32>
    %cst_35 = arith.constant dense<0.000000e+00> : vector<16xf32>
    %60 = vector.multi_reduction <add>, %59, %cst_35 [1] : vector<16x32xf32> to vector<16xf32>
    %61 = vector.shape_cast %60 : vector<16xf32> to vector<16x1xf32>
    %cst_36 = arith.constant 3.200000e+01 : f32
    %62 = vector.broadcast %cst_36 : f32 to vector<16x1xf32>
    %63 = arith.divf %61, %62 : vector<16x1xf32>
    %64 = vector.broadcast %56 : vector<16x1xf32> to vector<16x32xf32>
    %65 = arith.subf %48, %64 : vector<16x32xf32>
    %cst_37 = arith.constant 9.99999974E-6 : f32
    %66 = vector.broadcast %cst_37 : f32 to vector<16x1xf32>
    %67 = arith.addf %63, %66 : vector<16x1xf32>
    %68 = math.rsqrt %67 : vector<16x1xf32>
    %69 = vector.broadcast %68 : vector<16x1xf32> to vector<16x32xf32>
    %70 = arith.mulf %65, %69 : vector<16x32xf32>
    %71 = vector.broadcast %50 : vector<1x32xf32> to vector<16x32xf32>
    %72 = arith.mulf %70, %71 : vector<16x32xf32>
    %73 = vector.broadcast %52 : vector<1x32xf32> to vector<16x32xf32>
    %74 = arith.addf %72, %73 : vector<16x32xf32>
    %c0_38 = arith.constant 0 : index
    %c0_39 = arith.constant 0 : index
    %c0_40 = arith.constant 0 : index
    %75 = vector.load %arg12[%c0_38, %c0_39, %c0_40] : memref<2x32x64xbf16, #tpu.memory_space<vmem>>, vector<1x32x64xbf16>
    %76 = vector.shape_cast %75 : vector<1x32x64xbf16> to vector<32x64xbf16>
    %c0_41 = arith.constant 0 : index
    %c0_42 = arith.constant 0 : index
    %c0_43 = arith.constant 0 : index
    %77 = vector.load %arg13[%c0_41, %c0_42, %c0_43] : memref<2x1x64xf32, #tpu.memory_space<vmem>>, vector<1x1x64xf32>
    %78 = vector.shape_cast %77 : vector<1x1x64xf32> to vector<1x64xf32>
    %79 = arith.truncf %74 : vector<16x32xf32> to vector<16x32xbf16>
    %cst_44 = arith.constant dense<0.000000e+00> : vector<16x64xf32>
    %80 = tpu.matmul %79, %76, %cst_44 {dimension_numbers = #tpu.dot_dimension_numbers<[1], [0], [0], [1], [0, 0, 1, 1], [], []>} : vector<16x32xbf16>, vector<32x64xbf16>, vector<16x64xf32> -> vector<16x64xf32>
    %81 = vector.broadcast %78 : vector<1x64xf32> to vector<16x64xf32>
    %82 = arith.addf %80, %81 : vector<16x64xf32>
    %cst_45 = arith.constant 5.000000e-01 : f32
    %83 = vector.broadcast %cst_45 : f32 to vector<16x64xf32>
    %84 = arith.mulf %83, %82 : vector<16x64xf32>
    %cst_46 = arith.constant 0.707106769 : f32
    %85 = vector.broadcast %cst_46 : f32 to vector<16x64xf32>
    %86 = arith.mulf %82, %85 : vector<16x64xf32>
    %87 = math.erf %86 : vector<16x64xf32>
    %cst_47 = arith.constant 1.000000e+00 : f32
    %88 = vector.broadcast %cst_47 : f32 to vector<16x64xf32>
    %89 = arith.addf %88, %87 : vector<16x64xf32>
    %90 = arith.mulf %84, %89 : vector<16x64xf32>
    %c0_48 = arith.constant 0 : index
    %c0_49 = arith.constant 0 : index
    %c0_50 = arith.constant 0 : index
    %91 = vector.load %arg14[%c0_48, %c0_49, %c0_50] : memref<2x64x32xbf16, #tpu.memory_space<vmem>>, vector<1x64x32xbf16>
    %92 = vector.shape_cast %91 : vector<1x64x32xbf16> to vector<64x32xbf16>
    %c0_51 = arith.constant 0 : index
    %c0_52 = arith.constant 0 : index
    %c0_53 = arith.constant 0 : index
    %93 = vector.load %arg15[%c0_51, %c0_52, %c0_53] : memref<2x1x32xf32, #tpu.memory_space<vmem>>, vector<1x1x32xf32>
    %94 = vector.shape_cast %93 : vector<1x1x32xf32> to vector<1x32xf32>
    %95 = arith.truncf %90 : vector<16x64xf32> to vector<16x64xbf16>
    %cst_54 = arith.constant dense<0.000000e+00> : vector<16x32xf32>
    %96 = tpu.matmul %95, %92, %cst_54 {dimension_numbers = #tpu.dot_dimension_numbers<[1], [0], [0], [1], [0, 0, 1, 1], [], []>} : vector<16x64xbf16>, vector<64x32xbf16>, vector<16x32xf32> -> vector<16x32xf32>
    %97 = vector.broadcast %94 : vector<1x32xf32> to vector<16x32xf32>
    %98 = arith.addf %96, %97 : vector<16x32xf32>
    %99 = arith.addf %74, %98 : vector<16x32xf32>
    %c0_55 = arith.constant 0 : index
    %c0_56 = arith.constant 0 : index
    %c0_57 = arith.constant 0 : index
    %100 = vector.load %arg10[%c0_55, %c0_56, %c0_57] : memref<2x1x32xf32, #tpu.memory_space<vmem>>, vector<1x1x32xf32>
    %101 = vector.shape_cast %100 : vector<1x1x32xf32> to vector<1x32xf32>
    %c0_58 = arith.constant 0 : index
    %c0_59 = arith.constant 0 : index
    %c0_60 = arith.constant 0 : index
    %102 = vector.load %arg11[%c0_58, %c0_59, %c0_60] : memref<2x1x32xf32, #tpu.memory_space<vmem>>, vector<1x1x32xf32>
    %103 = vector.shape_cast %102 : vector<1x1x32xf32> to vector<1x32xf32>
    %cst_61 = arith.constant dense<0.000000e+00> : vector<16xf32>
    %104 = vector.multi_reduction <add>, %99, %cst_61 [1] : vector<16x32xf32> to vector<16xf32>
    %105 = vector.shape_cast %104 : vector<16xf32> to vector<16x1xf32>
    %cst_62 = arith.constant 3.200000e+01 : f32
    %106 = vector.broadcast %cst_62 : f32 to vector<16x1xf32>
    %107 = arith.divf %105, %106 : vector<16x1xf32>
    %108 = vector.broadcast %107 : vector<16x1xf32> to vector<16x32xf32>
    %109 = arith.subf %99, %108 : vector<16x32xf32>
    %110 = arith.mulf %109, %109 : vector<16x32xf32>
    %cst_63 = arith.constant dense<0.000000e+00> : vector<16xf32>
    %111 = vector.multi_reduction <add>, %110, %cst_63 [1] : vector<16x32xf32> to vector<16xf32>
    %112 = vector.shape_cast %111 : vector<16xf32> to vector<16x1xf32>
    %cst_64 = arith.constant 3.200000e+01 : f32
    %113 = vector.broadcast %cst_64 : f32 to vector<16x1xf32>
    %114 = arith.divf %112, %113 : vector<16x1xf32>
    %115 = vector.broadcast %107 : vector<16x1xf32> to vector<16x32xf32>
    %116 = arith.subf %99, %115 : vector<16x32xf32>
    %cst_65 = arith.constant 9.99999974E-6 : f32
    %117 = vector.broadcast %cst_65 : f32 to vector<16x1xf32>
    %118 = arith.addf %114, %117 : vector<16x1xf32>
    %119 = math.rsqrt %118 : vector<16x1xf32>
    %120 = vector.broadcast %119 : vector<16x1xf32> to vector<16x32xf32>
    %121 = arith.mulf %116, %120 : vector<16x32xf32>
    %122 = vector.broadcast %101 : vector<1x32xf32> to vector<16x32xf32>
    %123 = arith.mulf %121, %122 : vector<16x32xf32>
    %124 = vector.broadcast %103 : vector<1x32xf32> to vector<16x32xf32>
    %125 = arith.addf %123, %124 : vector<16x32xf32>
    %c1 = arith.constant 1 : index
    %c0_66 = arith.constant 0 : index
    %c0_67 = arith.constant 0 : index
    %126 = vector.load %arg4[%c1, %c0_66, %c0_67] : memref<2x32x96xbf16, #tpu.memory_space<vmem>>, vector<1x32x96xbf16>
    %127 = vector.shape_cast %126 : vector<1x32x96xbf16> to vector<32x96xbf16>
    %c1_68 = arith.constant 1 : index
    %c0_69 = arith.constant 0 : index
    %c0_70 = arith.constant 0 : index
    %128 = vector.load %arg5[%c1_68, %c0_69, %c0_70] : memref<2x1x96xf32, #tpu.memory_space<vmem>>, vector<1x1x96xf32>
    %129 = vector.shape_cast %128 : vector<1x1x96xf32> to vector<1x96xf32>
    %130 = arith.truncf %125 : vector<16x32xf32> to vector<16x32xbf16>
    %cst_71 = arith.constant dense<0.000000e+00> : vector<16x96xf32>
    %131 = tpu.matmul %130, %127, %cst_71 {dimension_numbers = #tpu.dot_dimension_numbers<[1], [0], [0], [1], [0, 0, 1, 1], [], []>} : vector<16x32xbf16>, vector<32x96xbf16>, vector<16x96xf32> -> vector<16x96xf32>
    %132 = vector.broadcast %129 : vector<1x96xf32> to vector<16x96xf32>
    %133 = arith.addf %131, %132 : vector<16x96xf32>
    %134 = vector.extract_strided_slice %133 {offsets = [0, 0], sizes = [16, 32], strides = [1, 1]} : vector<16x96xf32> to vector<16x32xf32>
    %135 = vector.extract_strided_slice %133 {offsets = [0, 32], sizes = [16, 32], strides = [1, 1]} : vector<16x96xf32> to vector<16x32xf32>
    %136 = arith.truncf %135 : vector<16x32xf32> to vector<16x32xbf16>
    %137 = vector.extract_strided_slice %133 {offsets = [0, 64], sizes = [16, 32], strides = [1, 1]} : vector<16x96xf32> to vector<16x32xf32>
    %138 = arith.truncf %137 : vector<16x32xf32> to vector<16x32xbf16>
    %139 = tpu.concatenate %134, %134, %134, %134, %134, %134, %134, %134 in 0 : vector<16x32xf32>, vector<16x32xf32>, vector<16x32xf32>, vector<16x32xf32>, vector<16x32xf32>, vector<16x32xf32>, vector<16x32xf32>, vector<16x32xf32> -> vector<128x32xf32>
    %140 = arith.mulf %139, %6 : vector<128x32xf32>
    %141 = arith.truncf %140 : vector<128x32xf32> to vector<128x32xbf16>
    %cst_72 = arith.constant dense<0.000000e+00> : vector<128x16xf32>
    %142 = tpu.matmul %141, %136, %cst_72 {dimension_numbers = #tpu.dot_dimension_numbers<[1], [1], [0], [0], [0, 0, 1, 0], [], []>} : vector<128x32xbf16>, vector<16x32xbf16>, vector<128x16xf32> -> vector<128x16xf32>
    %143 = arith.addf %142, %5 : vector<128x16xf32>
    %cst_73 = arith.constant dense<0xFF800000> : vector<128xf32>
    %144 = vector.multi_reduction <maximumf>, %143, %cst_73 [1] : vector<128x16xf32> to vector<128xf32>
    %145 = vector.shape_cast %144 : vector<128xf32> to vector<128x1xf32>
    %146 = vector.broadcast %145 : vector<128x1xf32> to vector<128x16xf32>
    %147 = arith.subf %143, %146 : vector<128x16xf32>
    %148 = math.exp %147 : vector<128x16xf32>
    %cst_74 = arith.constant dense<0.000000e+00> : vector<128xf32>
    %149 = vector.multi_reduction <add>, %148, %cst_74 [1] : vector<128x16xf32> to vector<128xf32>
    %150 = vector.shape_cast %149 : vector<128xf32> to vector<128x1xf32>
    %151 = tpu.reciprocal %150 {approx = true} : vector<128x1xf32> -> vector<128x1xf32>
    %152 = vector.broadcast %151 : vector<128x1xf32> to vector<128x16xf32>
    %153 = arith.mulf %148, %152 : vector<128x16xf32>
    %154 = arith.truncf %153 : vector<128x16xf32> to vector<128x16xbf16>
    %cst_75 = arith.constant dense<0.000000e+00> : vector<128x32xf32>
    %155 = tpu.matmul %154, %138, %cst_75 {dimension_numbers = #tpu.dot_dimension_numbers<[1], [0], [0], [1], [0, 0, 1, 1], [], []>} : vector<128x16xbf16>, vector<16x32xbf16>, vector<128x32xf32> -> vector<128x32xf32>
    %156 = arith.mulf %155, %6 : vector<128x32xf32>
    %157 = vector.shape_cast %156 : vector<128x32xf32> to vector<8x16x32xf32>
    %cst_76 = arith.constant dense<0.000000e+00> : vector<16x32xf32>
    %158 = vector.multi_reduction <add>, %157, %cst_76 [0] : vector<8x16x32xf32> to vector<16x32xf32>
    %c1_77 = arith.constant 1 : index
    %c0_78 = arith.constant 0 : index
    %c0_79 = arith.constant 0 : index
    %159 = vector.load %arg6[%c1_77, %c0_78, %c0_79] : memref<2x32x32xbf16, #tpu.memory_space<vmem>>, vector<1x32x32xbf16>
    %160 = vector.shape_cast %159 : vector<1x32x32xbf16> to vector<32x32xbf16>
    %c1_80 = arith.constant 1 : index
    %c0_81 = arith.constant 0 : index
    %c0_82 = arith.constant 0 : index
    %161 = vector.load %arg7[%c1_80, %c0_81, %c0_82] : memref<2x1x32xf32, #tpu.memory_space<vmem>>, vector<1x1x32xf32>
    %162 = vector.shape_cast %161 : vector<1x1x32xf32> to vector<1x32xf32>
    %163 = arith.truncf %158 : vector<16x32xf32> to vector<16x32xbf16>
    %cst_83 = arith.constant dense<0.000000e+00> : vector<16x32xf32>
    %164 = tpu.matmul %163, %160, %cst_83 {dimension_numbers = #tpu.dot_dimension_numbers<[1], [0], [0], [1], [0, 0, 1, 1], [], []>} : vector<16x32xbf16>, vector<32x32xbf16>, vector<16x32xf32> -> vector<16x32xf32>
    %165 = vector.broadcast %162 : vector<1x32xf32> to vector<16x32xf32>
    %166 = arith.addf %164, %165 : vector<16x32xf32>
    %167 = arith.addf %125, %166 : vector<16x32xf32>
    %c1_84 = arith.constant 1 : index
    %c0_85 = arith.constant 0 : index
    %c0_86 = arith.constant 0 : index
    %168 = vector.load %arg8[%c1_84, %c0_85, %c0_86] : memref<2x1x32xf32, #tpu.memory_space<vmem>>, vector<1x1x32xf32>
    %169 = vector.shape_cast %168 : vector<1x1x32xf32> to vector<1x32xf32>
    %c1_87 = arith.constant 1 : index
    %c0_88 = arith.constant 0 : index
    %c0_89 = arith.constant 0 : index
    %170 = vector.load %arg9[%c1_87, %c0_88, %c0_89] : memref<2x1x32xf32, #tpu.memory_space<vmem>>, vector<1x1x32xf32>
    %171 = vector.shape_cast %170 : vector<1x1x32xf32> to vector<1x32xf32>
    %cst_90 = arith.constant dense<0.000000e+00> : vector<16xf32>
    %172 = vector.multi_reduction <add>, %167, %cst_90 [1] : vector<16x32xf32> to vector<16xf32>
    %173 = vector.shape_cast %172 : vector<16xf32> to vector<16x1xf32>
    %cst_91 = arith.constant 3.200000e+01 : f32
    %174 = vector.broadcast %cst_91 : f32 to vector<16x1xf32>
    %175 = arith.divf %173, %174 : vector<16x1xf32>
    %176 = vector.broadcast %175 : vector<16x1xf32> to vector<16x32xf32>
    %177 = arith.subf %167, %176 : vector<16x32xf32>
    %178 = arith.mulf %177, %177 : vector<16x32xf32>
    %cst_92 = arith.constant dense<0.000000e+00> : vector<16xf32>
    %179 = vector.multi_reduction <add>, %178, %cst_92 [1] : vector<16x32xf32> to vector<16xf32>
    %180 = vector.shape_cast %179 : vector<16xf32> to vector<16x1xf32>
    %cst_93 = arith.constant 3.200000e+01 : f32
    %181 = vector.broadcast %cst_93 : f32 to vector<16x1xf32>
    %182 = arith.divf %180, %181 : vector<16x1xf32>
    %183 = vector.broadcast %175 : vector<16x1xf32> to vector<16x32xf32>
    %184 = arith.subf %167, %183 : vector<16x32xf32>
    %cst_94 = arith.constant 9.99999974E-6 : f32
    %185 = vector.broadcast %cst_94 : f32 to vector<16x1xf32>
    %186 = arith.addf %182, %185 : vector<16x1xf32>
    %187 = math.rsqrt %186 : vector<16x1xf32>
    %188 = vector.broadcast %187 : vector<16x1xf32> to vector<16x32xf32>
    %189 = arith.mulf %184, %188 : vector<16x32xf32>
    %190 = vector.broadcast %169 : vector<1x32xf32> to vector<16x32xf32>
    %191 = arith.mulf %189, %190 : vector<16x32xf32>
    %192 = vector.broadcast %171 : vector<1x32xf32> to vector<16x32xf32>
    %193 = arith.addf %191, %192 : vector<16x32xf32>
    %c1_95 = arith.constant 1 : index
    %c0_96 = arith.constant 0 : index
    %c0_97 = arith.constant 0 : index
    %194 = vector.load %arg12[%c1_95, %c0_96, %c0_97] : memref<2x32x64xbf16, #tpu.memory_space<vmem>>, vector<1x32x64xbf16>
    %195 = vector.shape_cast %194 : vector<1x32x64xbf16> to vector<32x64xbf16>
    %c1_98 = arith.constant 1 : index
    %c0_99 = arith.constant 0 : index
    %c0_100 = arith.constant 0 : index
    %196 = vector.load %arg13[%c1_98, %c0_99, %c0_100] : memref<2x1x64xf32, #tpu.memory_space<vmem>>, vector<1x1x64xf32>
    %197 = vector.shape_cast %196 : vector<1x1x64xf32> to vector<1x64xf32>
    %198 = arith.truncf %193 : vector<16x32xf32> to vector<16x32xbf16>
    %cst_101 = arith.constant dense<0.000000e+00> : vector<16x64xf32>
    %199 = tpu.matmul %198, %195, %cst_101 {dimension_numbers = #tpu.dot_dimension_numbers<[1], [0], [0], [1], [0, 0, 1, 1], [], []>} : vector<16x32xbf16>, vector<32x64xbf16>, vector<16x64xf32> -> vector<16x64xf32>
    %200 = vector.broadcast %197 : vector<1x64xf32> to vector<16x64xf32>
    %201 = arith.addf %199, %200 : vector<16x64xf32>
    %cst_102 = arith.constant 5.000000e-01 : f32
    %202 = vector.broadcast %cst_102 : f32 to vector<16x64xf32>
    %203 = arith.mulf %202, %201 : vector<16x64xf32>
    %cst_103 = arith.constant 0.707106769 : f32
    %204 = vector.broadcast %cst_103 : f32 to vector<16x64xf32>
    %205 = arith.mulf %201, %204 : vector<16x64xf32>
    %206 = math.erf %205 : vector<16x64xf32>
    %cst_104 = arith.constant 1.000000e+00 : f32
    %207 = vector.broadcast %cst_104 : f32 to vector<16x64xf32>
    %208 = arith.addf %207, %206 : vector<16x64xf32>
    %209 = arith.mulf %203, %208 : vector<16x64xf32>
    %c1_105 = arith.constant 1 : index
    %c0_106 = arith.constant 0 : index
    %c0_107 = arith.constant 0 : index
    %210 = vector.load %arg14[%c1_105, %c0_106, %c0_107] : memref<2x64x32xbf16, #tpu.memory_space<vmem>>, vector<1x64x32xbf16>
    %211 = vector.shape_cast %210 : vector<1x64x32xbf16> to vector<64x32xbf16>
    %c1_108 = arith.constant 1 : index
    %c0_109 = arith.constant 0 : index
    %c0_110 = arith.constant 0 : index
    %212 = vector.load %arg15[%c1_108, %c0_109, %c0_110] : memref<2x1x32xf32, #tpu.memory_space<vmem>>, vector<1x1x32xf32>
    %213 = vector.shape_cast %212 : vector<1x1x32xf32> to vector<1x32xf32>
    %214 = arith.truncf %209 : vector<16x64xf32> to vector<16x64xbf16>
    %cst_111 = arith.constant dense<0.000000e+00> : vector<16x32xf32>
    %215 = tpu.matmul %214, %211, %cst_111 {dimension_numbers = #tpu.dot_dimension_numbers<[1], [0], [0], [1], [0, 0, 1, 1], [], []>} : vector<16x64xbf16>, vector<64x32xbf16>, vector<16x32xf32> -> vector<16x32xf32>
    %216 = vector.broadcast %213 : vector<1x32xf32> to vector<16x32xf32>
    %217 = arith.addf %215, %216 : vector<16x32xf32>
    %218 = arith.addf %193, %217 : vector<16x32xf32>
    %c1_112 = arith.constant 1 : index
    %c0_113 = arith.constant 0 : index
    %c0_114 = arith.constant 0 : index
    %219 = vector.load %arg10[%c1_112, %c0_113, %c0_114] : memref<2x1x32xf32, #tpu.memory_space<vmem>>, vector<1x1x32xf32>
    %220 = vector.shape_cast %219 : vector<1x1x32xf32> to vector<1x32xf32>
    %c1_115 = arith.constant 1 : index
    %c0_116 = arith.constant 0 : index
    %c0_117 = arith.constant 0 : index
    %221 = vector.load %arg11[%c1_115, %c0_116, %c0_117] : memref<2x1x32xf32, #tpu.memory_space<vmem>>, vector<1x1x32xf32>
    %222 = vector.shape_cast %221 : vector<1x1x32xf32> to vector<1x32xf32>
    %cst_118 = arith.constant dense<0.000000e+00> : vector<16xf32>
    %223 = vector.multi_reduction <add>, %218, %cst_118 [1] : vector<16x32xf32> to vector<16xf32>
    %224 = vector.shape_cast %223 : vector<16xf32> to vector<16x1xf32>
    %cst_119 = arith.constant 3.200000e+01 : f32
    %225 = vector.broadcast %cst_119 : f32 to vector<16x1xf32>
    %226 = arith.divf %224, %225 : vector<16x1xf32>
    %227 = vector.broadcast %226 : vector<16x1xf32> to vector<16x32xf32>
    %228 = arith.subf %218, %227 : vector<16x32xf32>
    %229 = arith.mulf %228, %228 : vector<16x32xf32>
    %cst_120 = arith.constant dense<0.000000e+00> : vector<16xf32>
    %230 = vector.multi_reduction <add>, %229, %cst_120 [1] : vector<16x32xf32> to vector<16xf32>
    %231 = vector.shape_cast %230 : vector<16xf32> to vector<16x1xf32>
    %cst_121 = arith.constant 3.200000e+01 : f32
    %232 = vector.broadcast %cst_121 : f32 to vector<16x1xf32>
    %233 = arith.divf %231, %232 : vector<16x1xf32>
    %234 = vector.broadcast %226 : vector<16x1xf32> to vector<16x32xf32>
    %235 = arith.subf %218, %234 : vector<16x32xf32>
    %cst_122 = arith.constant 9.99999974E-6 : f32
    %236 = vector.broadcast %cst_122 : f32 to vector<16x1xf32>
    %237 = arith.addf %233, %236 : vector<16x1xf32>
    %238 = math.rsqrt %237 : vector<16x1xf32>
    %239 = vector.broadcast %238 : vector<16x1xf32> to vector<16x32xf32>
    %240 = arith.mulf %235, %239 : vector<16x32xf32>
    %241 = vector.broadcast %220 : vector<1x32xf32> to vector<16x32xf32>
    %242 = arith.mulf %240, %241 : vector<16x32xf32>
    %243 = vector.broadcast %222 : vector<1x32xf32> to vector<16x32xf32>
    %244 = arith.addf %242, %243 : vector<16x32xf32>
    %c0_123 = arith.constant 0 : index
    %c0_124 = arith.constant 0 : index
    %245 = vector.load %arg16[%c0_123, %c0_124] : memref<32x32xbf16, #tpu.memory_space<vmem>>, vector<32x32xbf16>
    %c0_125 = arith.constant 0 : index
    %c0_126 = arith.constant 0 : index
    %246 = vector.load %arg17[%c0_125, %c0_126] : memref<1x32xf32, #tpu.memory_space<vmem>>, vector<1x32xf32>
    %247 = arith.truncf %244 : vector<16x32xf32> to vector<16x32xbf16>
    %cst_127 = arith.constant dense<0.000000e+00> : vector<16x32xf32>
    %248 = tpu.matmul %247, %245, %cst_127 {dimension_numbers = #tpu.dot_dimension_numbers<[1], [0], [0], [1], [0, 0, 1, 1], [], []>} : vector<16x32xbf16>, vector<32x32xbf16>, vector<16x32xf32> -> vector<16x32xf32>
    %249 = vector.broadcast %246 : vector<1x32xf32> to vector<16x32xf32>
    %250 = arith.addf %248, %249 : vector<16x32xf32>
    %251 = vector.shape_cast %250 : vector<16x32xf32> to vector<8x2x32xf32>
    %c0_128 = arith.constant 0 : index
    %c0_129 = arith.constant 0 : index
    %c0_130 = arith.constant 0 : index
    %252 = vector.load %arg18[%c0_128, %c0_129, %c0_130] : memref<8x2x32xf32, #tpu.memory_space<vmem>>, vector<8x2x32xf32>
    tpu.vector_store %arg18[%c0_128, %c0_129, %c0_130], %251 {strides = array<i32>} : memref<8x2x32xf32, #tpu.memory_space<vmem>>, vector<8x2x32xf32>,
    return
  }
}

</mosaic_0001>

<llo_original>
// kernel: tpu_custom_call.1
$region0: #{tpu_custom_call.1}
  #allocation0 [shape = 'u32[]', space=smem, size = 0x4, offset = 0x4, fixed_abs, tag = 'smem constant byte address 0x4 - core index']
  #allocation1 [shape = 'u32[144,128]{1,0:T(1,128)}', space=vmem, size = 0x12000, scoped, tag = 'internal scratch']
  %s0 = inlined_call_operand.vmem [shape: f32[8,2,32], index: 0, kind: input, shape index: {}]
  %s1 = inlined_call_operand.vmem [shape: f32[8,1,32], index: 1, kind: input, shape index: {}]
  %s2 = inlined_call_operand.vmem [shape: f32[128,16], index: 2, kind: input, shape index: {}]
  %s3 = inlined_call_operand.vmem [shape: f32[128,32], index: 3, kind: input, shape index: {}]
  %s4 = inlined_call_operand.vmem [shape: bf16[2,32,96], index: 4, kind: input, shape index: {}]
  %s5 = inlined_call_operand.vmem [shape: f32[2,1,96], index: 5, kind: input, shape index: {}]
  %s6 = inlined_call_operand.vmem [shape: bf16[2,32,32], index: 6, kind: input, shape index: {}]
  %s7 = inlined_call_operand.vmem [shape: f32[2,1,32], index: 7, kind: input, shape index: {}]
  %s8 = inlined_call_operand.vmem [shape: f32[2,1,32], index: 8, kind: input, shape index: {}]
  %s9 = inlined_call_operand.vmem [shape: f32[2,1,32], index: 9, kind: input, shape index: {}]
  %s10 = inlined_call_operand.vmem [shape: f32[2,1,32], index: 10, kind: input, shape index: {}]
  %s11 = inlined_call_operand.vmem [shape: f32[2,1,32], index: 11, kind: input, shape index: {}]
  %s12 = inlined_call_operand.vmem [shape: bf16[2,32,64], index: 12, kind: input, shape index: {}]
  %s13 = inlined_call_operand.vmem [shape: f32[2,1,64], index: 13, kind: input, shape index: {}]
  %s14 = inlined_call_operand.vmem [shape: bf16[2,64,32], index: 14, kind: input, shape index: {}]
  %s15 = inlined_call_operand.vmem [shape: f32[2,1,32], index: 15, kind: input, shape index: {}]
  %s16 = inlined_call_operand.vmem [shape: bf16[32,32], index: 16, kind: input, shape index: {}]
  %s17 = inlined_call_operand.vmem [shape: f32[1,32], index: 17, kind: input, shape index: {}]
  %s18 = inlined_call_operand.hbm [shape: f32[8,2,32], index: 18, kind: output, shape index: {}]
  %s19 = sld [smem:[#allocation0]]
  $region82: #{tpu_custom_call.1} parent=0
    _
  %s21 = ssub.s32 1, %s19
  %s22 = scalar_select 0, %s21, %s19
  $region1: #{tpu_custom_call.1} parent=0
    #allocation2 [shape = 'u8[8192]{0}', space=vmem, size = 0x2000, scoped, tag = 'output window, operand 0, single buffered']
    #allocation3 [shape = 's32[1]{0}', space=sflag, size = 0x4, scoped, tag = 'scoped memory for tpu_custom_call.1']
    %23 = vsyncpa [#allocation3], 0
    // Predicated region
    $region2: #{tpu_custom_call.1} parent=1 // pred_check
      _
    $region3: #{tpu_custom_call.1} parent=1 // pred_check_branch
      %25 = sbr.rel (0) target = $region5
    $region4: #{tpu_custom_call.1} parent=1 // pred_region
      _
    $region5: #{tpu_custom_call.1} parent=1 // pred_fallthru
      _
    // Predicated region
    $region6: #{tpu_custom_call.1} parent=1 // pred_check
      _
    $region7: #{tpu_custom_call.1} parent=1 // pred_check_branch
      %27 = sbr.rel (0) target = $region9
    $region8: #{tpu_custom_call.1} parent=1 // pred_region
      _
    $region9: #{tpu_custom_call.1} parent=1 // pred_fallthru
      _
    // Predicated region
    $region10: #{tpu_custom_call.1} parent=1 // pred_check
      _
    $region11: #{tpu_custom_call.1} parent=1 // pred_check_branch
      %29 = sbr.rel (0) target = $region13
    $region12: #{tpu_custom_call.1} parent=1 // pred_region
      _
    $region13: #{tpu_custom_call.1} parent=1 // pred_fallthru
      _
    // Predicated region
    $region14: #{tpu_custom_call.1} parent=1 // pred_check
      _
    $region15: #{tpu_custom_call.1} parent=1 // pred_check_branch
      %31 = sbr.rel (0) target = $region17
    $region16: #{tpu_custom_call.1} parent=1 // pred_region
      _
    $region17: #{tpu_custom_call.1} parent=1 // pred_fallthru
      _
    // Predicated region
    $region18: #{tpu_custom_call.1} parent=1 // pred_check
      _
    $region19: #{tpu_custom_call.1} parent=1 // pred_check_branch
      %33 = sbr.rel (0) target = $region21
    $region20: #{tpu_custom_call.1} parent=1 // pred_region
      _
    $region21: #{tpu_custom_call.1} parent=1 // pred_fallthru
      _
    // Predicated region
    $region22: #{tpu_custom_call.1} parent=1 // pred_check
      _
    $region23: #{tpu_custom_call.1} parent=1 // pred_check_branch
      %35 = sbr.rel (0) target = $region25
    $region24: #{tpu_custom_call.1} parent=1 // pred_region
      _
    $region25: #{tpu_custom_call.1} parent=1 // pred_fallthru
      _
    // Predicated region
    $region26: #{tpu_custom_call.1} parent=1 // pred_check
      _
    $region27: #{tpu_custom_call.1} parent=1 // pred_check_branch
      %37 = sbr.rel (0) target = $region29
    $region28: #{tpu_custom_call.1} parent=1 // pred_region
      _
    $region29: #{tpu_custom_call.1} parent=1 // pred_fallthru
      _
    // Predicated region
    $region30: #{tpu_custom_call.1} parent=1 // pred_check
      _
    $region31: #{tpu_custom_call.1} parent=1 // pred_check_branch
      %39 = sbr.rel (0) target = $region33
    $region32: #{tpu_custom_call.1} parent=1 // pred_region
      _
    $region33: #{tpu_custom_call.1} parent=1 // pred_fallthru
      _
    // Predicated region
    $region34: #{tpu_custom_call.1} parent=1 // pred_check
      _
    $region35: #{tpu_custom_call.1} parent=1 // pred_check_branch
      %41 = sbr.rel (0) target = $region37
    $region36: #{tpu_custom_call.1} parent=1 // pred_region
      _
    $region37: #{tpu_custom_call.1} parent=1 // pred_fallthru
      _
    // Predicated region
    $region38: #{tpu_custom_call.1} parent=1 // pred_check
      _
    $region39: #{tpu_custom_call.1} parent=1 // pred_check_branch
      %43 = sbr.rel (0) target = $region41
    $region40: #{tpu_custom_call.1} parent=1 // pred_region
      _
    $region41: #{tpu_custom_call.1} parent=1 // pred_fallthru
      _
    // Predicated region
    $region42: #{tpu_custom_call.1} parent=1 // pred_check
      _
    $region43: #{tpu_custom_call.1} parent=1 // pred_check_branch
      %45 = sbr.rel (0) target = $region45
    $region44: #{tpu_custom_call.1} parent=1 // pred_region
      _
    $region45: #{tpu_custom_call.1} parent=1 // pred_fallthru
      _
    // Predicated region
    $region46: #{tpu_custom_call.1} parent=1 // pred_check
      _
    $region47: #{tpu_custom_call.1} parent=1 // pred_check_branch
      %47 = sbr.rel (0) target = $region49
    $region48: #{tpu_custom_call.1} parent=1 // pred_region
      _
    $region49: #{tpu_custom_call.1} parent=1 // pred_fallthru
      _
    // Predicated region
    $region50: #{tpu_custom_call.1} parent=1 // pred_check
      _
    $region51: #{tpu_custom_call.1} parent=1 // pred_check_branch
      %49 = sbr.rel (0) target = $region53
    $region52: #{tpu_custom_call.1} parent=1 // pred_region
      _
    $region53: #{tpu_custom_call.1} parent=1 // pred_fallthru
      _
    // Predicated region
    $region54: #{tpu_custom_call.1} parent=1 // pred_check
      _
    $region55: #{tpu_custom_call.1} parent=1 // pred_check_branch
      %51 = sbr.rel (0) target = $region57
    $region56: #{tpu_custom_call.1} parent=1 // pred_region
      _
    $region57: #{tpu_custom_call.1} parent=1 // pred_fallthru
      _
    // Predicated region
    $region58: #{tpu_custom_call.1} parent=1 // pred_check
      _
    $region59: #{tpu_custom_call.1} parent=1 // pred_check_branch
      %53 = sbr.rel (0) target = $region61
    $region60: #{tpu_custom_call.1} parent=1 // pred_region
      _
    $region61: #{tpu_custom_call.1} parent=1 // pred_fallthru
      _
    // Predicated region
    $region62: #{tpu_custom_call.1} parent=1 // pred_check
      _
    $region63: #{tpu_custom_call.1} parent=1 // pred_check_branch
      %55 = sbr.rel (0) target = $region65
    $region64: #{tpu_custom_call.1} parent=1 // pred_region
      _
    $region65: #{tpu_custom_call.1} parent=1 // pred_fallthru
      _
    // Predicated region
    $region66: #{tpu_custom_call.1} parent=1 // pred_check
      _
    $region67: #{tpu_custom_call.1} parent=1 // pred_check_branch
      %57 = sbr.rel (0) target = $region69
    $region68: #{tpu_custom_call.1} parent=1 // pred_region
      _
    $region69: #{tpu_custom_call.1} parent=1 // pred_fallthru
      _
    // Predicated region
    $region70: #{tpu_custom_call.1} parent=1 // pred_check
      _
    $region71: #{tpu_custom_call.1} parent=1 // pred_check_branch
      %59 = sbr.rel (0) target = $region73
    $region72: #{tpu_custom_call.1} parent=1 // pred_region
      _
    $region73: #{tpu_custom_call.1} parent=1 // pred_fallthru
      _
    %v61 = vld [vmem:[%s0] sm:$0x3]
    %v62 = vld [vmem:[%s0 + $0x2] sm:$0x3]
    %v63 = vld [vmem:[%s0 + $0x4] sm:$0x3]
    %v64 = vld [vmem:[%s0 + $0x6] sm:$0x3]
    %v65 = vld [vmem:[%s0 + $0x8] sm:$0x3]
    %v66 = vld [vmem:[%s0 + $0xa] sm:$0x3]
    %v67 = vld [vmem:[%s0 + $0xc] sm:$0x3]
    %v68 = vld [vmem:[%s0 + $0xe] sm:$0x3]
    %v69 = vld [vmem:[%s1] sm:$0x1]
    %v70 = vld [vmem:[%s1 + $0x1] sm:$0x1]
    %v71 = vld [vmem:[%s1 + $0x2] sm:$0x1]
    %v72 = vld [vmem:[%s1 + $0x3] sm:$0x1]
    %v73 = vld [vmem:[%s1 + $0x4] sm:$0x1]
    %v74 = vld [vmem:[%s1 + $0x5] sm:$0x1]
    %v75 = vld [vmem:[%s1 + $0x6] sm:$0x1]
    %v76 = vld [vmem:[%s1 + $0x7] sm:$0x1]
    %v85 = vlaneseq
    %v86 = vshrl.u32 %v85, 7
    %v87 = vsub.s32 0, %v86
    %v88 = vrot.slane %v69, %v87
    %v89 = vlaneseq
    %v90 = vshrl.u32 %v89, 7
    %v91 = vsub.s32 0, %v90
    %v92 = vrot.slane %v70, %v91
    %v93 = vlaneseq
    %v94 = vshrl.u32 %v93, 7
    %v95 = vsub.s32 0, %v94
    %v96 = vrot.slane %v71, %v95
    %v97 = vlaneseq
    %v98 = vshrl.u32 %v97, 7
    %v99 = vsub.s32 0, %v98
    %v100 = vrot.slane %v72, %v99
    %v101 = vlaneseq
    %v102 = vshrl.u32 %v101, 7
    %v103 = vsub.s32 0, %v102
    %v104 = vrot.slane %v73, %v103
    %v105 = vlaneseq
    %v106 = vshrl.u32 %v105, 7
    %v107 = vsub.s32 0, %v106
    %v108 = vrot.slane %v74, %v107
    %v109 = vlaneseq
    %v110 = vshrl.u32 %v109, 7
    %v111 = vsub.s32 0, %v110
    %v112 = vrot.slane %v75, %v111
    %v113 = vlaneseq
    %v114 = vshrl.u32 %v113, 7
    %v115 = vsub.s32 0, %v114
    %v116 = vrot.slane %v76, %v115
    %v125 = vadd.f32 %v61, %v88
    %v126 = vadd.f32 %v62, %v92
    %v127 = vadd.f32 %v63, %v96
    %v128 = vadd.f32 %v64, %v100
    %v129 = vadd.f32 %v65, %v104
    %v130 = vadd.f32 %v66, %v108
    %v131 = vadd.f32 %v67, %v112
    %v132 = vadd.f32 %v68, %v116
    %v133 = vld [vmem:[%s2] sm:$0xff]
    %v134 = vld [vmem:[%s2 + $0x8] sm:$0xff]
    %v135 = vld [vmem:[%s2 + $0x10] sm:$0xff]
    %v136 = vld [vmem:[%s2 + $0x18] sm:$0xff]
    %v137 = vld [vmem:[%s2 + $0x20] sm:$0xff]
    %v138 = vld [vmem:[%s2 + $0x28] sm:$0xff]
    %v139 = vld [vmem:[%s2 + $0x30] sm:$0xff]
    %v140 = vld [vmem:[%s2 + $0x38] sm:$0xff]
    %v141 = vld [vmem:[%s2 + $0x40] sm:$0xff]
    %v142 = vld [vmem:[%s2 + $0x48] sm:$0xff]
    %v143 = vld [vmem:[%s2 + $0x50] sm:$0xff]
    %v144 = vld [vmem:[%s2 + $0x58] sm:$0xff]
    %v145 = vld [vmem:[%s2 + $0x60] sm:$0xff]
    %v146 = vld [vmem:[%s2 + $0x68] sm:$0xff]
    %v147 = vld [vmem:[%s2 + $0x70] sm:$0xff]
    %v148 = vld [vmem:[%s2 + $0x78] sm:$0xff]
    %v149 = vld [vmem:[%s3] sm:$0xff]
    %v150 = vld [vmem:[%s3 + $0x8] sm:$0xff]
    %v151 = vld [vmem:[%s3 + $0x10] sm:$0xff]
    %v152 = vld [vmem:[%s3 + $0x18] sm:$0xff]
    %v153 = vld [vmem:[%s3 + $0x20] sm:$0xff]
    %v154 = vld [vmem:[%s3 + $0x28] sm:$0xff]
    %v155 = vld [vmem:[%s3 + $0x30] sm:$0xff]
    %v156 = vld [vmem:[%s3 + $0x38] sm:$0xff]
    %v157 = vld [vmem:[%s3 + $0x40] sm:$0xff]
    %v158 = vld [vmem:[%s3 + $0x48] sm:$0xff]
    %v159 = vld [vmem:[%s3 + $0x50] sm:$0xff]
    %v160 = vld [vmem:[%s3 + $0x58] sm:$0xff]
    %v161 = vld [vmem:[%s3 + $0x60] sm:$0xff]
    %v162 = vld [vmem:[%s3 + $0x68] sm:$0xff]
    %v163 = vld [vmem:[%s3 + $0x70] sm:$0xff]
    %v164 = vld [vmem:[%s3 + $0x78] sm:$0xff]
    %v165 = vld [vmem:[%s4] sm:$0xf]
    %v166 = vld [vmem:[%s4 + $0x4] sm:$0xf]
    %v167 = vld [vmem:[%s4 + $0x8] sm:$0xf]
    %v168 = vld [vmem:[%s4 + $0xc] sm:$0xf]
    %v169 = vld [vmem:[%s5] sm:$0x1]
    %v178 = vcombine.low %v125, %v126
    %v179 = vcombine.low %v127, %v128
    %v181 = vunpack.c.l.s4 1983009808
    %v182 = vunpack.c.0.s8 %v181
    %v183 = vlaneseq
    %v184 = vshrl.u32 %v183, 7
    %v185 = vsub.s32 %v182, %v184
    %v186 = vrot.slane %v178, %v185
    %v188 = vunpack.c.l.s4 1983009808
    %v189 = vunpack.c.0.s8 %v188
    %v190 = vlaneseq
    %v191 = vshrl.u32 %v190, 7
    %v192 = vsub.s32 %v189, %v191
    %v193 = vrot.slane %v179, %v192
    %v194 = vcombine.low %v186, %v193
    %v195 = vcombine.low %v129, %v130
    %v196 = vcombine.low %v131, %v132
    %v198 = vunpack.c.l.s4 1983009808
    %v199 = vunpack.c.0.s8 %v198
    %v200 = vlaneseq
    %v201 = vshrl.u32 %v200, 7
    %v202 = vsub.s32 %v199, %v201
    %v203 = vrot.slane %v195, %v202
    %v205 = vunpack.c.l.s4 1983009808
    %v206 = vunpack.c.0.s8 %v205
    %v207 = vlaneseq
    %v208 = vshrl.u32 %v207, 7
    %v209 = vsub.s32 %v206, %v208
    %v210 = vrot.slane %v196, %v209
    %v211 = vcombine.low %v203, %v210
    %v214 = vpack.c.bf16 %v211, %v194
    %v216 = vlaneseq
    %v217 = vshrl.u32 %v216, 7
    %v218 = vsub.s32 0, %v217
    %v219 = vrot.slane %v169, %v218
    %v225 = vunpack.c.l.b16 %v165
    %v226 = vunpack.c.l.b16 %v166
    %v227 = vunpack.c.l.b16 %v167
    %v228 = vunpack.c.l.b16 %v168
    %v229 = vpack.c.b16 %v226, %v225
    %v230 = vpack.c.b16 %v228, %v227
    %vm233 = vcmask 261120
    %v235 = vsel %vm233, %v214, 0
    %237 = vmatprep.subr.bf16.mxu0 0
    %238 = vmatpush1.bf16.msra.mxu0 0
    %239 = vmatprep.subr.bf16.mxu0 0
    %240 = vmatpush1.bf16.msra.mxu0 0
    %241 = vmatprep.subr.bf16.mxu0 0
    %242 = vmatpush1.bf16.msra.mxu0 0
    %243 = vmatprep.subr.bf16.mxu0 0
    %244 = vmatpush1.bf16.msra.mxu0 0
    %245 = vmatprep.subr.bf16.mxu0 0
    %246 = vmatpush1.bf16.msra.mxu0 0
    %247 = vmatprep.subr.bf16.mxu0 0
    %248 = vmatpush1.bf16.msra.mxu0 0
    %249 = vmatprep.subr.bf16.mxu0 0
    %250 = vmatpush1.bf16.msra.mxu0 %v230
    %251 = vmatprep.subr.bf16.mxu0 0
    %252 = vmatpush1.bf16.msra.mxu0 %v229
    %253 = vmatprep.subr.bf16.mxu0 0
    %254 = vmatpush2.bf16.msra.mxu0 0
    %255 = vmatprep.subr.bf16.mxu0 0
    %256 = vmatpush2.bf16.msra.mxu0 0
    %257 = vmatprep.subr.bf16.mxu0 0
    %258 = vmatpush2.bf16.msra.mxu0 0
    %259 = vmatprep.subr.bf16.mxu0 0
    %260 = vmatpush2.bf16.msra.mxu0 0
    %261 = vmatprep.subr.bf16.mxu0 0
    %262 = vmatpush2.bf16.msra.mxu0 0
    %263 = vmatprep.subr.bf16.mxu0 0
    %264 = vmatpush2.bf16.msra.mxu0 0
    %265 = vmatprep.subr.bf16.mxu0 0
    %266 = vmatpush2.bf16.msra.mxu0 0
    %267 = vmatprep.subr.bf16.mxu0 0
    %268 = vmatpush2.bf16.msra.mxu0 0
    %269 = vmatprep.mubr.bf16.mxu0 0
    %270 = vmatmul.mubr.bf16.gmra.mxu0 %v235
    %v271 = vpop.f32.mrf.mxu0
    %v272 = vadd.f32 %v219, %v271
    %v273 = vpop.f32.mrf.mxu0
    %v274 = vpop.f32.mrf.mxu0
    %v275 = vadd.f32 %v219, %v274
    %v276 = vpop.f32.mrf.mxu0
    %277 = vdwg.mxu0
    %v278 = vpack.c.bf16 %v275, %v272
    %v279 = vmul.f32 %v272, %v149
    %v280 = vmul.f32 %v275, %v150
    %v281 = vmul.f32 %v272, %v151
    %v282 = vmul.f32 %v275, %v152
    %v283 = vmul.f32 %v272, %v153
    %v284 = vmul.f32 %v275, %v154
    %v285 = vmul.f32 %v272, %v155
    %v286 = vmul.f32 %v275, %v156
    %v287 = vmul.f32 %v272, %v157
    %v288 = vmul.f32 %v275, %v158
    %v289 = vmul.f32 %v272, %v159
    %v290 = vmul.f32 %v275, %v160
    %v291 = vmul.f32 %v272, %v161
    %v292 = vmul.f32 %v275, %v162
    %v293 = vmul.f32 %v272, %v163
    %v294 = vmul.f32 %v275, %v164
    %v295 = vpack.c.bf16 %v280, %v279
    %v296 = vpack.c.bf16 %v282, %v281
    %v297 = vpack.c.bf16 %v284, %v283
    %v298 = vpack.c.bf16 %v286, %v285
    %v299 = vpack.c.bf16 %v288, %v287
    %v300 = vpack.c.bf16 %v290, %v289
    %v301 = vpack.c.bf16 %v292, %v291
    %v302 = vpack.c.bf16 %v294, %v293
    %304 = vrot.lane.b32.xlu0 %v278, 96
    %v305 = vpop.permute.xlu0 %304
    %v307 = vsel %vm233, %v295, 0
    %v310 = vsel %vm233, %v296, 0
    %v313 = vsel %vm233, %v297, 0
    %v316 = vsel %vm233, %v298, 0
    %v319 = vsel %vm233, %v299, 0
    %v322 = vsel %vm233, %v300, 0
    %v325 = vsel %vm233, %v301, 0
    %v328 = vsel %vm233, %v302, 0
    %v331 = vsel %vm233, %v305, 0
    %333 = vmatprep.subr.bf16.mxu0 0
    %334 = vmatpush1.bf16.xpose.msra.mxu0 0
    %335 = vmatprep.subr.bf16.mxu0 0
    %336 = vmatpush1.bf16.xpose.msra.mxu0 0
    %337 = vmatprep.subr.bf16.mxu0 0
    %338 = vmatpush1.bf16.xpose.msra.mxu0 0
    %339 = vmatprep.subr.bf16.mxu0 0
    %340 = vmatpush1.bf16.xpose.msra.mxu0 0
    %341 = vmatprep.subr.bf16.mxu0 0
    %342 = vmatpush1.bf16.xpose.msra.mxu0 0
    %343 = vmatprep.subr.bf16.mxu0 0
    %344 = vmatpush1.bf16.xpose.msra.mxu0 0
    %345 = vmatprep.subr.bf16.mxu0 0
    %346 = vmatpush1.bf16.xpose.msra.mxu0 0
    %347 = vmatprep.subr.bf16.mxu0 0
    %348 = vmatpush1.bf16.xpose.msra.mxu0 %v331
    %349 = vmatprep.subr.bf16.mxu0 0
    %350 = vmatpush2.bf16.xpose.msra.mxu0 0
    %351 = vmatprep.subr.bf16.mxu0 0
    %352 = vmatpush2.bf16.xpose.msra.mxu0 0
    %353 = vmatprep.subr.bf16.mxu0 0
    %354 = vmatpush2.bf16.xpose.msra.mxu0 0
    %355 = vmatprep.subr.bf16.mxu0 0
    %356 = vmatpush2.bf16.xpose.msra.mxu0 0
    %357 = vmatprep.subr.bf16.mxu0 0
    %358 = vmatpush2.bf16.xpose.msra.mxu0 0
    %359 = vmatprep.subr.bf16.mxu0 0
    %360 = vmatpush2.bf16.xpose.msra.mxu0 0
    %361 = vmatprep.subr.bf16.mxu0 0
    %362 = vmatpush2.bf16.xpose.msra.mxu0 0
    %363 = vmatprep.subr.bf16.mxu0 0
    %364 = vmatpush2.bf16.xpose.msra.mxu0 0
    %365 = vmatprep.mubr.bf16.mxu0 0
    %366 = vmatmul.mubr.bf16.gmra.mxu0 %v307
    %v367 = vpop.f32.mrf.mxu0
    %v368 = vadd.f32 %v133, %v367
    %v369 = vpop.f32.mrf.mxu0
    %v370 = vpop.f32.mrf.mxu0
    %v371 = vadd.f32 %v134, %v370
    %v372 = vpop.f32.mrf.mxu0
    %373 = vmatprep.mubr.bf16.mxu0 0
    %374 = vmatmul.mubr.bf16.gmra.mxu0 %v310
    %v375 = vpop.f32.mrf.mxu0
    %v376 = vadd.f32 %v135, %v375
    %v377 = vpop.f32.mrf.mxu0
    %v378 = vpop.f32.mrf.mxu0
    %v379 = vadd.f32 %v136, %v378
    %v380 = vpop.f32.mrf.mxu0
    %381 = vmatprep.mubr.bf16.mxu0 0
    %382 = vmatmul.mubr.bf16.gmra.mxu0 %v313
    %v383 = vpop.f32.mrf.mxu0
    %v384 = vadd.f32 %v137, %v383
    %v385 = vpop.f32.mrf.mxu0
    %v386 = vpop.f32.mrf.mxu0
    %v387 = vadd.f32 %v138, %v386
    %v388 = vpop.f32.mrf.mxu0
    %389 = vmatprep.mubr.bf16.mxu0 0
    %390 = vmatmul.mubr.bf16.gmra.mxu0 %v316
    %v391 = vpop.f32.mrf.mxu0
    %v392 = vadd.f32 %v139, %v391
    %v393 = vpop.f32.mrf.mxu0
    %v394 = vpop.f32.mrf.mxu0
    %v395 = vadd.f32 %v140, %v394
    %v396 = vpop.f32.mrf.mxu0
    %397 = vmatprep.mubr.bf16.mxu0 0
    %398 = vmatmul.mubr.bf16.gmra.mxu0 %v319
    %v399 = vpop.f32.mrf.mxu0
    %v400 = vadd.f32 %v141, %v399
    %v401 = vpop.f32.mrf.mxu0
    %v402 = vpop.f32.mrf.mxu0
    %v403 = vadd.f32 %v142, %v402
    %v404 = vpop.f32.mrf.mxu0
    %405 = vmatprep.mubr.bf16.mxu0 0
    %406 = vmatmul.mubr.bf16.gmra.mxu0 %v322
    %v407 = vpop.f32.mrf.mxu0
    %v408 = vadd.f32 %v143, %v407
    %v409 = vpop.f32.mrf.mxu0
    %v410 = vpop.f32.mrf.mxu0
    %v411 = vadd.f32 %v144, %v410
    %v412 = vpop.f32.mrf.mxu0
    %413 = vmatprep.mubr.bf16.mxu0 0
    %414 = vmatmul.mubr.bf16.gmra.mxu0 %v325
    %v415 = vpop.f32.mrf.mxu0
    %v416 = vadd.f32 %v145, %v415
    %v417 = vpop.f32.mrf.mxu0
    %v418 = vpop.f32.mrf.mxu0
    %v419 = vadd.f32 %v146, %v418
    %v420 = vpop.f32.mrf.mxu0
    %421 = vmatprep.mubr.bf16.mxu0 0
    %422 = vmatmul.mubr.bf16.gmra.mxu0 %v328
    %v423 = vpop.f32.mrf.mxu0
    %v424 = vadd.f32 %v147, %v423
    %v425 = vpop.f32.mrf.mxu0
    %v426 = vpop.f32.mrf.mxu0
    %v427 = vadd.f32 %v148, %v426
    %v428 = vpop.f32.mrf.mxu0
    %429 = vdwg.mxu0
    %vm430 = vcmask 130048
    %v431 = vsel %vm430, %v368, -inf
    %432 = vmax.xlane.f32.xlu0 %v431
    %v433 = vpop.xlane.xlu0 %432
    %v434 = vsel %vm430, %v371, -inf
    %435 = vmax.xlane.f32.xlu0 %v434
    %v436 = vpop.xlane.xlu0 %435
    %v437 = vsel %vm430, %v376, -inf
    %438 = vmax.xlane.f32.xlu0 %v437
    %v439 = vpop.xlane.xlu0 %438
    %v440 = vsel %vm430, %v379, -inf
    %441 = vmax.xlane.f32.xlu0 %v440
    %v442 = vpop.xlane.xlu0 %441
    %v443 = vsel %vm430, %v384, -inf
    %444 = vmax.xlane.f32.xlu0 %v443
    %v445 = vpop.xlane.xlu0 %444
    %v446 = vsel %vm430, %v387, -inf
    %447 = vmax.xlane.f32.xlu0 %v446
    %v448 = vpop.xlane.xlu0 %447
    %v449 = vsel %vm430, %v392, -inf
    %450 = vmax.xlane.f32.xlu0 %v449
    %v451 = vpop.xlane.xlu0 %450
    %v452 = vsel %vm430, %v395, -inf
    %453 = vmax.xlane.f32.xlu0 %v452
    %v454 = vpop.xlane.xlu0 %453
    %v455 = vsel %vm430, %v400, -inf
    %456 = vmax.xlane.f32.xlu0 %v455
    %v457 = vpop.xlane.xlu0 %456
    %v458 = vsel %vm430, %v403, -inf
    %459 = vmax.xlane.f32.xlu0 %v458
    %v460 = vpop.xlane.xlu0 %459
    %v461 = vsel %vm430, %v408, -inf
    %462 = vmax.xlane.f32.xlu0 %v461
    %v463 = vpop.xlane.xlu0 %462
    %v464 = vsel %vm430, %v411, -inf
    %465 = vmax.xlane.f32.xlu0 %v464
    %v466 = vpop.xlane.xlu0 %465
    %v467 = vsel %vm430, %v416, -inf
    %468 = vmax.xlane.f32.xlu0 %v467
    %v469 = vpop.xlane.xlu0 %468
    %v470 = vsel %vm430, %v419, -inf
    %471 = vmax.xlane.f32.xlu0 %v470
    %v472 = vpop.xlane.xlu0 %471
    %v473 = vsel %vm430, %v424, -inf
    %474 = vmax.xlane.f32.xlu0 %v473
    %v475 = vpop.xlane.xlu0 %474
    %v476 = vsel %vm430, %v427, -inf
    %477 = vmax.xlane.f32.xlu0 %v476
    %v478 = vpop.xlane.xlu0 %477
    %v479 = vsub.f32 %v368, %v433
    %v480 = vsub.f32 %v371, %v436
    %v481 = vsub.f32 %v376, %v439
    %v482 = vsub.f32 %v379, %v442
    %v483 = vsub.f32 %v384, %v445
    %v484 = vsub.f32 %v387, %v448
    %v485 = vsub.f32 %v392, %v451
    %v486 = vsub.f32 %v395, %v454
    %v487 = vsub.f32 %v400, %v457
    %v488 = vsub.f32 %v403, %v460
    %v489 = vsub.f32 %v408, %v463
    %v490 = vsub.f32 %v411, %v466
    %v491 = vsub.f32 %v416, %v469
    %v492 = vsub.f32 %v419, %v472
    %v493 = vsub.f32 %v424, %v475
    %v494 = vsub.f32 %v427, %v478
    %v495 = vmul.f32 %v479, 1.442695
    %v496 = vpow.pop %v495
    %v497 = vmul.f32 %v480, 1.442695
    %v498 = vpow.pop %v497
    %v499 = vmul.f32 %v481, 1.442695
    %v500 = vpow.pop %v499
    %v501 = vmul.f32 %v482, 1.442695
    %v502 = vpow.pop %v501
    %v503 = vmul.f32 %v483, 1.442695
    %v504 = vpow.pop %v503
    %v505 = vmul.f32 %v484, 1.442695
    %v506 = vpow.pop %v505
    %v507 = vmul.f32 %v485, 1.442695
    %v508 = vpow.pop %v507
    %v509 = vmul.f32 %v486, 1.442695
    %v510 = vpow.pop %v509
    %v511 = vmul.f32 %v487, 1.442695
    %v512 = vpow.pop %v511
    %v513 = vmul.f32 %v488, 1.442695
    %v514 = vpow.pop %v513
    %v515 = vmul.f32 %v489, 1.442695
    %v516 = vpow.pop %v515
    %v517 = vmul.f32 %v490, 1.442695
    %v518 = vpow.pop %v517
    %v519 = vmul.f32 %v491, 1.442695
    %v520 = vpow.pop %v519
    %v521 = vmul.f32 %v492, 1.442695
    %v522 = vpow.pop %v521
    %v523 = vmul.f32 %v493, 1.442695
    %v524 = vpow.pop %v523
    %v525 = vmul.f32 %v494, 1.442695
    %v526 = vpow.pop %v525
    %v527 = vsel %vm430, %v496, 0.0
    %528 = vadd.xlane.f32.xlu0 %v527
    %v529 = vpop.xlane.xlu0 %528
    %v530 = vsel %vm430, %v498, 0.0
    %531 = vadd.xlane.f32.xlu0 %v530
    %v532 = vpop.xlane.xlu0 %531
    %v533 = vsel %vm430, %v500, 0.0
    %534 = vadd.xlane.f32.xlu0 %v533
    %v535 = vpop.xlane.xlu0 %534
    %v536 = vsel %vm430, %v502, 0.0
    %537 = vadd.xlane.f32.xlu0 %v536
    %v538 = vpop.xlane.xlu0 %537
    %v539 = vsel %vm430, %v504, 0.0
    %540 = vadd.xlane.f32.xlu0 %v539
    %v541 = vpop.xlane.xlu0 %540
    %v542 = vsel %vm430, %v506, 0.0
    %543 = vadd.xlane.f32.xlu0 %v542
    %v544 = vpop.xlane.xlu0 %543
    %v545 = vsel %vm430, %v508, 0.0
    %546 = vadd.xlane.f32.xlu0 %v545
    %v547 = vpop.xlane.xlu0 %546
    %v548 = vsel %vm430, %v510, 0.0
    %549 = vadd.xlane.f32.xlu0 %v548
    %v550 = vpop.xlane.xlu0 %549
    %v551 = vsel %vm430, %v512, 0.0
    %552 = vadd.xlane.f32.xlu0 %v551
    %v553 = vpop.xlane.xlu0 %552
    %v554 = vsel %vm430, %v514, 0.0
    %555 = vadd.xlane.f32.xlu0 %v554
    %v556 = vpop.xlane.xlu0 %555
    %v557 = vsel %vm430, %v516, 0.0
    %558 = vadd.xlane.f32.xlu0 %v557
    %v559 = vpop.xlane.xlu0 %558
    %v560 = vsel %vm430, %v518, 0.0
    %561 = vadd.xlane.f32.xlu0 %v560
    %v562 = vpop.xlane.xlu0 %561
    %v563 = vsel %vm430, %v520, 0.0
    %564 = vadd.xlane.f32.xlu0 %v563
    %v565 = vpop.xlane.xlu0 %564
    %v566 = vsel %vm430, %v522, 0.0
    %567 = vadd.xlane.f32.xlu0 %v566
    %v568 = vpop.xlane.xlu0 %567
    %v569 = vsel %vm430, %v524, 0.0
    %570 = vadd.xlane.f32.xlu0 %v569
    %v571 = vpop.xlane.xlu0 %570
    %v572 = vsel %vm430, %v526, 0.0
    %573 = vadd.xlane.f32.xlu0 %v572
    %v574 = vpop.xlane.xlu0 %573
    %v575 = vrcp.pop %v529
    %v576 = vrcp.pop %v532
    %v577 = vrcp.pop %v535
    %v578 = vrcp.pop %v538
    %v579 = vrcp.pop %v541
    %v580 = vrcp.pop %v544
    %v581 = vrcp.pop %v547
    %v582 = vrcp.pop %v550
    %v583 = vrcp.pop %v553
    %v584 = vrcp.pop %v556
    %v585 = vrcp.pop %v559
    %v586 = vrcp.pop %v562
    %v587 = vrcp.pop %v565
    %v588 = vrcp.pop %v568
    %v589 = vrcp.pop %v571
    %v590 = vrcp.pop %v574
    %v591 = vmul.f32 %v496, %v575
    %v592 = vmul.f32 %v498, %v576
    %v593 = vmul.f32 %v500, %v577
    %v594 = vmul.f32 %v502, %v578
    %v595 = vmul.f32 %v504, %v579
    %v596 = vmul.f32 %v506, %v580
    %v597 = vmul.f32 %v508, %v581
    %v598 = vmul.f32 %v510, %v582
    %v599 = vmul.f32 %v512, %v583
    %v600 = vmul.f32 %v514, %v584
    %v601 = vmul.f32 %v516, %v585
    %v602 = vmul.f32 %v518, %v586
    %v603 = vmul.f32 %v520, %v587
    %v604 = vmul.f32 %v522, %v588
    %v605 = vmul.f32 %v524, %v589
    %v606 = vmul.f32 %v526, %v590
    %v607 = vpack.c.bf16 %v592, %v591
    %v608 = vpack.c.bf16 %v594, %v593
    %v609 = vpack.c.bf16 %v596, %v595
    %v610 = vpack.c.bf16 %v598, %v597
    %v611 = vpack.c.bf16 %v600, %v599
    %v612 = vpack.c.bf16 %v602, %v601
    %v613 = vpack.c.bf16 %v604, %v603
    %v614 = vpack.c.bf16 %v606, %v605
    %615 = vrot.lane.b32.xlu0 %v278, 64
    %v616 = vpop.permute.xlu0 %615
    %v619 = vsel %vm430, %v607, 0
    %v622 = vsel %vm430, %v608, 0
    %v625 = vsel %vm430, %v609, 0
    %v628 = vsel %vm430, %v610, 0
    %v631 = vsel %vm430, %v611, 0
    %v634 = vsel %vm430, %v612, 0
    %v637 = vsel %vm430, %v613, 0
    %v640 = vsel %vm430, %v614, 0
    %642 = vmatprep.subr.bf16.mxu0 0
    %643 = vmatpush1.bf16.msra.mxu0 0
    %644 = vmatprep.subr.bf16.mxu0 0
    %645 = vmatpush1.bf16.msra.mxu0 0
    %646 = vmatprep.subr.bf16.mxu0 0
    %647 = vmatpush1.bf16.msra.mxu0 0
    %648 = vmatprep.subr.bf16.mxu0 0
    %649 = vmatpush1.bf16.msra.mxu0 0
    %650 = vmatprep.subr.bf16.mxu0 0
    %651 = vmatpush1.bf16.msra.mxu0 0
    %652 = vmatprep.subr.bf16.mxu0 0
    %653 = vmatpush1.bf16.msra.mxu0 0
    %654 = vmatprep.subr.bf16.mxu0 0
    %655 = vmatpush1.bf16.msra.mxu0 0
    %656 = vmatprep.subr.bf16.mxu0 0
    %657 = vmatpush1.bf16.msra.mxu0 %v616
    %658 = vmatprep.subr.bf16.mxu0 0
    %659 = vmatpush2.bf16.msra.mxu0 0
    %660 = vmatprep.subr.bf16.mxu0 0
    %661 = vmatpush2.bf16.msra.mxu0 0
    %662 = vmatprep.subr.bf16.mxu0 0
    %663 = vmatpush2.bf16.msra.mxu0 0
    %664 = vmatprep.subr.bf16.mxu0 0
    %665 = vmatpush2.bf16.msra.mxu0 0
    %666 = vmatprep.subr.bf16.mxu0 0
    %667 = vmatpush2.bf16.msra.mxu0 0
    %668 = vmatprep.subr.bf16.mxu0 0
    %669 = vmatpush2.bf16.msra.mxu0 0
    %670 = vmatprep.subr.bf16.mxu0 0
    %671 = vmatpush2.bf16.msra.mxu0 0
    %672 = vmatprep.subr.bf16.mxu0 0
    %673 = vmatpush2.bf16.msra.mxu0 0
    %674 = vmatprep.mubr.bf16.mxu0 0
    %675 = vmatmul.mubr.bf16.gmra.mxu0 %v619
    %v676 = vpop.f32.mrf.mxu0
    %v677 = vadd.f32 0.0, %v676
    %v678 = vpop.f32.mrf.mxu0
    %v679 = vpop.f32.mrf.mxu0
    %v680 = vadd.f32 0.0, %v679
    %v681 = vpop.f32.mrf.mxu0
    %682 = vmatprep.mubr.bf16.mxu0 0
    %683 = vmatmul.mubr.bf16.gmra.mxu0 %v622
    %v684 = vpop.f32.mrf.mxu0
    %v685 = vadd.f32 0.0, %v684
    %v686 = vpop.f32.mrf.mxu0
    %v687 = vpop.f32.mrf.mxu0
    %v688 = vadd.f32 0.0, %v687
    %v689 = vpop.f32.mrf.mxu0
    %690 = vmatprep.mubr.bf16.mxu0 0
    %691 = vmatmul.mubr.bf16.gmra.mxu0 %v625
    %v692 = vpop.f32.mrf.mxu0
    %v693 = vadd.f32 0.0, %v692
    %v694 = vpop.f32.mrf.mxu0
    %v695 = vpop.f32.mrf.mxu0
    %v696 = vadd.f32 0.0, %v695
    %v697 = vpop.f32.mrf.mxu0
    %698 = vmatprep.mubr.bf16.mxu0 0
    %699 = vmatmul.mubr.bf16.gmra.mxu0 %v628
    %v700 = vpop.f32.mrf.mxu0
    %v701 = vadd.f32 0.0, %v700
    %v702 = vpop.f32.mrf.mxu0
    %v703 = vpop.f32.mrf.mxu0
    %v704 = vadd.f32 0.0, %v703
    %v705 = vpop.f32.mrf.mxu0
    %706 = vmatprep.mubr.bf16.mxu0 0
    %707 = vmatmul.mubr.bf16.gmra.mxu0 %v631
    %v708 = vpop.f32.mrf.mxu0
    %v709 = vadd.f32 0.0, %v708
    %v710 = vpop.f32.mrf.mxu0
    %v711 = vpop.f32.mrf.mxu0
    %v712 = vadd.f32 0.0, %v711
    %v713 = vpop.f32.mrf.mxu0
    %714 = vmatprep.mubr.bf16.mxu0 0
    %715 = vmatmul.mubr.bf16.gmra.mxu0 %v634
    %v716 = vpop.f32.mrf.mxu0
    %v717 = vadd.f32 0.0, %v716
    %v718 = vpop.f32.mrf.mxu0
    %v719 = vpop.f32.mrf.mxu0
    %v720 = vadd.f32 0.0, %v719
    %v721 = vpop.f32.mrf.mxu0
    %722 = vmatprep.mubr.bf16.mxu0 0
    %723 = vmatmul.mubr.bf16.gmra.mxu0 %v637
    %v724 = vpop.f32.mrf.mxu0
    %v725 = vadd.f32 0.0, %v724
    %v726 = vpop.f32.mrf.mxu0
    %v727 = vpop.f32.mrf.mxu0
    %v728 = vadd.f32 0.0, %v727
    %v729 = vpop.f32.mrf.mxu0
    %730 = vmatprep.mubr.bf16.mxu0 0
    %731 = vmatmul.mubr.bf16.gmra.mxu0 %v640
    %v732 = vpop.f32.mrf.mxu0
    %v733 = vadd.f32 0.0, %v732
    %v734 = vpop.f32.mrf.mxu0
    %v735 = vpop.f32.mrf.mxu0
    %v736 = vadd.f32 0.0, %v735
    %v737 = vpop.f32.mrf.mxu0
    %738 = vdwg.mxu0
    %v739 = vmul.f32 %v677, %v149
    %v740 = vmul.f32 %v680, %v150
    %v741 = vmul.f32 %v685, %v151
    %v742 = vmul.f32 %v688, %v152
    %v743 = vmul.f32 %v693, %v153
    %v744 = vmul.f32 %v696, %v154
    %v745 = vmul.f32 %v701, %v155
    %v746 = vmul.f32 %v704, %v156
    %v747 = vmul.f32 %v709, %v157
    %v748 = vmul.f32 %v712, %v158
    %v749 = vmul.f32 %v717, %v159
    %v750 = vmul.f32 %v720, %v160
    %v751 = vmul.f32 %v725, %v161
    %v752 = vmul.f32 %v728, %v162
    %v753 = vmul.f32 %v733, %v163
    %v754 = vmul.f32 %v736, %v164
    %v755 = vsel %vm233, %v739, 0.0
    %v756 = vsel %vm233, %v741, 0.0
    %v757 = vadd.f32 %v755, %v756
    %v758 = vsel %vm233, %v743, 0.0
    %v759 = vadd.f32 %v757, %v758
    %v760 = vsel %vm233, %v745, 0.0
    %v761 = vadd.f32 %v759, %v760
    %v762 = vsel %vm233, %v747, 0.0
    %v763 = vadd.f32 %v761, %v762
    %v764 = vsel %vm233, %v749, 0.0
    %v765 = vadd.f32 %v763, %v764
    %v766 = vsel %vm233, %v751, 0.0
    %v767 = vadd.f32 %v765, %v766
    %v768 = vsel %vm233, %v753, 0.0
    %v769 = vadd.f32 %v767, %v768
    %v770 = vsel %vm233, %v740, 0.0
    %v771 = vsel %vm233, %v742, 0.0
    %v772 = vadd.f32 %v770, %v771
    %v773 = vsel %vm233, %v744, 0.0
    %v774 = vadd.f32 %v772, %v773
    %v775 = vsel %vm233, %v746, 0.0
    %v776 = vadd.f32 %v774, %v775
    %v777 = vsel %vm233, %v748, 0.0
    %v778 = vadd.f32 %v776, %v777
    %v779 = vsel %vm233, %v750, 0.0
    %v780 = vadd.f32 %v778, %v779
    %v781 = vsel %vm233, %v752, 0.0
    %v782 = vadd.f32 %v780, %v781
    %v783 = vsel %vm233, %v754, 0.0
    %v784 = vadd.f32 %v782, %v783
    %v785 = vld [vmem:[%s6] sm:$0xf]
    %v786 = vld [vmem:[%s6 + $0x4] sm:$0xf]
    %v787 = vld [vmem:[%s6 + $0x8] sm:$0xf]
    %v788 = vld [vmem:[%s6 + $0xc] sm:$0xf]
    %v789 = vld [vmem:[%s7] sm:$0x1]
    %v790 = vpack.c.bf16 %v784, %v769
    %v792 = vlaneseq
    %v793 = vshrl.u32 %v792, 7
    %v794 = vsub.s32 0, %v793
    %v795 = vrot.slane %v789, %v794
    %v801 = vunpack.c.l.b16 %v785
    %v802 = vunpack.c.l.b16 %v786
    %v803 = vunpack.c.l.b16 %v787
    %v804 = vunpack.c.l.b16 %v788
    %v805 = vpack.c.b16 %v802, %v801
    %v806 = vpack.c.b16 %v804, %v803
    %v810 = vsel %vm233, %v790, 0
    %812 = vmatprep.subr.bf16.mxu0 0
    %813 = vmatpush1.bf16.msra.mxu0 0
    %814 = vmatprep.subr.bf16.mxu0 0
    %815 = vmatpush1.bf16.msra.mxu0 0
    %816 = vmatprep.subr.bf16.mxu0 0
    %817 = vmatpush1.bf16.msra.mxu0 0
    %818 = vmatprep.subr.bf16.mxu0 0
    %819 = vmatpush1.bf16.msra.mxu0 0
    %820 = vmatprep.subr.bf16.mxu0 0
    %821 = vmatpush1.bf16.msra.mxu0 0
    %822 = vmatprep.subr.bf16.mxu0 0
    %823 = vmatpush1.bf16.msra.mxu0 0
    %824 = vmatprep.subr.bf16.mxu0 0
    %825 = vmatpush1.bf16.msra.mxu0 %v806
    %826 = vmatprep.subr.bf16.mxu0 0
    %827 = vmatpush1.bf16.msra.mxu0 %v805
    %828 = vmatprep.subr.bf16.mxu0 0
    %829 = vmatpush2.bf16.msra.mxu0 0
    %830 = vmatprep.subr.bf16.mxu0 0
    %831 = vmatpush2.bf16.msra.mxu0 0
    %832 = vmatprep.subr.bf16.mxu0 0
    %833 = vmatpush2.bf16.msra.mxu0 0
    %834 = vmatprep.subr.bf16.mxu0 0
    %835 = vmatpush2.bf16.msra.mxu0 0
    %836 = vmatprep.subr.bf16.mxu0 0
    %837 = vmatpush2.bf16.msra.mxu0 0
    %838 = vmatprep.subr.bf16.mxu0 0
    %839 = vmatpush2.bf16.msra.mxu0 0
    %840 = vmatprep.subr.bf16.mxu0 0
    %841 = vmatpush2.bf16.msra.mxu0 0
    %842 = vmatprep.subr.bf16.mxu0 0
    %843 = vmatpush2.bf16.msra.mxu0 0
    %844 = vmatprep.mubr.bf16.mxu0 0
    %845 = vmatmul.mubr.bf16.gmra.mxu0 %v810
    %v846 = vpop.f32.mrf.mxu0
    %v847 = vadd.f32 %v795, %v846
    %v848 = vpop.f32.mrf.mxu0
    %v849 = vpop.f32.mrf.mxu0
    %v850 = vadd.f32 %v795, %v849
    %v851 = vpop.f32.mrf.mxu0
    %852 = vdwg.mxu0
    %v855 = vcombine.high %v847, %v847
    %v857 = vunpack.c.l.s4 1983009808
    %v858 = vunpack.c.0.s8 %v857
    %v859 = vlaneseq
    %v860 = vshrl.u32 %v859, 7
    %v861 = vsub.s32 %v858, %v860
    %v862 = vrot.slane %v847, %v861
    %v864 = vunpack.c.l.s4 1983009808
    %v865 = vunpack.c.0.s8 %v864
    %v866 = vlaneseq
    %v867 = vshrl.u32 %v866, 7
    %v868 = vsub.s32 %v865, %v867
    %v869 = vrot.slane %v855, %v868
    %v870 = vcombine.high %v862, %v862
    %v871 = vcombine.high %v869, %v869
    %v872 = vcombine.high %v850, %v850
    %v874 = vunpack.c.l.s4 1983009808
    %v875 = vunpack.c.0.s8 %v874
    %v876 = vlaneseq
    %v877 = vshrl.u32 %v876, 7
    %v878 = vsub.s32 %v875, %v877
    %v879 = vrot.slane %v850, %v878
    %v881 = vunpack.c.l.s4 1983009808
    %v882 = vunpack.c.0.s8 %v881
    %v883 = vlaneseq
    %v884 = vshrl.u32 %v883, 7
    %v885 = vsub.s32 %v882, %v884
    %v886 = vrot.slane %v872, %v885
    %v887 = vcombine.high %v879, %v879
    %v888 = vcombine.high %v886, %v886
    %v897 = vadd.f32 %v125, %v862
    %v898 = vadd.f32 %v126, %v870
    %v899 = vadd.f32 %v127, %v869
    %v900 = vadd.f32 %v128, %v871
    %v901 = vadd.f32 %v129, %v879
    %v902 = vadd.f32 %v130, %v887
    %v903 = vadd.f32 %v131, %v886
    %v904 = vadd.f32 %v132, %v888
    %v905 = vld [vmem:[%s8] sm:$0x1]
    %v906 = vld [vmem:[%s9] sm:$0x1]
    %v915 = vcombine.low %v897, %v898
    %v916 = vcombine.low %v899, %v900
    %v918 = vunpack.c.l.s4 1983009808
    %v919 = vunpack.c.0.s8 %v918
    %v920 = vlaneseq
    %v921 = vshrl.u32 %v920, 7
    %v922 = vsub.s32 %v919, %v921
    %v923 = vrot.slane %v915, %v922
    %v925 = vunpack.c.l.s4 1983009808
    %v926 = vunpack.c.0.s8 %v925
    %v927 = vlaneseq
    %v928 = vshrl.u32 %v927, 7
    %v929 = vsub.s32 %v926, %v928
    %v930 = vrot.slane %v916, %v929
    %v931 = vcombine.low %v923, %v930
    %v932 = vcombine.low %v901, %v902
    %v933 = vcombine.low %v903, %v904
    %v935 = vunpack.c.l.s4 1983009808
    %v936 = vunpack.c.0.s8 %v935
    %v937 = vlaneseq
    %v938 = vshrl.u32 %v937, 7
    %v939 = vsub.s32 %v936, %v938
    %v940 = vrot.slane %v932, %v939
    %v942 = vunpack.c.l.s4 1983009808
    %v943 = vunpack.c.0.s8 %v942
    %v944 = vlaneseq
    %v945 = vshrl.u32 %v944, 7
    %v946 = vsub.s32 %v943, %v945
    %v947 = vrot.slane %v933, %v946
    %v948 = vcombine.low %v940, %v947
    %v951 = vsel %vm233, %v931, 0.0
    %952 = vadd.xlane.f32.xlu0 %v951
    %v953 = vpop.xlane.xlu0 %952
    %v954 = vsel %vm233, %v948, 0.0
    %955 = vadd.xlane.f32.xlu0 %v954
    %v956 = vpop.xlane.xlu0 %955
    %v957 = vrcp.pop 32.0
    %v958 = vmul.f32 %v953, %v957
    %v959 = vmul.f32 %v956, %v957
    %v963 = vunpack.c.l.s4 269488144
    %v964 = vunpack.c.0.s8 %v963
    %v965 = vlaneseq
    %v966 = vshrl.u32 %v965, 7
    %v967 = vsub.s32 %v964, %v966
    %v968 = vrot.slane %v958, %v967
    %v970 = vunpack.c.l.s4 842150450
    %v971 = vunpack.c.0.s8 %v970
    %v972 = vlaneseq
    %v973 = vshrl.u32 %v972, 7
    %v974 = vsub.s32 %v971, %v973
    %v975 = vrot.slane %v958, %v974
    %v977 = vunpack.c.l.s4 1414812756
    %v978 = vunpack.c.0.s8 %v977
    %v979 = vlaneseq
    %v980 = vshrl.u32 %v979, 7
    %v981 = vsub.s32 %v978, %v980
    %v982 = vrot.slane %v958, %v981
    %v984 = vunpack.c.l.s4 1987475062
    %v985 = vunpack.c.0.s8 %v984
    %v986 = vlaneseq
    %v987 = vshrl.u32 %v986, 7
    %v988 = vsub.s32 %v985, %v987
    %v989 = vrot.slane %v958, %v988
    %v991 = vunpack.c.l.s4 269488144
    %v992 = vunpack.c.0.s8 %v991
    %v993 = vlaneseq
    %v994 = vshrl.u32 %v993, 7
    %v995 = vsub.s32 %v992, %v994
    %v996 = vrot.slane %v959, %v995
    %v998 = vunpack.c.l.s4 842150450
    %v999 = vunpack.c.0.s8 %v998
    %v1000 = vlaneseq
    %v1001 = vshrl.u32 %v1000, 7
    %v1002 = vsub.s32 %v999, %v1001
    %v1003 = vrot.slane %v959, %v1002
    %v1005 = vunpack.c.l.s4 1414812756
    %v1006 = vunpack.c.0.s8 %v1005
    %v1007 = vlaneseq
    %v1008 = vshrl.u32 %v1007, 7
    %v1009 = vsub.s32 %v1006, %v1008
    %v1010 = vrot.slane %v959, %v1009
    %v1012 = vunpack.c.l.s4 1987475062
    %v1013 = vunpack.c.0.s8 %v1012
    %v1014 = vlaneseq
    %v1015 = vshrl.u32 %v1014, 7
    %v1016 = vsub.s32 %v1013, %v1015
    %v1017 = vrot.slane %v959, %v1016
    %v1026 = vsub.f32 %v897, %v968
    %v1027 = vsub.f32 %v898, %v975
    %v1028 = vsub.f32 %v899, %v982
    %v1029 = vsub.f32 %v900, %v989
    %v1030 = vsub.f32 %v901, %v996
    %v1031 = vsub.f32 %v902, %v1003
    %v1032 = vsub.f32 %v903, %v1010
    %v1033 = vsub.f32 %v904, %v1017
    %v1034 = vmul.f32 %v1026, %v1026
    %v1035 = vmul.f32 %v1027, %v1027
    %v1036 = vmul.f32 %v1028, %v1028
    %v1037 = vmul.f32 %v1029, %v1029
    %v1038 = vmul.f32 %v1030, %v1030
    %v1039 = vmul.f32 %v1031, %v1031
    %v1040 = vmul.f32 %v1032, %v1032
    %v1041 = vmul.f32 %v1033, %v1033
    %v1050 = vcombine.low %v1034, %v1035
    %v1051 = vcombine.low %v1036, %v1037
    %v1053 = vunpack.c.l.s4 1983009808
    %v1054 = vunpack.c.0.s8 %v1053
    %v1055 = vlaneseq
    %v1056 = vshrl.u32 %v1055, 7
    %v1057 = vsub.s32 %v1054, %v1056
    %v1058 = vrot.slane %v1050, %v1057
    %v1060 = vunpack.c.l.s4 1983009808
    %v1061 = vunpack.c.0.s8 %v1060
    %v1062 = vlaneseq
    %v1063 = vshrl.u32 %v1062, 7
    %v1064 = vsub.s32 %v1061, %v1063
    %v1065 = vrot.slane %v1051, %v1064
    %v1066 = vcombine.low %v1058, %v1065
    %v1067 = vcombine.low %v1038, %v1039
    %v1068 = vcombine.low %v1040, %v1041
    %v1070 = vunpack.c.l.s4 1983009808
    %v1071 = vunpack.c.0.s8 %v1070
    %v1072 = vlaneseq
    %v1073 = vshrl.u32 %v1072, 7
    %v1074 = vsub.s32 %v1071, %v1073
    %v1075 = vrot.slane %v1067, %v1074
    %v1077 = vunpack.c.l.s4 1983009808
    %v1078 = vunpack.c.0.s8 %v1077
    %v1079 = vlaneseq
    %v1080 = vshrl.u32 %v1079, 7
    %v1081 = vsub.s32 %v1078, %v1080
    %v1082 = vrot.slane %v1068, %v1081
    %v1083 = vcombine.low %v1075, %v1082
    %v1086 = vsel %vm233, %v1066, 0.0
    %1087 = vadd.xlane.f32.xlu0 %v1086
    %v1088 = vpop.xlane.xlu0 %1087
    %v1089 = vsel %vm233, %v1083, 0.0
    %1090 = vadd.xlane.f32.xlu0 %v1089
    %v1091 = vpop.xlane.xlu0 %1090
    %v1092 = vmul.f32 %v1088, %v957
    %v1093 = vmul.f32 %v1091, %v957
    %v1094 = vadd.f32 %v1092, 1e-05
    %v1095 = vadd.f32 %v1093, 1e-05
    %v1096 = vrsqrt.pop %v1094
    %v1097 = vrsqrt.pop %v1095
    %v1101 = vunpack.c.l.s4 269488144
    %v1102 = vunpack.c.0.s8 %v1101
    %v1103 = vlaneseq
    %v1104 = vshrl.u32 %v1103, 7
    %v1105 = vsub.s32 %v1102, %v1104
    %v1106 = vrot.slane %v1096, %v1105
    %v1108 = vunpack.c.l.s4 842150450
    %v1109 = vunpack.c.0.s8 %v1108
    %v1110 = vlaneseq
    %v1111 = vshrl.u32 %v1110, 7
    %v1112 = vsub.s32 %v1109, %v1111
    %v1113 = vrot.slane %v1096, %v1112
    %v1115 = vunpack.c.l.s4 1414812756
    %v1116 = vunpack.c.0.s8 %v1115
    %v1117 = vlaneseq
    %v1118 = vshrl.u32 %v1117, 7
    %v1119 = vsub.s32 %v1116, %v1118
    %v1120 = vrot.slane %v1096, %v1119
    %v1122 = vunpack.c.l.s4 1987475062
    %v1123 = vunpack.c.0.s8 %v1122
    %v1124 = vlaneseq
    %v1125 = vshrl.u32 %v1124, 7
    %v1126 = vsub.s32 %v1123, %v1125
    %v1127 = vrot.slane %v1096, %v1126
    %v1129 = vunpack.c.l.s4 269488144
    %v1130 = vunpack.c.0.s8 %v1129
    %v1131 = vlaneseq
    %v1132 = vshrl.u32 %v1131, 7
    %v1133 = vsub.s32 %v1130, %v1132
    %v1134 = vrot.slane %v1097, %v1133
    %v1136 = vunpack.c.l.s4 842150450
    %v1137 = vunpack.c.0.s8 %v1136
    %v1138 = vlaneseq
    %v1139 = vshrl.u32 %v1138, 7
    %v1140 = vsub.s32 %v1137, %v1139
    %v1141 = vrot.slane %v1097, %v1140
    %v1143 = vunpack.c.l.s4 1414812756
    %v1144 = vunpack.c.0.s8 %v1143
    %v1145 = vlaneseq
    %v1146 = vshrl.u32 %v1145, 7
    %v1147 = vsub.s32 %v1144, %v1146
    %v1148 = vrot.slane %v1097, %v1147
    %v1150 = vunpack.c.l.s4 1987475062
    %v1151 = vunpack.c.0.s8 %v1150
    %v1152 = vlaneseq
    %v1153 = vshrl.u32 %v1152, 7
    %v1154 = vsub.s32 %v1151, %v1153
    %v1155 = vrot.slane %v1097, %v1154
    %v1164 = vmul.f32 %v1026, %v1106
    %v1165 = vmul.f32 %v1027, %v1113
    %v1166 = vmul.f32 %v1028, %v1120
    %v1167 = vmul.f32 %v1029, %v1127
    %v1168 = vmul.f32 %v1030, %v1134
    %v1169 = vmul.f32 %v1031, %v1141
    %v1170 = vmul.f32 %v1032, %v1148
    %v1171 = vmul.f32 %v1033, %v1155
    %v1173 = vlaneseq
    %v1174 = vshrl.u32 %v1173, 7
    %v1175 = vsub.s32 0, %v1174
    %v1176 = vrot.slane %v905, %v1175
    %v1177 = vcombine.high %v1176, %v1176
    %v1179 = vunpack.c.l.s4 1983009808
    %v1180 = vunpack.c.0.s8 %v1179
    %v1181 = vlaneseq
    %v1182 = vshrl.u32 %v1181, 7
    %v1183 = vsub.s32 %v1180, %v1182
    %v1184 = vrot.slane %v1176, %v1183
    %v1186 = vunpack.c.l.s4 1983009808
    %v1187 = vunpack.c.0.s8 %v1186
    %v1188 = vlaneseq
    %v1189 = vshrl.u32 %v1188, 7
    %v1190 = vsub.s32 %v1187, %v1189
    %v1191 = vrot.slane %v1177, %v1190
    %v1192 = vcombine.high %v1184, %v1184
    %v1193 = vcombine.high %v1191, %v1191
    %v1198 = vmul.f32 %v1164, %v1184
    %v1199 = vmul.f32 %v1165, %v1192
    %v1200 = vmul.f32 %v1166, %v1191
    %v1201 = vmul.f32 %v1167, %v1193
    %v1202 = vmul.f32 %v1168, %v1184
    %v1203 = vmul.f32 %v1169, %v1192
    %v1204 = vmul.f32 %v1170, %v1191
    %v1205 = vmul.f32 %v1171, %v1193
    %v1207 = vlaneseq
    %v1208 = vshrl.u32 %v1207, 7
    %v1209 = vsub.s32 0, %v1208
    %v1210 = vrot.slane %v906, %v1209
    %v1211 = vcombine.high %v1210, %v1210
    %v1213 = vunpack.c.l.s4 1983009808
    %v1214 = vunpack.c.0.s8 %v1213
    %v1215 = vlaneseq
    %v1216 = vshrl.u32 %v1215, 7
    %v1217 = vsub.s32 %v1214, %v1216
    %v1218 = vrot.slane %v1210, %v1217
    %v1220 = vunpack.c.l.s4 1983009808
    %v1221 = vunpack.c.0.s8 %v1220
    %v1222 = vlaneseq
    %v1223 = vshrl.u32 %v1222, 7
    %v1224 = vsub.s32 %v1221, %v1223
    %v1225 = vrot.slane %v1211, %v1224
    %v1226 = vcombine.high %v1218, %v1218
    %v1227 = vcombine.high %v1225, %v1225
    %v1232 = vadd.f32 %v1198, %v1218
    %v1233 = vadd.f32 %v1199, %v1226
    %v1234 = vadd.f32 %v1200, %v1225
    %v1235 = vadd.f32 %v1201, %v1227
    %v1236 = vadd.f32 %v1202, %v1218
    %v1237 = vadd.f32 %v1203, %v1226
    %v1238 = vadd.f32 %v1204, %v1225
    %v1239 = vadd.f32 %v1205, %v1227
    %v1240 = vld [vmem:[%s12] sm:$0xf]
    %v1241 = vld [vmem:[%s12 + $0x4] sm:$0xf]
    %v1242 = vld [vmem:[%s12 + $0x8] sm:$0xf]
    %v1243 = vld [vmem:[%s12 + $0xc] sm:$0xf]
    %v1244 = vld [vmem:[%s13] sm:$0x1]
    %v1253 = vcombine.low %v1232, %v1233
    %v1254 = vcombine.low %v1234, %v1235
    %v1256 = vunpack.c.l.s4 1983009808
    %v1257 = vunpack.c.0.s8 %v1256
    %v1258 = vlaneseq
    %v1259 = vshrl.u32 %v1258, 7
    %v1260 = vsub.s32 %v1257, %v1259
    %v1261 = vrot.slane %v1253, %v1260
    %v1263 = vunpack.c.l.s4 1983009808
    %v1264 = vunpack.c.0.s8 %v1263
    %v1265 = vlaneseq
    %v1266 = vshrl.u32 %v1265, 7
    %v1267 = vsub.s32 %v1264, %v1266
    %v1268 = vrot.slane %v1254, %v1267
    %v1269 = vcombine.low %v1261, %v1268
    %v1270 = vcombine.low %v1236, %v1237
    %v1271 = vcombine.low %v1238, %v1239
    %v1273 = vunpack.c.l.s4 1983009808
    %v1274 = vunpack.c.0.s8 %v1273
    %v1275 = vlaneseq
    %v1276 = vshrl.u32 %v1275, 7
    %v1277 = vsub.s32 %v1274, %v1276
    %v1278 = vrot.slane %v1270, %v1277
    %v1280 = vunpack.c.l.s4 1983009808
    %v1281 = vunpack.c.0.s8 %v1280
    %v1282 = vlaneseq
    %v1283 = vshrl.u32 %v1282, 7
    %v1284 = vsub.s32 %v1281, %v1283
    %v1285 = vrot.slane %v1271, %v1284
    %v1286 = vcombine.low %v1278, %v1285
    %v1289 = vpack.c.bf16 %v1286, %v1269
    %v1291 = vlaneseq
    %v1292 = vshrl.u32 %v1291, 7
    %v1293 = vsub.s32 0, %v1292
    %v1294 = vrot.slane %v1244, %v1293
    %v1300 = vunpack.c.l.b16 %v1240
    %v1301 = vunpack.c.l.b16 %v1241
    %v1302 = vunpack.c.l.b16 %v1242
    %v1303 = vunpack.c.l.b16 %v1243
    %v1304 = vpack.c.b16 %v1301, %v1300
    %v1305 = vpack.c.b16 %v1303, %v1302
    %v1309 = vsel %vm233, %v1289, 0
    %1311 = vmatprep.subr.bf16.mxu0 0
    %1312 = vmatpush1.bf16.msra.mxu0 0
    %1313 = vmatprep.subr.bf16.mxu0 0
    %1314 = vmatpush1.bf16.msra.mxu0 0
    %1315 = vmatprep.subr.bf16.mxu0 0
    %1316 = vmatpush1.bf16.msra.mxu0 0
    %1317 = vmatprep.subr.bf16.mxu0 0
    %1318 = vmatpush1.bf16.msra.mxu0 0
    %1319 = vmatprep.subr.bf16.mxu0 0
    %1320 = vmatpush1.bf16.msra.mxu0 0
    %1321 = vmatprep.subr.bf16.mxu0 0
    %1322 = vmatpush1.bf16.msra.mxu0 0
    %1323 = vmatprep.subr.bf16.mxu0 0
    %1324 = vmatpush1.bf16.msra.mxu0 %v1305
    %1325 = vmatprep.subr.bf16.mxu0 0
    %1326 = vmatpush1.bf16.msra.mxu0 %v1304
    %1327 = vmatprep.subr.bf16.mxu0 0
    %1328 = vmatpush2.bf16.msra.mxu0 0
    %1329 = vmatprep.subr.bf16.mxu0 0
    %1330 = vmatpush2.bf16.msra.mxu0 0
    %1331 = vmatprep.subr.bf16.mxu0 0
    %1332 = vmatpush2.bf16.msra.mxu0 0
    %1333 = vmatprep.subr.bf16.mxu0 0
    %1334 = vmatpush2.bf16.msra.mxu0 0
    %1335 = vmatprep.subr.bf16.mxu0 0
    %1336 = vmatpush2.bf16.msra.mxu0 0
    %1337 = vmatprep.subr.bf16.mxu0 0
    %1338 = vmatpush2.bf16.msra.mxu0 0
    %1339 = vmatprep.subr.bf16.mxu0 0
    %1340 = vmatpush2.bf16.msra.mxu0 0
    %1341 = vmatprep.subr.bf16.mxu0 0
    %1342 = vmatpush2.bf16.msra.mxu0 0
    %1343 = vmatprep.mubr.bf16.mxu0 0
    %1344 = vmatmul.mubr.bf16.gmra.mxu0 %v1309
    %v1345 = vpop.f32.mrf.mxu0
    %v1346 = vadd.f32 %v1294, %v1345
    %v1347 = vpop.f32.mrf.mxu0
    %v1348 = vpop.f32.mrf.mxu0
    %v1349 = vadd.f32 %v1294, %v1348
    %v1350 = vpop.f32.mrf.mxu0
    %1351 = vdwg.mxu0
    %v1352 = vmul.f32 %v1346, 0.5
    %v1353 = vmul.f32 %v1349, 0.5
    %v1354 = vmul.f32 %v1346, 0.70710677
    %v1355 = vmul.f32 %v1349, 0.70710677
    %v1356 = verf.f32.pop %v1354
    %v1357 = verf.f32.pop %v1355
    %v1358 = vadd.f32 %v1356, 1.0
    %v1359 = vadd.f32 %v1357, 1.0
    %v1360 = vmul.f32 %v1352, %v1358
    %v1361 = vmul.f32 %v1353, %v1359
    %v1362 = vld [vmem:[%s14] sm:$0xf]
    %v1363 = vld [vmem:[%s14 + $0x4] sm:$0xf]
    %v1364 = vld [vmem:[%s14 + $0x8] sm:$0xf]
    %v1365 = vld [vmem:[%s14 + $0xc] sm:$0xf]
    %v1366 = vld [vmem:[%s14 + $0x10] sm:$0xf]
    %v1367 = vld [vmem:[%s14 + $0x14] sm:$0xf]
    %v1368 = vld [vmem:[%s14 + $0x18] sm:$0xf]
    %v1369 = vld [vmem:[%s14 + $0x1c] sm:$0xf]
    %v1370 = vld [vmem:[%s15] sm:$0x1]
    %v1371 = vpack.c.bf16 %v1361, %v1360
    %v1373 = vlaneseq
    %v1374 = vshrl.u32 %v1373, 7
    %v1375 = vsub.s32 0, %v1374
    %v1376 = vrot.slane %v1370, %v1375
    %v1386 = vunpack.c.l.b16 %v1362
    %v1387 = vunpack.c.l.b16 %v1363
    %v1388 = vunpack.c.l.b16 %v1364
    %v1389 = vunpack.c.l.b16 %v1365
    %v1390 = vunpack.c.l.b16 %v1366
    %v1391 = vunpack.c.l.b16 %v1367
    %v1392 = vunpack.c.l.b16 %v1368
    %v1393 = vunpack.c.l.b16 %v1369
    %v1394 = vpack.c.b16 %v1387, %v1386
    %v1395 = vpack.c.b16 %v1389, %v1388
    %v1396 = vpack.c.b16 %v1391, %v1390
    %v1397 = vpack.c.b16 %v1393, %v1392
    %vm1402 = vcmask 523264
    %v1404 = vsel %vm1402, %v1371, 0
    %1406 = vmatprep.subr.bf16.mxu0 0
    %1407 = vmatpush1.bf16.msra.mxu0 0
    %1408 = vmatprep.subr.bf16.mxu0 0
    %1409 = vmatpush1.bf16.msra.mxu0 0
    %1410 = vmatprep.subr.bf16.mxu0 0
    %1411 = vmatpush1.bf16.msra.mxu0 0
    %1412 = vmatprep.subr.bf16.mxu0 0
    %1413 = vmatpush1.bf16.msra.mxu0 0
    %1414 = vmatprep.subr.bf16.mxu0 0
    %1415 = vmatpush1.bf16.msra.mxu0 %v1397
    %1416 = vmatprep.subr.bf16.mxu0 0
    %1417 = vmatpush1.bf16.msra.mxu0 %v1396
    %1418 = vmatprep.subr.bf16.mxu0 0
    %1419 = vmatpush1.bf16.msra.mxu0 %v1395
    %1420 = vmatprep.subr.bf16.mxu0 0
    %1421 = vmatpush1.bf16.msra.mxu0 %v1394
    %1422 = vmatprep.subr.bf16.mxu0 0
    %1423 = vmatpush2.bf16.msra.mxu0 0
    %1424 = vmatprep.subr.bf16.mxu0 0
    %1425 = vmatpush2.bf16.msra.mxu0 0
    %1426 = vmatprep.subr.bf16.mxu0 0
    %1427 = vmatpush2.bf16.msra.mxu0 0
    %1428 = vmatprep.subr.bf16.mxu0 0
    %1429 = vmatpush2.bf16.msra.mxu0 0
    %1430 = vmatprep.subr.bf16.mxu0 0
    %1431 = vmatpush2.bf16.msra.mxu0 0
    %1432 = vmatprep.subr.bf16.mxu0 0
    %1433 = vmatpush2.bf16.msra.mxu0 0
    %1434 = vmatprep.subr.bf16.mxu0 0
    %1435 = vmatpush2.bf16.msra.mxu0 0
    %1436 = vmatprep.subr.bf16.mxu0 0
    %1437 = vmatpush2.bf16.msra.mxu0 0
    %1438 = vmatprep.mubr.bf16.mxu0 0
    %1439 = vmatmul.mubr.bf16.gmra.mxu0 %v1404
    %v1440 = vpop.f32.mrf.mxu0
    %v1441 = vadd.f32 %v1376, %v1440
    %v1442 = vpop.f32.mrf.mxu0
    %v1443 = vpop.f32.mrf.mxu0
    %v1444 = vadd.f32 %v1376, %v1443
    %v1445 = vpop.f32.mrf.mxu0
    %1446 = vdwg.mxu0
    %v1449 = vcombine.high %v1441, %v1441
    %v1451 = vunpack.c.l.s4 1983009808
    %v1452 = vunpack.c.0.s8 %v1451
    %v1453 = vlaneseq
    %v1454 = vshrl.u32 %v1453, 7
    %v1455 = vsub.s32 %v1452, %v1454
    %v1456 = vrot.slane %v1441, %v1455
    %v1458 = vunpack.c.l.s4 1983009808
    %v1459 = vunpack.c.0.s8 %v1458
    %v1460 = vlaneseq
    %v1461 = vshrl.u32 %v1460, 7
    %v1462 = vsub.s32 %v1459, %v1461
    %v1463 = vrot.slane %v1449, %v1462
    %v1464 = vcombine.high %v1456, %v1456
    %v1465 = vcombine.high %v1463, %v1463
    %v1466 = vcombine.high %v1444, %v1444
    %v1468 = vunpack.c.l.s4 1983009808
    %v1469 = vunpack.c.0.s8 %v1468
    %v1470 = vlaneseq
    %v1471 = vshrl.u32 %v1470, 7
    %v1472 = vsub.s32 %v1469, %v1471
    %v1473 = vrot.slane %v1444, %v1472
    %v1475 = vunpack.c.l.s4 1983009808
    %v1476 = vunpack.c.0.s8 %v1475
    %v1477 = vlaneseq
    %v1478 = vshrl.u32 %v1477, 7
    %v1479 = vsub.s32 %v1476, %v1478
    %v1480 = vrot.slane %v1466, %v1479
    %v1481 = vcombine.high %v1473, %v1473
    %v1482 = vcombine.high %v1480, %v1480
    %v1491 = vadd.f32 %v1232, %v1456
    %v1492 = vadd.f32 %v1233, %v1464
    %v1493 = vadd.f32 %v1234, %v1463
    %v1494 = vadd.f32 %v1235, %v1465
    %v1495 = vadd.f32 %v1236, %v1473
    %v1496 = vadd.f32 %v1237, %v1481
    %v1497 = vadd.f32 %v1238, %v1480
    %v1498 = vadd.f32 %v1239, %v1482
    %v1499 = vld [vmem:[%s10] sm:$0x1]
    %v1500 = vld [vmem:[%s11] sm:$0x1]
    %v1509 = vcombine.low %v1491, %v1492
    %v1510 = vcombine.low %v1493, %v1494
    %v1512 = vunpack.c.l.s4 1983009808
    %v1513 = vunpack.c.0.s8 %v1512
    %v1514 = vlaneseq
    %v1515 = vshrl.u32 %v1514, 7
    %v1516 = vsub.s32 %v1513, %v1515
    %v1517 = vrot.slane %v1509, %v1516
    %v1519 = vunpack.c.l.s4 1983009808
    %v1520 = vunpack.c.0.s8 %v1519
    %v1521 = vlaneseq
    %v1522 = vshrl.u32 %v1521, 7
    %v1523 = vsub.s32 %v1520, %v1522
    %v1524 = vrot.slane %v1510, %v1523
    %v1525 = vcombine.low %v1517, %v1524
    %v1526 = vcombine.low %v1495, %v1496
    %v1527 = vcombine.low %v1497, %v1498
    %v1529 = vunpack.c.l.s4 1983009808
    %v1530 = vunpack.c.0.s8 %v1529
    %v1531 = vlaneseq
    %v1532 = vshrl.u32 %v1531, 7
    %v1533 = vsub.s32 %v1530, %v1532
    %v1534 = vrot.slane %v1526, %v1533
    %v1536 = vunpack.c.l.s4 1983009808
    %v1537 = vunpack.c.0.s8 %v1536
    %v1538 = vlaneseq
    %v1539 = vshrl.u32 %v1538, 7
    %v1540 = vsub.s32 %v1537, %v1539
    %v1541 = vrot.slane %v1527, %v1540
    %v1542 = vcombine.low %v1534, %v1541
    %v1545 = vsel %vm233, %v1525, 0.0
    %1546 = vadd.xlane.f32.xlu0 %v1545
    %v1547 = vpop.xlane.xlu0 %1546
    %v1548 = vsel %vm233, %v1542, 0.0
    %1549 = vadd.xlane.f32.xlu0 %v1548
    %v1550 = vpop.xlane.xlu0 %1549
    %v1551 = vmul.f32 %v1547, %v957
    %v1552 = vmul.f32 %v1550, %v957
    %v1556 = vunpack.c.l.s4 269488144
    %v1557 = vunpack.c.0.s8 %v1556
    %v1558 = vlaneseq
    %v1559 = vshrl.u32 %v1558, 7
    %v1560 = vsub.s32 %v1557, %v1559
    %v1561 = vrot.slane %v1551, %v1560
    %v1563 = vunpack.c.l.s4 842150450
    %v1564 = vunpack.c.0.s8 %v1563
    %v1565 = vlaneseq
    %v1566 = vshrl.u32 %v1565, 7
    %v1567 = vsub.s32 %v1564, %v1566
    %v1568 = vrot.slane %v1551, %v1567
    %v1570 = vunpack.c.l.s4 1414812756
    %v1571 = vunpack.c.0.s8 %v1570
    %v1572 = vlaneseq
    %v1573 = vshrl.u32 %v1572, 7
    %v1574 = vsub.s32 %v1571, %v1573
    %v1575 = vrot.slane %v1551, %v1574
    %v1577 = vunpack.c.l.s4 1987475062
    %v1578 = vunpack.c.0.s8 %v1577
    %v1579 = vlaneseq
    %v1580 = vshrl.u32 %v1579, 7
    %v1581 = vsub.s32 %v1578, %v1580
    %v1582 = vrot.slane %v1551, %v1581
    %v1584 = vunpack.c.l.s4 269488144
    %v1585 = vunpack.c.0.s8 %v1584
    %v1586 = vlaneseq
    %v1587 = vshrl.u32 %v1586, 7
    %v1588 = vsub.s32 %v1585, %v1587
    %v1589 = vrot.slane %v1552, %v1588
    %v1591 = vunpack.c.l.s4 842150450
    %v1592 = vunpack.c.0.s8 %v1591
    %v1593 = vlaneseq
    %v1594 = vshrl.u32 %v1593, 7
    %v1595 = vsub.s32 %v1592, %v1594
    %v1596 = vrot.slane %v1552, %v1595
    %v1598 = vunpack.c.l.s4 1414812756
    %v1599 = vunpack.c.0.s8 %v1598
    %v1600 = vlaneseq
    %v1601 = vshrl.u32 %v1600, 7
    %v1602 = vsub.s32 %v1599, %v1601
    %v1603 = vrot.slane %v1552, %v1602
    %v1605 = vunpack.c.l.s4 1987475062
    %v1606 = vunpack.c.0.s8 %v1605
    %v1607 = vlaneseq
    %v1608 = vshrl.u32 %v1607, 7
    %v1609 = vsub.s32 %v1606, %v1608
    %v1610 = vrot.slane %v1552, %v1609
    %v1619 = vsub.f32 %v1491, %v1561
    %v1620 = vsub.f32 %v1492, %v1568
    %v1621 = vsub.f32 %v1493, %v1575
    %v1622 = vsub.f32 %v1494, %v1582
    %v1623 = vsub.f32 %v1495, %v1589
    %v1624 = vsub.f32 %v1496, %v1596
    %v1625 = vsub.f32 %v1497, %v1603
    %v1626 = vsub.f32 %v1498, %v1610
    %v1627 = vmul.f32 %v1619, %v1619
    %v1628 = vmul.f32 %v1620, %v1620
    %v1629 = vmul.f32 %v1621, %v1621
    %v1630 = vmul.f32 %v1622, %v1622
    %v1631 = vmul.f32 %v1623, %v1623
    %v1632 = vmul.f32 %v1624, %v1624
    %v1633 = vmul.f32 %v1625, %v1625
    %v1634 = vmul.f32 %v1626, %v1626
    %v1643 = vcombine.low %v1627, %v1628
    %v1644 = vcombine.low %v1629, %v1630
    %v1646 = vunpack.c.l.s4 1983009808
    %v1647 = vunpack.c.0.s8 %v1646
    %v1648 = vlaneseq
    %v1649 = vshrl.u32 %v1648, 7
    %v1650 = vsub.s32 %v1647, %v1649
    %v1651 = vrot.slane %v1643, %v1650
    %v1653 = vunpack.c.l.s4 1983009808
    %v1654 = vunpack.c.0.s8 %v1653
    %v1655 = vlaneseq
    %v1656 = vshrl.u32 %v1655, 7
    %v1657 = vsub.s32 %v1654, %v1656
    %v1658 = vrot.slane %v1644, %v1657
    %v1659 = vcombine.low %v1651, %v1658
    %v1660 = vcombine.low %v1631, %v1632
    %v1661 = vcombine.low %v1633, %v1634
    %v1663 = vunpack.c.l.s4 1983009808
    %v1664 = vunpack.c.0.s8 %v1663
    %v1665 = vlaneseq
    %v1666 = vshrl.u32 %v1665, 7
    %v1667 = vsub.s32 %v1664, %v1666
    %v1668 = vrot.slane %v1660, %v1667
    %v1670 = vunpack.c.l.s4 1983009808
    %v1671 = vunpack.c.0.s8 %v1670
    %v1672 = vlaneseq
    %v1673 = vshrl.u32 %v1672, 7
    %v1674 = vsub.s32 %v1671, %v1673
    %v1675 = vrot.slane %v1661, %v1674
    %v1676 = vcombine.low %v1668, %v1675
    %v1679 = vsel %vm233, %v1659, 0.0
    %1680 = vadd.xlane.f32.xlu0 %v1679
    %v1681 = vpop.xlane.xlu0 %1680
    %v1682 = vsel %vm233, %v1676, 0.0
    %1683 = vadd.xlane.f32.xlu0 %v1682
    %v1684 = vpop.xlane.xlu0 %1683
    %v1685 = vmul.f32 %v1681, %v957
    %v1686 = vmul.f32 %v1684, %v957
    %v1687 = vadd.f32 %v1685, 1e-05
    %v1688 = vadd.f32 %v1686, 1e-05
    %v1689 = vrsqrt.pop %v1687
    %v1690 = vrsqrt.pop %v1688
    %v1694 = vunpack.c.l.s4 269488144
    %v1695 = vunpack.c.0.s8 %v1694
    %v1696 = vlaneseq
    %v1697 = vshrl.u32 %v1696, 7
    %v1698 = vsub.s32 %v1695, %v1697
    %v1699 = vrot.slane %v1689, %v1698
    %v1701 = vunpack.c.l.s4 842150450
    %v1702 = vunpack.c.0.s8 %v1701
    %v1703 = vlaneseq
    %v1704 = vshrl.u32 %v1703, 7
    %v1705 = vsub.s32 %v1702, %v1704
    %v1706 = vrot.slane %v1689, %v1705
    %v1708 = vunpack.c.l.s4 1414812756
    %v1709 = vunpack.c.0.s8 %v1708
    %v1710 = vlaneseq
    %v1711 = vshrl.u32 %v1710, 7
    %v1712 = vsub.s32 %v1709, %v1711
    %v1713 = vrot.slane %v1689, %v1712
    %v1715 = vunpack.c.l.s4 1987475062
    %v1716 = vunpack.c.0.s8 %v1715
    %v1717 = vlaneseq
    %v1718 = vshrl.u32 %v1717, 7
    %v1719 = vsub.s32 %v1716, %v1718
    %v1720 = vrot.slane %v1689, %v1719
    %v1722 = vunpack.c.l.s4 269488144
    %v1723 = vunpack.c.0.s8 %v1722
    %v1724 = vlaneseq
    %v1725 = vshrl.u32 %v1724, 7
    %v1726 = vsub.s32 %v1723, %v1725
    %v1727 = vrot.slane %v1690, %v1726
    %v1729 = vunpack.c.l.s4 842150450
    %v1730 = vunpack.c.0.s8 %v1729
    %v1731 = vlaneseq
    %v1732 = vshrl.u32 %v1731, 7
    %v1733 = vsub.s32 %v1730, %v1732
    %v1734 = vrot.slane %v1690, %v1733
    %v1736 = vunpack.c.l.s4 1414812756
    %v1737 = vunpack.c.0.s8 %v1736
    %v1738 = vlaneseq
    %v1739 = vshrl.u32 %v1738, 7
    %v1740 = vsub.s32 %v1737, %v1739
    %v1741 = vrot.slane %v1690, %v1740
    %v1743 = vunpack.c.l.s4 1987475062
    %v1744 = vunpack.c.0.s8 %v1743
    %v1745 = vlaneseq
    %v1746 = vshrl.u32 %v1745, 7
    %v1747 = vsub.s32 %v1744, %v1746
    %v1748 = vrot.slane %v1690, %v1747
    %v1757 = vmul.f32 %v1619, %v1699
    %v1758 = vmul.f32 %v1620, %v1706
    %v1759 = vmul.f32 %v1621, %v1713
    %v1760 = vmul.f32 %v1622, %v1720
    %v1761 = vmul.f32 %v1623, %v1727
    %v1762 = vmul.f32 %v1624, %v1734
    %v1763 = vmul.f32 %v1625, %v1741
    %v1764 = vmul.f32 %v1626, %v1748
    %v1766 = vlaneseq
    %v1767 = vshrl.u32 %v1766, 7
    %v1768 = vsub.s32 0, %v1767
    %v1769 = vrot.slane %v1499, %v1768
    %v1770 = vcombine.high %v1769, %v1769
    %v1772 = vunpack.c.l.s4 1983009808
    %v1773 = vunpack.c.0.s8 %v1772
    %v1774 = vlaneseq
    %v1775 = vshrl.u32 %v1774, 7
    %v1776 = vsub.s32 %v1773, %v1775
    %v1777 = vrot.slane %v1769, %v1776
    %v1779 = vunpack.c.l.s4 1983009808
    %v1780 = vunpack.c.0.s8 %v1779
    %v1781 = vlaneseq
    %v1782 = vshrl.u32 %v1781, 7
    %v1783 = vsub.s32 %v1780, %v1782
    %v1784 = vrot.slane %v1770, %v1783
    %v1785 = vcombine.high %v1777, %v1777
    %v1786 = vcombine.high %v1784, %v1784
    %v1791 = vmul.f32 %v1757, %v1777
    %v1792 = vmul.f32 %v1758, %v1785
    %v1793 = vmul.f32 %v1759, %v1784
    %v1794 = vmul.f32 %v1760, %v1786
    %v1795 = vmul.f32 %v1761, %v1777
    %v1796 = vmul.f32 %v1762, %v1785
    %v1797 = vmul.f32 %v1763, %v1784
    %v1798 = vmul.f32 %v1764, %v1786
    %v1800 = vlaneseq
    %v1801 = vshrl.u32 %v1800, 7
    %v1802 = vsub.s32 0, %v1801
    %v1803 = vrot.slane %v1500, %v1802
    %v1804 = vcombine.high %v1803, %v1803
    %v1806 = vunpack.c.l.s4 1983009808
    %v1807 = vunpack.c.0.s8 %v1806
    %v1808 = vlaneseq
    %v1809 = vshrl.u32 %v1808, 7
    %v1810 = vsub.s32 %v1807, %v1809
    %v1811 = vrot.slane %v1803, %v1810
    %v1813 = vunpack.c.l.s4 1983009808
    %v1814 = vunpack.c.0.s8 %v1813
    %v1815 = vlaneseq
    %v1816 = vshrl.u32 %v1815, 7
    %v1817 = vsub.s32 %v1814, %v1816
    %v1818 = vrot.slane %v1804, %v1817
    %v1819 = vcombine.high %v1811, %v1811
    %v1820 = vcombine.high %v1818, %v1818
    %v1825 = vadd.f32 %v1791, %v1811
    %v1826 = vadd.f32 %v1792, %v1819
    %v1827 = vadd.f32 %v1793, %v1818
    %v1828 = vadd.f32 %v1794, %v1820
    %v1829 = vadd.f32 %v1795, %v1811
    %v1830 = vadd.f32 %v1796, %v1819
    %v1831 = vadd.f32 %v1797, %v1818
    %v1832 = vadd.f32 %v1798, %v1820
    %s1833 = scalar_lea.vmem %s4, 16
    %v1834 = vld [vmem:[%s1833] sm:$0xf]
    %v1835 = vld [vmem:[%s1833 + $0x4] sm:$0xf]
    %v1836 = vld [vmem:[%s1833 + $0x8] sm:$0xf]
    %v1837 = vld [vmem:[%s1833 + $0xc] sm:$0xf]
    %s1838 = scalar_lea.vmem %s5, 1
    %v1839 = vld [vmem:[%s1838] sm:$0x1]
    %v1848 = vcombine.low %v1825, %v1826
    %v1849 = vcombine.low %v1827, %v1828
    %v1851 = vunpack.c.l.s4 1983009808
    %v1852 = vunpack.c.0.s8 %v1851
    %v1853 = vlaneseq
    %v1854 = vshrl.u32 %v1853, 7
    %v1855 = vsub.s32 %v1852, %v1854
    %v1856 = vrot.slane %v1848, %v1855
    %v1858 = vunpack.c.l.s4 1983009808
    %v1859 = vunpack.c.0.s8 %v1858
    %v1860 = vlaneseq
    %v1861 = vshrl.u32 %v1860, 7
    %v1862 = vsub.s32 %v1859, %v1861
    %v1863 = vrot.slane %v1849, %v1862
    %v1864 = vcombine.low %v1856, %v1863
    %v1865 = vcombine.low %v1829, %v1830
    %v1866 = vcombine.low %v1831, %v1832
    %v1868 = vunpack.c.l.s4 1983009808
    %v1869 = vunpack.c.0.s8 %v1868
    %v1870 = vlaneseq
    %v1871 = vshrl.u32 %v1870, 7
    %v1872 = vsub.s32 %v1869, %v1871
    %v1873 = vrot.slane %v1865, %v1872
    %v1875 = vunpack.c.l.s4 1983009808
    %v1876 = vunpack.c.0.s8 %v1875
    %v1877 = vlaneseq
    %v1878 = vshrl.u32 %v1877, 7
    %v1879 = vsub.s32 %v1876, %v1878
    %v1880 = vrot.slane %v1866, %v1879
    %v1881 = vcombine.low %v1873, %v1880
    %v1884 = vpack.c.bf16 %v1881, %v1864
    %v1886 = vlaneseq
    %v1887 = vshrl.u32 %v1886, 7
    %v1888 = vsub.s32 0, %v1887
    %v1889 = vrot.slane %v1839, %v1888
    %v1895 = vunpack.c.l.b16 %v1834
    %v1896 = vunpack.c.l.b16 %v1835
    %v1897 = vunpack.c.l.b16 %v1836
    %v1898 = vunpack.c.l.b16 %v1837
    %v1899 = vpack.c.b16 %v1896, %v1895
    %v1900 = vpack.c.b16 %v1898, %v1897
    %v1904 = vsel %vm233, %v1884, 0
    %1906 = vmatprep.subr.bf16.mxu0 0
    %1907 = vmatpush1.bf16.msra.mxu0 0
    %1908 = vmatprep.subr.bf16.mxu0 0
    %1909 = vmatpush1.bf16.msra.mxu0 0
    %1910 = vmatprep.subr.bf16.mxu0 0
    %1911 = vmatpush1.bf16.msra.mxu0 0
    %1912 = vmatprep.subr.bf16.mxu0 0
    %1913 = vmatpush1.bf16.msra.mxu0 0
    %1914 = vmatprep.subr.bf16.mxu0 0
    %1915 = vmatpush1.bf16.msra.mxu0 0
    %1916 = vmatprep.subr.bf16.mxu0 0
    %1917 = vmatpush1.bf16.msra.mxu0 0
    %1918 = vmatprep.subr.bf16.mxu0 0
    %1919 = vmatpush1.bf16.msra.mxu0 %v1900
    %1920 = vmatprep.subr.bf16.mxu0 0
    %1921 = vmatpush1.bf16.msra.mxu0 %v1899
    %1922 = vmatprep.subr.bf16.mxu0 0
    %1923 = vmatpush2.bf16.msra.mxu0 0
    %1924 = vmatprep.subr.bf16.mxu0 0
    %1925 = vmatpush2.bf16.msra.mxu0 0
    %1926 = vmatprep.subr.bf16.mxu0 0
    %1927 = vmatpush2.bf16.msra.mxu0 0
    %1928 = vmatprep.subr.bf16.mxu0 0
    %1929 = vmatpush2.bf16.msra.mxu0 0
    %1930 = vmatprep.subr.bf16.mxu0 0
    %1931 = vmatpush2.bf16.msra.mxu0 0
    %1932 = vmatprep.subr.bf16.mxu0 0
    %1933 = vmatpush2.bf16.msra.mxu0 0
    %1934 = vmatprep.subr.bf16.mxu0 0
    %1935 = vmatpush2.bf16.msra.mxu0 0
    %1936 = vmatprep.subr.bf16.mxu0 0
    %1937 = vmatpush2.bf16.msra.mxu0 0
    %1938 = vmatprep.mubr.bf16.mxu0 0
    %1939 = vmatmul.mubr.bf16.gmra.mxu0 %v1904
    %v1940 = vpop.f32.mrf.mxu0
    %v1941 = vadd.f32 %v1889, %v1940
    %v1942 = vpop.f32.mrf.mxu0
    %v1943 = vpop.f32.mrf.mxu0
    %v1944 = vadd.f32 %v1889, %v1943
    %v1945 = vpop.f32.mrf.mxu0
    %1946 = vdwg.mxu0
    %v1947 = vpack.c.bf16 %v1944, %v1941
    %v1948 = vmul.f32 %v1941, %v149
    %v1949 = vmul.f32 %v1944, %v150
    %v1950 = vmul.f32 %v1941, %v151
    %v1951 = vmul.f32 %v1944, %v152
    %v1952 = vmul.f32 %v1941, %v153
    %v1953 = vmul.f32 %v1944, %v154
    %v1954 = vmul.f32 %v1941, %v155
    %v1955 = vmul.f32 %v1944, %v156
    %v1956 = vmul.f32 %v1941, %v157
    %v1957 = vmul.f32 %v1944, %v158
    %v1958 = vmul.f32 %v1941, %v159
    %v1959 = vmul.f32 %v1944, %v160
    %v1960 = vmul.f32 %v1941, %v161
    %v1961 = vmul.f32 %v1944, %v162
    %v1962 = vmul.f32 %v1941, %v163
    %v1963 = vmul.f32 %v1944, %v164
    %v1964 = vpack.c.bf16 %v1949, %v1948
    %v1965 = vpack.c.bf16 %v1951, %v1950
    %v1966 = vpack.c.bf16 %v1953, %v1952
    %v1967 = vpack.c.bf16 %v1955, %v1954
    %v1968 = vpack.c.bf16 %v1957, %v1956
    %v1969 = vpack.c.bf16 %v1959, %v1958
    %v1970 = vpack.c.bf16 %v1961, %v1960
    %v1971 = vpack.c.bf16 %v1963, %v1962
    %1973 = vrot.lane.b32.xlu0 %v1947, 96
    %v1974 = vpop.permute.xlu0 %1973
    %v1976 = vsel %vm233, %v1964, 0
    %v1979 = vsel %vm233, %v1965, 0
    %v1982 = vsel %vm233, %v1966, 0
    %v1985 = vsel %vm233, %v1967, 0
    %v1988 = vsel %vm233, %v1968, 0
    %v1991 = vsel %vm233, %v1969, 0
    %v1994 = vsel %vm233, %v1970, 0
    %v1997 = vsel %vm233, %v1971, 0
    %v2000 = vsel %vm233, %v1974, 0
    %2002 = vmatprep.subr.bf16.mxu0 0
    %2003 = vmatpush1.bf16.xpose.msra.mxu0 0
    %2004 = vmatprep.subr.bf16.mxu0 0
    %2005 = vmatpush1.bf16.xpose.msra.mxu0 0
    %2006 = vmatprep.subr.bf16.mxu0 0
    %2007 = vmatpush1.bf16.xpose.msra.mxu0 0
    %2008 = vmatprep.subr.bf16.mxu0 0
    %2009 = vmatpush1.bf16.xpose.msra.mxu0 0
    %2010 = vmatprep.subr.bf16.mxu0 0
    %2011 = vmatpush1.bf16.xpose.msra.mxu0 0
    %2012 = vmatprep.subr.bf16.mxu0 0
    %2013 = vmatpush1.bf16.xpose.msra.mxu0 0
    %2014 = vmatprep.subr.bf16.mxu0 0
    %2015 = vmatpush1.bf16.xpose.msra.mxu0 0
    %2016 = vmatprep.subr.bf16.mxu0 0
    %2017 = vmatpush1.bf16.xpose.msra.mxu0 %v2000
    %2018 = vmatprep.subr.bf16.mxu0 0
    %2019 = vmatpush2.bf16.xpose.msra.mxu0 0
    %2020 = vmatprep.subr.bf16.mxu0 0
    %2021 = vmatpush2.bf16.xpose.msra.mxu0 0
    %2022 = vmatprep.subr.bf16.mxu0 0
    %2023 = vmatpush2.bf16.xpose.msra.mxu0 0
    %2024 = vmatprep.subr.bf16.mxu0 0
    %2025 = vmatpush2.bf16.xpose.msra.mxu0 0
    %2026 = vmatprep.subr.bf16.mxu0 0
    %2027 = vmatpush2.bf16.xpose.msra.mxu0 0
    %2028 = vmatprep.subr.bf16.mxu0 0
    %2029 = vmatpush2.bf16.xpose.msra.mxu0 0
    %2030 = vmatprep.subr.bf16.mxu0 0
    %2031 = vmatpush2.bf16.xpose.msra.mxu0 0
    %2032 = vmatprep.subr.bf16.mxu0 0
    %2033 = vmatpush2.bf16.xpose.msra.mxu0 0
    %2034 = vmatprep.mubr.bf16.mxu0 0
    %2035 = vmatmul.mubr.bf16.gmra.mxu0 %v1976
    %v2036 = vpop.f32.mrf.mxu0
    %v2037 = vadd.f32 %v133, %v2036
    %v2038 = vpop.f32.mrf.mxu0
    %v2039 = vpop.f32.mrf.mxu0
    %v2040 = vadd.f32 %v134, %v2039
    %v2041 = vpop.f32.mrf.mxu0
    %2042 = vmatprep.mubr.bf16.mxu0 0
    %2043 = vmatmul.mubr.bf16.gmra.mxu0 %v1979
    %v2044 = vpop.f32.mrf.mxu0
    %v2045 = vadd.f32 %v135, %v2044
    %v2046 = vpop.f32.mrf.mxu0
    %v2047 = vpop.f32.mrf.mxu0
    %v2048 = vadd.f32 %v136, %v2047
    %v2049 = vpop.f32.mrf.mxu0
    %2050 = vmatprep.mubr.bf16.mxu0 0
    %2051 = vmatmul.mubr.bf16.gmra.mxu0 %v1982
    %v2052 = vpop.f32.mrf.mxu0
    %v2053 = vadd.f32 %v137, %v2052
    %v2054 = vpop.f32.mrf.mxu0
    %v2055 = vpop.f32.mrf.mxu0
    %v2056 = vadd.f32 %v138, %v2055
    %v2057 = vpop.f32.mrf.mxu0
    %2058 = vmatprep.mubr.bf16.mxu0 0
    %2059 = vmatmul.mubr.bf16.gmra.mxu0 %v1985
    %v2060 = vpop.f32.mrf.mxu0
    %v2061 = vadd.f32 %v139, %v2060
    %v2062 = vpop.f32.mrf.mxu0
    %v2063 = vpop.f32.mrf.mxu0
    %v2064 = vadd.f32 %v140, %v2063
    %v2065 = vpop.f32.mrf.mxu0
    %2066 = vmatprep.mubr.bf16.mxu0 0
    %2067 = vmatmul.mubr.bf16.gmra.mxu0 %v1988
    %v2068 = vpop.f32.mrf.mxu0
    %v2069 = vadd.f32 %v141, %v2068
    %v2070 = vpop.f32.mrf.mxu0
    %v2071 = vpop.f32.mrf.mxu0
    %v2072 = vadd.f32 %v142, %v2071
    %v2073 = vpop.f32.mrf.mxu0
    %2074 = vmatprep.mubr.bf16.mxu0 0
    %2075 = vmatmul.mubr.bf16.gmra.mxu0 %v1991
    %v2076 = vpop.f32.mrf.mxu0
    %v2077 = vadd.f32 %v143, %v2076
    %v2078 = vpop.f32.mrf.mxu0
    %v2079 = vpop.f32.mrf.mxu0
    %v2080 = vadd.f32 %v144, %v2079
    %v2081 = vpop.f32.mrf.mxu0
    %2082 = vmatprep.mubr.bf16.mxu0 0
    %2083 = vmatmul.mubr.bf16.gmra.mxu0 %v1994
    %v2084 = vpop.f32.mrf.mxu0
    %v2085 = vadd.f32 %v145, %v2084
    %v2086 = vpop.f32.mrf.mxu0
    %v2087 = vpop.f32.mrf.mxu0
    %v2088 = vadd.f32 %v146, %v2087
    %v2089 = vpop.f32.mrf.mxu0
    %2090 = vmatprep.mubr.bf16.mxu0 0
    %2091 = vmatmul.mubr.bf16.gmra.mxu0 %v1997
    %v2092 = vpop.f32.mrf.mxu0
    %v2093 = vadd.f32 %v147, %v2092
    %v2094 = vpop.f32.mrf.mxu0
    %v2095 = vpop.f32.mrf.mxu0
    %v2096 = vadd.f32 %v148, %v2095
    %v2097 = vpop.f32.mrf.mxu0
    %2098 = vdwg.mxu0
    %v2099 = vsel %vm430, %v2037, -inf
    %2100 = vmax.xlane.f32.xlu0 %v2099
    %v2101 = vpop.xlane.xlu0 %2100
    %v2102 = vsel %vm430, %v2040, -inf
    %2103 = vmax.xlane.f32.xlu0 %v2102
    %v2104 = vpop.xlane.xlu0 %2103
    %v2105 = vsel %vm430, %v2045, -inf
    %2106 = vmax.xlane.f32.xlu0 %v2105
    %v2107 = vpop.xlane.xlu0 %2106
    %v2108 = vsel %vm430, %v2048, -inf
    %2109 = vmax.xlane.f32.xlu0 %v2108
    %v2110 = vpop.xlane.xlu0 %2109
    %v2111 = vsel %vm430, %v2053, -inf
    %2112 = vmax.xlane.f32.xlu0 %v2111
    %v2113 = vpop.xlane.xlu0 %2112
    %v2114 = vsel %vm430, %v2056, -inf
    %2115 = vmax.xlane.f32.xlu0 %v2114
    %v2116 = vpop.xlane.xlu0 %2115
    %v2117 = vsel %vm430, %v2061, -inf
    %2118 = vmax.xlane.f32.xlu0 %v2117
    %v2119 = vpop.xlane.xlu0 %2118
    %v2120 = vsel %vm430, %v2064, -inf
    %2121 = vmax.xlane.f32.xlu0 %v2120
    %v2122 = vpop.xlane.xlu0 %2121
    %v2123 = vsel %vm430, %v2069, -inf
    %2124 = vmax.xlane.f32.xlu0 %v2123
    %v2125 = vpop.xlane.xlu0 %2124
    %v2126 = vsel %vm430, %v2072, -inf
    %2127 = vmax.xlane.f32.xlu0 %v2126
    %v2128 = vpop.xlane.xlu0 %2127
    %v2129 = vsel %vm430, %v2077, -inf
    %2130 = vmax.xlane.f32.xlu0 %v2129
    %v2131 = vpop.xlane.xlu0 %2130
    %v2132 = vsel %vm430, %v2080, -inf
    %2133 = vmax.xlane.f32.xlu0 %v2132
    %v2134 = vpop.xlane.xlu0 %2133
    %v2135 = vsel %vm430, %v2085, -inf
    %2136 = vmax.xlane.f32.xlu0 %v2135
    %v2137 = vpop.xlane.xlu0 %2136
    %v2138 = vsel %vm430, %v2088, -inf
    %2139 = vmax.xlane.f32.xlu0 %v2138
    %v2140 = vpop.xlane.xlu0 %2139
    %v2141 = vsel %vm430, %v2093, -inf
    %2142 = vmax.xlane.f32.xlu0 %v2141
    %v2143 = vpop.xlane.xlu0 %2142
    %v2144 = vsel %vm430, %v2096, -inf
    %2145 = vmax.xlane.f32.xlu0 %v2144
    %v2146 = vpop.xlane.xlu0 %2145
    %v2147 = vsub.f32 %v2037, %v2101
    %v2148 = vsub.f32 %v2040, %v2104
    %v2149 = vsub.f32 %v2045, %v2107
    %v2150 = vsub.f32 %v2048, %v2110
    %v2151 = vsub.f32 %v2053, %v2113
    %v2152 = vsub.f32 %v2056, %v2116
    %v2153 = vsub.f32 %v2061, %v2119
    %v2154 = vsub.f32 %v2064, %v2122
    %v2155 = vsub.f32 %v2069, %v2125
    %v2156 = vsub.f32 %v2072, %v2128
    %v2157 = vsub.f32 %v2077, %v2131
    %v2158 = vsub.f32 %v2080, %v2134
    %v2159 = vsub.f32 %v2085, %v2137
    %v2160 = vsub.f32 %v2088, %v2140
    %v2161 = vsub.f32 %v2093, %v2143
    %v2162 = vsub.f32 %v2096, %v2146
    %v2163 = vmul.f32 %v2147, 1.442695
    %v2164 = vpow.pop %v2163
    %v2165 = vmul.f32 %v2148, 1.442695
    %v2166 = vpow.pop %v2165
    %v2167 = vmul.f32 %v2149, 1.442695
    %v2168 = vpow.pop %v2167
    %v2169 = vmul.f32 %v2150, 1.442695
    %v2170 = vpow.pop %v2169
    %v2171 = vmul.f32 %v2151, 1.442695
    %v2172 = vpow.pop %v2171
    %v2173 = vmul.f32 %v2152, 1.442695
    %v2174 = vpow.pop %v2173
    %v2175 = vmul.f32 %v2153, 1.442695
    %v2176 = vpow.pop %v2175
    %v2177 = vmul.f32 %v2154, 1.442695
    %v2178 = vpow.pop %v2177
    %v2179 = vmul.f32 %v2155, 1.442695
    %v2180 = vpow.pop %v2179
    %v2181 = vmul.f32 %v2156, 1.442695
    %v2182 = vpow.pop %v2181
    %v2183 = vmul.f32 %v2157, 1.442695
    %v2184 = vpow.pop %v2183
    %v2185 = vmul.f32 %v2158, 1.442695
    %v2186 = vpow.pop %v2185
    %v2187 = vmul.f32 %v2159, 1.442695
    %v2188 = vpow.pop %v2187
    %v2189 = vmul.f32 %v2160, 1.442695
    %v2190 = vpow.pop %v2189
    %v2191 = vmul.f32 %v2161, 1.442695
    %v2192 = vpow.pop %v2191
    %v2193 = vmul.f32 %v2162, 1.442695
    %v2194 = vpow.pop %v2193
    %v2195 = vsel %vm430, %v2164, 0.0
    %2196 = vadd.xlane.f32.xlu0 %v2195
    %v2197 = vpop.xlane.xlu0 %2196
    %v2198 = vsel %vm430, %v2166, 0.0
    %2199 = vadd.xlane.f32.xlu0 %v2198
    %v2200 = vpop.xlane.xlu0 %2199
    %v2201 = vsel %vm430, %v2168, 0.0
    %2202 = vadd.xlane.f32.xlu0 %v2201
    %v2203 = vpop.xlane.xlu0 %2202
    %v2204 = vsel %vm430, %v2170, 0.0
    %2205 = vadd.xlane.f32.xlu0 %v2204
    %v2206 = vpop.xlane.xlu0 %2205
    %v2207 = vsel %vm430, %v2172, 0.0
    %2208 = vadd.xlane.f32.xlu0 %v2207
    %v2209 = vpop.xlane.xlu0 %2208
    %v2210 = vsel %vm430, %v2174, 0.0
    %2211 = vadd.xlane.f32.xlu0 %v2210
    %v2212 = vpop.xlane.xlu0 %2211
    %v2213 = vsel %vm430, %v2176, 0.0
    %2214 = vadd.xlane.f32.xlu0 %v2213
    %v2215 = vpop.xlane.xlu0 %2214
    %v2216 = vsel %vm430, %v2178, 0.0
    %2217 = vadd.xlane.f32.xlu0 %v2216
    %v2218 = vpop.xlane.xlu0 %2217
    %v2219 = vsel %vm430, %v2180, 0.0
    %2220 = vadd.xlane.f32.xlu0 %v2219
    %v2221 = vpop.xlane.xlu0 %2220
    %v2222 = vsel %vm430, %v2182, 0.0
    %2223 = vadd.xlane.f32.xlu0 %v2222
    %v2224 = vpop.xlane.xlu0 %2223
    %v2225 = vsel %vm430, %v2184, 0.0
    %2226 = vadd.xlane.f32.xlu0 %v2225
    %v2227 = vpop.xlane.xlu0 %2226
    %v2228 = vsel %vm430, %v2186, 0.0
    %2229 = vadd.xlane.f32.xlu0 %v2228
    %v2230 = vpop.xlane.xlu0 %2229
    %v2231 = vsel %vm430, %v2188, 0.0
    %2232 = vadd.xlane.f32.xlu0 %v2231
    %v2233 = vpop.xlane.xlu0 %2232
    %v2234 = vsel %vm430, %v2190, 0.0
    %2235 = vadd.xlane.f32.xlu0 %v2234
    %v2236 = vpop.xlane.xlu0 %2235
    %v2237 = vsel %vm430, %v2192, 0.0
    %2238 = vadd.xlane.f32.xlu0 %v2237
    %v2239 = vpop.xlane.xlu0 %2238
    %v2240 = vsel %vm430, %v2194, 0.0
    %2241 = vadd.xlane.f32.xlu0 %v2240
    %v2242 = vpop.xlane.xlu0 %2241
    %v2243 = vrcp.pop %v2197
    %v2244 = vrcp.pop %v2200
    %v2245 = vrcp.pop %v2203
    %v2246 = vrcp.pop %v2206
    %v2247 = vrcp.pop %v2209
    %v2248 = vrcp.pop %v2212
    %v2249 = vrcp.pop %v2215
    %v2250 = vrcp.pop %v2218
    %v2251 = vrcp.pop %v2221
    %v2252 = vrcp.pop %v2224
    %v2253 = vrcp.pop %v2227
    %v2254 = vrcp.pop %v2230
    %v2255 = vrcp.pop %v2233
    %v2256 = vrcp.pop %v2236
    %v2257 = vrcp.pop %v2239
    %v2258 = vrcp.pop %v2242
    %v2259 = vmul.f32 %v2164, %v2243
    %v2260 = vmul.f32 %v2166, %v2244
    %v2261 = vmul.f32 %v2168, %v2245
    %v2262 = vmul.f32 %v2170, %v2246
    %v2263 = vmul.f32 %v2172, %v2247
    %v2264 = vmul.f32 %v2174, %v2248
    %v2265 = vmul.f32 %v2176, %v2249
    %v2266 = vmul.f32 %v2178, %v2250
    %v2267 = vmul.f32 %v2180, %v2251
    %v2268 = vmul.f32 %v2182, %v2252
    %v2269 = vmul.f32 %v2184, %v2253
    %v2270 = vmul.f32 %v2186, %v2254
    %v2271 = vmul.f32 %v2188, %v2255
    %v2272 = vmul.f32 %v2190, %v2256
    %v2273 = vmul.f32 %v2192, %v2257
    %v2274 = vmul.f32 %v2194, %v2258
    %v2275 = vpack.c.bf16 %v2260, %v2259
    %v2276 = vpack.c.bf16 %v2262, %v2261
    %v2277 = vpack.c.bf16 %v2264, %v2263
    %v2278 = vpack.c.bf16 %v2266, %v2265
    %v2279 = vpack.c.bf16 %v2268, %v2267
    %v2280 = vpack.c.bf16 %v2270, %v2269
    %v2281 = vpack.c.bf16 %v2272, %v2271
    %v2282 = vpack.c.bf16 %v2274, %v2273
    %2283 = vrot.lane.b32.xlu0 %v1947, 64
    %v2284 = vpop.permute.xlu0 %2283
    %v2287 = vsel %vm430, %v2275, 0
    %v2290 = vsel %vm430, %v2276, 0
    %v2293 = vsel %vm430, %v2277, 0
    %v2296 = vsel %vm430, %v2278, 0
    %v2299 = vsel %vm430, %v2279, 0
    %v2302 = vsel %vm430, %v2280, 0
    %v2305 = vsel %vm430, %v2281, 0
    %v2308 = vsel %vm430, %v2282, 0
    %2310 = vmatprep.subr.bf16.mxu0 0
    %2311 = vmatpush1.bf16.msra.mxu0 0
    %2312 = vmatprep.subr.bf16.mxu0 0
    %2313 = vmatpush1.bf16.msra.mxu0 0
    %2314 = vmatprep.subr.bf16.mxu0 0
    %2315 = vmatpush1.bf16.msra.mxu0 0
    %2316 = vmatprep.subr.bf16.mxu0 0
    %2317 = vmatpush1.bf16.msra.mxu0 0
    %2318 = vmatprep.subr.bf16.mxu0 0
    %2319 = vmatpush1.bf16.msra.mxu0 0
    %2320 = vmatprep.subr.bf16.mxu0 0
    %2321 = vmatpush1.bf16.msra.mxu0 0
    %2322 = vmatprep.subr.bf16.mxu0 0
    %2323 = vmatpush1.bf16.msra.mxu0 0
    %2324 = vmatprep.subr.bf16.mxu0 0
    %2325 = vmatpush1.bf16.msra.mxu0 %v2284
    %2326 = vmatprep.subr.bf16.mxu0 0
    %2327 = vmatpush2.bf16.msra.mxu0 0
    %2328 = vmatprep.subr.bf16.mxu0 0
    %2329 = vmatpush2.bf16.msra.mxu0 0
    %2330 = vmatprep.subr.bf16.mxu0 0
    %2331 = vmatpush2.bf16.msra.mxu0 0
    %2332 = vmatprep.subr.bf16.mxu0 0
    %2333 = vmatpush2.bf16.msra.mxu0 0
    %2334 = vmatprep.subr.bf16.mxu0 0
    %2335 = vmatpush2.bf16.msra.mxu0 0
    %2336 = vmatprep.subr.bf16.mxu0 0
    %2337 = vmatpush2.bf16.msra.mxu0 0
    %2338 = vmatprep.subr.bf16.mxu0 0
    %2339 = vmatpush2.bf16.msra.mxu0 0
    %2340 = vmatprep.subr.bf16.mxu0 0
    %2341 = vmatpush2.bf16.msra.mxu0 0
    %2342 = vmatprep.mubr.bf16.mxu0 0
    %2343 = vmatmul.mubr.bf16.gmra.mxu0 %v2287
    %v2344 = vpop.f32.mrf.mxu0
    %v2345 = vadd.f32 0.0, %v2344
    %v2346 = vpop.f32.mrf.mxu0
    %v2347 = vpop.f32.mrf.mxu0
    %v2348 = vadd.f32 0.0, %v2347
    %v2349 = vpop.f32.mrf.mxu0
    %2350 = vmatprep.mubr.bf16.mxu0 0
    %2351 = vmatmul.mubr.bf16.gmra.mxu0 %v2290
    %v2352 = vpop.f32.mrf.mxu0
    %v2353 = vadd.f32 0.0, %v2352
    %v2354 = vpop.f32.mrf.mxu0
    %v2355 = vpop.f32.mrf.mxu0
    %v2356 = vadd.f32 0.0, %v2355
    %v2357 = vpop.f32.mrf.mxu0
    %2358 = vmatprep.mubr.bf16.mxu0 0
    %2359 = vmatmul.mubr.bf16.gmra.mxu0 %v2293
    %v2360 = vpop.f32.mrf.mxu0
    %v2361 = vadd.f32 0.0, %v2360
    %v2362 = vpop.f32.mrf.mxu0
    %v2363 = vpop.f32.mrf.mxu0
    %v2364 = vadd.f32 0.0, %v2363
    %v2365 = vpop.f32.mrf.mxu0
    %2366 = vmatprep.mubr.bf16.mxu0 0
    %2367 = vmatmul.mubr.bf16.gmra.mxu0 %v2296
    %v2368 = vpop.f32.mrf.mxu0
    %v2369 = vadd.f32 0.0, %v2368
    %v2370 = vpop.f32.mrf.mxu0
    %v2371 = vpop.f32.mrf.mxu0
    %v2372 = vadd.f32 0.0, %v2371
    %v2373 = vpop.f32.mrf.mxu0
    %2374 = vmatprep.mubr.bf16.mxu0 0
    %2375 = vmatmul.mubr.bf16.gmra.mxu0 %v2299
    %v2376 = vpop.f32.mrf.mxu0
    %v2377 = vadd.f32 0.0, %v2376
    %v2378 = vpop.f32.mrf.mxu0
    %v2379 = vpop.f32.mrf.mxu0
    %v2380 = vadd.f32 0.0, %v2379
    %v2381 = vpop.f32.mrf.mxu0
    %2382 = vmatprep.mubr.bf16.mxu0 0
    %2383 = vmatmul.mubr.bf16.gmra.mxu0 %v2302
    %v2384 = vpop.f32.mrf.mxu0
    %v2385 = vadd.f32 0.0, %v2384
    %v2386 = vpop.f32.mrf.mxu0
    %v2387 = vpop.f32.mrf.mxu0
    %v2388 = vadd.f32 0.0, %v2387
    %v2389 = vpop.f32.mrf.mxu0
    %2390 = vmatprep.mubr.bf16.mxu0 0
    %2391 = vmatmul.mubr.bf16.gmra.mxu0 %v2305
    %v2392 = vpop.f32.mrf.mxu0
    %v2393 = vadd.f32 0.0, %v2392
    %v2394 = vpop.f32.mrf.mxu0
    %v2395 = vpop.f32.mrf.mxu0
    %v2396 = vadd.f32 0.0, %v2395
    %v2397 = vpop.f32.mrf.mxu0
    %2398 = vmatprep.mubr.bf16.mxu0 0
    %2399 = vmatmul.mubr.bf16.gmra.mxu0 %v2308
    %v2400 = vpop.f32.mrf.mxu0
    %v2401 = vadd.f32 0.0, %v2400
    %v2402 = vpop.f32.mrf.mxu0
    %v2403 = vpop.f32.mrf.mxu0
    %v2404 = vadd.f32 0.0, %v2403
    %v2405 = vpop.f32.mrf.mxu0
    %2406 = vdwg.mxu0
    %v2407 = vmul.f32 %v2345, %v149
    %v2408 = vmul.f32 %v2348, %v150
    %v2409 = vmul.f32 %v2353, %v151
    %v2410 = vmul.f32 %v2356, %v152
    %v2411 = vmul.f32 %v2361, %v153
    %v2412 = vmul.f32 %v2364, %v154
    %v2413 = vmul.f32 %v2369, %v155
    %v2414 = vmul.f32 %v2372, %v156
    %v2415 = vmul.f32 %v2377, %v157
    %v2416 = vmul.f32 %v2380, %v158
    %v2417 = vmul.f32 %v2385, %v159
    %v2418 = vmul.f32 %v2388, %v160
    %v2419 = vmul.f32 %v2393, %v161
    %v2420 = vmul.f32 %v2396, %v162
    %v2421 = vmul.f32 %v2401, %v163
    %v2422 = vmul.f32 %v2404, %v164
    %v2423 = vsel %vm233, %v2407, 0.0
    %v2424 = vsel %vm233, %v2409, 0.0
    %v2425 = vadd.f32 %v2423, %v2424
    %v2426 = vsel %vm233, %v2411, 0.0
    %v2427 = vadd.f32 %v2425, %v2426
    %v2428 = vsel %vm233, %v2413, 0.0
    %v2429 = vadd.f32 %v2427, %v2428
    %v2430 = vsel %vm233, %v2415, 0.0
    %v2431 = vadd.f32 %v2429, %v2430
    %v2432 = vsel %vm233, %v2417, 0.0
    %v2433 = vadd.f32 %v2431, %v2432
    %v2434 = vsel %vm233, %v2419, 0.0
    %v2435 = vadd.f32 %v2433, %v2434
    %v2436 = vsel %vm233, %v2421, 0.0
    %v2437 = vadd.f32 %v2435, %v2436
    %v2438 = vsel %vm233, %v2408, 0.0
    %v2439 = vsel %vm233, %v2410, 0.0
    %v2440 = vadd.f32 %v2438, %v2439
    %v2441 = vsel %vm233, %v2412, 0.0
    %v2442 = vadd.f32 %v2440, %v2441
    %v2443 = vsel %vm233, %v2414, 0.0
    %v2444 = vadd.f32 %v2442, %v2443
    %v2445 = vsel %vm233, %v2416, 0.0
    %v2446 = vadd.f32 %v2444, %v2445
    %v2447 = vsel %vm233, %v2418, 0.0
    %v2448 = vadd.f32 %v2446, %v2447
    %v2449 = vsel %vm233, %v2420, 0.0
    %v2450 = vadd.f32 %v2448, %v2449
    %v2451 = vsel %vm233, %v2422, 0.0
    %v2452 = vadd.f32 %v2450, %v2451
    %s2453 = scalar_lea.vmem %s6, 16
    %v2454 = vld [vmem:[%s2453] sm:$0xf]
    %v2455 = vld [vmem:[%s2453 + $0x4] sm:$0xf]
    %v2456 = vld [vmem:[%s2453 + $0x8] sm:$0xf]
    %v2457 = vld [vmem:[%s2453 + $0xc] sm:$0xf]
    %s2458 = scalar_lea.vmem %s7, 1
    %v2459 = vld [vmem:[%s2458] sm:$0x1]
    %v2460 = vpack.c.bf16 %v2452, %v2437
    %v2462 = vlaneseq
    %v2463 = vshrl.u32 %v2462, 7
    %v2464 = vsub.s32 0, %v2463
    %v2465 = vrot.slane %v2459, %v2464
    %v2471 = vunpack.c.l.b16 %v2454
    %v2472 = vunpack.c.l.b16 %v2455
    %v2473 = vunpack.c.l.b16 %v2456
    %v2474 = vunpack.c.l.b16 %v2457
    %v2475 = vpack.c.b16 %v2472, %v2471
    %v2476 = vpack.c.b16 %v2474, %v2473
    %v2480 = vsel %vm233, %v2460, 0
    %2482 = vmatprep.subr.bf16.mxu0 0
    %2483 = vmatpush1.bf16.msra.mxu0 0
    %2484 = vmatprep.subr.bf16.mxu0 0
    %2485 = vmatpush1.bf16.msra.mxu0 0
    %2486 = vmatprep.subr.bf16.mxu0 0
    %2487 = vmatpush1.bf16.msra.mxu0 0
    %2488 = vmatprep.subr.bf16.mxu0 0
    %2489 = vmatpush1.bf16.msra.mxu0 0
    %2490 = vmatprep.subr.bf16.mxu0 0
    %2491 = vmatpush1.bf16.msra.mxu0 0
    %2492 = vmatprep.subr.bf16.mxu0 0
    %2493 = vmatpush1.bf16.msra.mxu0 0
    %2494 = vmatprep.subr.bf16.mxu0 0
    %2495 = vmatpush1.bf16.msra.mxu0 %v2476
    %2496 = vmatprep.subr.bf16.mxu0 0
    %2497 = vmatpush1.bf16.msra.mxu0 %v2475
    %2498 = vmatprep.subr.bf16.mxu0 0
    %2499 = vmatpush2.bf16.msra.mxu0 0
    %2500 = vmatprep.subr.bf16.mxu0 0
    %2501 = vmatpush2.bf16.msra.mxu0 0
    %2502 = vmatprep.subr.bf16.mxu0 0
    %2503 = vmatpush2.bf16.msra.mxu0 0
    %2504 = vmatprep.subr.bf16.mxu0 0
    %2505 = vmatpush2.bf16.msra.mxu0 0
    %2506 = vmatprep.subr.bf16.mxu0 0
    %2507 = vmatpush2.bf16.msra.mxu0 0
    %2508 = vmatprep.subr.bf16.mxu0 0
    %2509 = vmatpush2.bf16.msra.mxu0 0
    %2510 = vmatprep.subr.bf16.mxu0 0
    %2511 = vmatpush2.bf16.msra.mxu0 0
    %2512 = vmatprep.subr.bf16.mxu0 0
    %2513 = vmatpush2.bf16.msra.mxu0 0
    %2514 = vmatprep.mubr.bf16.mxu0 0
    %2515 = vmatmul.mubr.bf16.gmra.mxu0 %v2480
    %v2516 = vpop.f32.mrf.mxu0
    %v2517 = vadd.f32 %v2465, %v2516
    %v2518 = vpop.f32.mrf.mxu0
    %v2519 = vpop.f32.mrf.mxu0
    %v2520 = vadd.f32 %v2465, %v2519
    %v2521 = vpop.f32.mrf.mxu0
    %2522 = vdwg.mxu0
    %v2525 = vcombine.high %v2517, %v2517
    %v2527 = vunpack.c.l.s4 1983009808
    %v2528 = vunpack.c.0.s8 %v2527
    %v2529 = vlaneseq
    %v2530 = vshrl.u32 %v2529, 7
    %v2531 = vsub.s32 %v2528, %v2530
    %v2532 = vrot.slane %v2517, %v2531
    %v2534 = vunpack.c.l.s4 1983009808
    %v2535 = vunpack.c.0.s8 %v2534
    %v2536 = vlaneseq
    %v2537 = vshrl.u32 %v2536, 7
    %v2538 = vsub.s32 %v2535, %v2537
    %v2539 = vrot.slane %v2525, %v2538
    %v2540 = vcombine.high %v2532, %v2532
    %v2541 = vcombine.high %v2539, %v2539
    %v2542 = vcombine.high %v2520, %v2520
    %v2544 = vunpack.c.l.s4 1983009808
    %v2545 = vunpack.c.0.s8 %v2544
    %v2546 = vlaneseq
    %v2547 = vshrl.u32 %v2546, 7
    %v2548 = vsub.s32 %v2545, %v2547
    %v2549 = vrot.slane %v2520, %v2548
    %v2551 = vunpack.c.l.s4 1983009808
    %v2552 = vunpack.c.0.s8 %v2551
    %v2553 = vlaneseq
    %v2554 = vshrl.u32 %v2553, 7
    %v2555 = vsub.s32 %v2552, %v2554
    %v2556 = vrot.slane %v2542, %v2555
    %v2557 = vcombine.high %v2549, %v2549
    %v2558 = vcombine.high %v2556, %v2556
    %v2567 = vadd.f32 %v1825, %v2532
    %v2568 = vadd.f32 %v1826, %v2540
    %v2569 = vadd.f32 %v1827, %v2539
    %v2570 = vadd.f32 %v1828, %v2541
    %v2571 = vadd.f32 %v1829, %v2549
    %v2572 = vadd.f32 %v1830, %v2557
    %v2573 = vadd.f32 %v1831, %v2556
    %v2574 = vadd.f32 %v1832, %v2558
    %s2575 = scalar_lea.vmem %s8, 1
    %v2576 = vld [vmem:[%s2575] sm:$0x1]
    %s2577 = scalar_lea.vmem %s9, 1
    %v2578 = vld [vmem:[%s2577] sm:$0x1]
    %v2587 = vcombine.low %v2567, %v2568
    %v2588 = vcombine.low %v2569, %v2570
    %v2590 = vunpack.c.l.s4 1983009808
    %v2591 = vunpack.c.0.s8 %v2590
    %v2592 = vlaneseq
    %v2593 = vshrl.u32 %v2592, 7
    %v2594 = vsub.s32 %v2591, %v2593
    %v2595 = vrot.slane %v2587, %v2594
    %v2597 = vunpack.c.l.s4 1983009808
    %v2598 = vunpack.c.0.s8 %v2597
    %v2599 = vlaneseq
    %v2600 = vshrl.u32 %v2599, 7
    %v2601 = vsub.s32 %v2598, %v2600
    %v2602 = vrot.slane %v2588, %v2601
    %v2603 = vcombine.low %v2595, %v2602
    %v2604 = vcombine.low %v2571, %v2572
    %v2605 = vcombine.low %v2573, %v2574
    %v2607 = vunpack.c.l.s4 1983009808
    %v2608 = vunpack.c.0.s8 %v2607
    %v2609 = vlaneseq
    %v2610 = vshrl.u32 %v2609, 7
    %v2611 = vsub.s32 %v2608, %v2610
    %v2612 = vrot.slane %v2604, %v2611
    %v2614 = vunpack.c.l.s4 1983009808
    %v2615 = vunpack.c.0.s8 %v2614
    %v2616 = vlaneseq
    %v2617 = vshrl.u32 %v2616, 7
    %v2618 = vsub.s32 %v2615, %v2617
    %v2619 = vrot.slane %v2605, %v2618
    %v2620 = vcombine.low %v2612, %v2619
    %v2623 = vsel %vm233, %v2603, 0.0
    %2624 = vadd.xlane.f32.xlu0 %v2623
    %v2625 = vpop.xlane.xlu0 %2624
    %v2626 = vsel %vm233, %v2620, 0.0
    %2627 = vadd.xlane.f32.xlu0 %v2626
    %v2628 = vpop.xlane.xlu0 %2627
    %v2629 = vmul.f32 %v2625, %v957
    %v2630 = vmul.f32 %v2628, %v957
    %v2634 = vunpack.c.l.s4 269488144
    %v2635 = vunpack.c.0.s8 %v2634
    %v2636 = vlaneseq
    %v2637 = vshrl.u32 %v2636, 7
    %v2638 = vsub.s32 %v2635, %v2637
    %v2639 = vrot.slane %v2629, %v2638
    %v2641 = vunpack.c.l.s4 842150450
    %v2642 = vunpack.c.0.s8 %v2641
    %v2643 = vlaneseq
    %v2644 = vshrl.u32 %v2643, 7
    %v2645 = vsub.s32 %v2642, %v2644
    %v2646 = vrot.slane %v2629, %v2645
    %v2648 = vunpack.c.l.s4 1414812756
    %v2649 = vunpack.c.0.s8 %v2648
    %v2650 = vlaneseq
    %v2651 = vshrl.u32 %v2650, 7
    %v2652 = vsub.s32 %v2649, %v2651
    %v2653 = vrot.slane %v2629, %v2652
    %v2655 = vunpack.c.l.s4 1987475062
    %v2656 = vunpack.c.0.s8 %v2655
    %v2657 = vlaneseq
    %v2658 = vshrl.u32 %v2657, 7
    %v2659 = vsub.s32 %v2656, %v2658
    %v2660 = vrot.slane %v2629, %v2659
    %v2662 = vunpack.c.l.s4 269488144
    %v2663 = vunpack.c.0.s8 %v2662
    %v2664 = vlaneseq
    %v2665 = vshrl.u32 %v2664, 7
    %v2666 = vsub.s32 %v2663, %v2665
    %v2667 = vrot.slane %v2630, %v2666
    %v2669 = vunpack.c.l.s4 842150450
    %v2670 = vunpack.c.0.s8 %v2669
    %v2671 = vlaneseq
    %v2672 = vshrl.u32 %v2671, 7
    %v2673 = vsub.s32 %v2670, %v2672
    %v2674 = vrot.slane %v2630, %v2673
    %v2676 = vunpack.c.l.s4 1414812756
    %v2677 = vunpack.c.0.s8 %v2676
    %v2678 = vlaneseq
    %v2679 = vshrl.u32 %v2678, 7
    %v2680 = vsub.s32 %v2677, %v2679
    %v2681 = vrot.slane %v2630, %v2680
    %v2683 = vunpack.c.l.s4 1987475062
    %v2684 = vunpack.c.0.s8 %v2683
    %v2685 = vlaneseq
    %v2686 = vshrl.u32 %v2685, 7
    %v2687 = vsub.s32 %v2684, %v2686
    %v2688 = vrot.slane %v2630, %v2687
    %v2697 = vsub.f32 %v2567, %v2639
    %v2698 = vsub.f32 %v2568, %v2646
    %v2699 = vsub.f32 %v2569, %v2653
    %v2700 = vsub.f32 %v2570, %v2660
    %v2701 = vsub.f32 %v2571, %v2667
    %v2702 = vsub.f32 %v2572, %v2674
    %v2703 = vsub.f32 %v2573, %v2681
    %v2704 = vsub.f32 %v2574, %v2688
    %v2705 = vmul.f32 %v2697, %v2697
    %v2706 = vmul.f32 %v2698, %v2698
    %v2707 = vmul.f32 %v2699, %v2699
    %v2708 = vmul.f32 %v2700, %v2700
    %v2709 = vmul.f32 %v2701, %v2701
    %v2710 = vmul.f32 %v2702, %v2702
    %v2711 = vmul.f32 %v2703, %v2703
    %v2712 = vmul.f32 %v2704, %v2704
    %v2721 = vcombine.low %v2705, %v2706
    %v2722 = vcombine.low %v2707, %v2708
    %v2724 = vunpack.c.l.s4 1983009808
    %v2725 = vunpack.c.0.s8 %v2724
    %v2726 = vlaneseq
    %v2727 = vshrl.u32 %v2726, 7
    %v2728 = vsub.s32 %v2725, %v2727
    %v2729 = vrot.slane %v2721, %v2728
    %v2731 = vunpack.c.l.s4 1983009808
    %v2732 = vunpack.c.0.s8 %v2731
    %v2733 = vlaneseq
    %v2734 = vshrl.u32 %v2733, 7
    %v2735 = vsub.s32 %v2732, %v2734
    %v2736 = vrot.slane %v2722, %v2735
    %v2737 = vcombine.low %v2729, %v2736
    %v2738 = vcombine.low %v2709, %v2710
    %v2739 = vcombine.low %v2711, %v2712
    %v2741 = vunpack.c.l.s4 1983009808
    %v2742 = vunpack.c.0.s8 %v2741
    %v2743 = vlaneseq
    %v2744 = vshrl.u32 %v2743, 7
    %v2745 = vsub.s32 %v2742, %v2744
    %v2746 = vrot.slane %v2738, %v2745
    %v2748 = vunpack.c.l.s4 1983009808
    %v2749 = vunpack.c.0.s8 %v2748
    %v2750 = vlaneseq
    %v2751 = vshrl.u32 %v2750, 7
    %v2752 = vsub.s32 %v2749, %v2751
    %v2753 = vrot.slane %v2739, %v2752
    %v2754 = vcombine.low %v2746, %v2753
    %v2757 = vsel %vm233, %v2737, 0.0
    %2758 = vadd.xlane.f32.xlu0 %v2757
    %v2759 = vpop.xlane.xlu0 %2758
    %v2760 = vsel %vm233, %v2754, 0.0
    %2761 = vadd.xlane.f32.xlu0 %v2760
    %v2762 = vpop.xlane.xlu0 %2761
    %v2763 = vmul.f32 %v2759, %v957
    %v2764 = vmul.f32 %v2762, %v957
    %v2765 = vadd.f32 %v2763, 1e-05
    %v2766 = vadd.f32 %v2764, 1e-05
    %v2767 = vrsqrt.pop %v2765
    %v2768 = vrsqrt.pop %v2766
    %v2772 = vunpack.c.l.s4 269488144
    %v2773 = vunpack.c.0.s8 %v2772
    %v2774 = vlaneseq
    %v2775 = vshrl.u32 %v2774, 7
    %v2776 = vsub.s32 %v2773, %v2775
    %v2777 = vrot.slane %v2767, %v2776
    %v2779 = vunpack.c.l.s4 842150450
    %v2780 = vunpack.c.0.s8 %v2779
    %v2781 = vlaneseq
    %v2782 = vshrl.u32 %v2781, 7
    %v2783 = vsub.s32 %v2780, %v2782
    %v2784 = vrot.slane %v2767, %v2783
    %v2786 = vunpack.c.l.s4 1414812756
    %v2787 = vunpack.c.0.s8 %v2786
    %v2788 = vlaneseq
    %v2789 = vshrl.u32 %v2788, 7
    %v2790 = vsub.s32 %v2787, %v2789
    %v2791 = vrot.slane %v2767, %v2790
    %v2793 = vunpack.c.l.s4 1987475062
    %v2794 = vunpack.c.0.s8 %v2793
    %v2795 = vlaneseq
    %v2796 = vshrl.u32 %v2795, 7
    %v2797 = vsub.s32 %v2794, %v2796
    %v2798 = vrot.slane %v2767, %v2797
    %v2800 = vunpack.c.l.s4 269488144
    %v2801 = vunpack.c.0.s8 %v2800
    %v2802 = vlaneseq
    %v2803 = vshrl.u32 %v2802, 7
    %v2804 = vsub.s32 %v2801, %v2803
    %v2805 = vrot.slane %v2768, %v2804
    %v2807 = vunpack.c.l.s4 842150450
    %v2808 = vunpack.c.0.s8 %v2807
    %v2809 = vlaneseq
    %v2810 = vshrl.u32 %v2809, 7
    %v2811 = vsub.s32 %v2808, %v2810
    %v2812 = vrot.slane %v2768, %v2811
    %v2814 = vunpack.c.l.s4 1414812756
    %v2815 = vunpack.c.0.s8 %v2814
    %v2816 = vlaneseq
    %v2817 = vshrl.u32 %v2816, 7
    %v2818 = vsub.s32 %v2815, %v2817
    %v2819 = vrot.slane %v2768, %v2818
    %v2821 = vunpack.c.l.s4 1987475062
    %v2822 = vunpack.c.0.s8 %v2821
    %v2823 = vlaneseq
    %v2824 = vshrl.u32 %v2823, 7
    %v2825 = vsub.s32 %v2822, %v2824
    %v2826 = vrot.slane %v2768, %v2825
    %v2835 = vmul.f32 %v2697, %v2777
    %v2836 = vmul.f32 %v2698, %v2784
    %v2837 = vmul.f32 %v2699, %v2791
    %v2838 = vmul.f32 %v2700, %v2798
    %v2839 = vmul.f32 %v2701, %v2805
    %v2840 = vmul.f32 %v2702, %v2812
    %v2841 = vmul.f32 %v2703, %v2819
    %v2842 = vmul.f32 %v2704, %v2826
    %v2844 = vlaneseq
    %v2845 = vshrl.u32 %v2844, 7
    %v2846 = vsub.s32 0, %v2845
    %v2847 = vrot.slane %v2576, %v2846
    %v2848 = vcombine.high %v2847, %v2847
    %v2850 = vunpack.c.l.s4 1983009808
    %v2851 = vunpack.c.0.s8 %v2850
    %v2852 = vlaneseq
    %v2853 = vshrl.u32 %v2852, 7
    %v2854 = vsub.s32 %v2851, %v2853
    %v2855 = vrot.slane %v2847, %v2854
    %v2857 = vunpack.c.l.s4 1983009808
    %v2858 = vunpack.c.0.s8 %v2857
    %v2859 = vlaneseq
    %v2860 = vshrl.u32 %v2859, 7
    %v2861 = vsub.s32 %v2858, %v2860
    %v2862 = vrot.slane %v2848, %v2861
    %v2863 = vcombine.high %v2855, %v2855
    %v2864 = vcombine.high %v2862, %v2862
    %v2869 = vmul.f32 %v2835, %v2855
    %v2870 = vmul.f32 %v2836, %v2863
    %v2871 = vmul.f32 %v2837, %v2862
    %v2872 = vmul.f32 %v2838, %v2864
    %v2873 = vmul.f32 %v2839, %v2855
    %v2874 = vmul.f32 %v2840, %v2863
    %v2875 = vmul.f32 %v2841, %v2862
    %v2876 = vmul.f32 %v2842, %v2864
    %v2878 = vlaneseq
    %v2879 = vshrl.u32 %v2878, 7
    %v2880 = vsub.s32 0, %v2879
    %v2881 = vrot.slane %v2578, %v2880
    %v2882 = vcombine.high %v2881, %v2881
    %v2884 = vunpack.c.l.s4 1983009808
    %v2885 = vunpack.c.0.s8 %v2884
    %v2886 = vlaneseq
    %v2887 = vshrl.u32 %v2886, 7
    %v2888 = vsub.s32 %v2885, %v2887
    %v2889 = vrot.slane %v2881, %v2888
    %v2891 = vunpack.c.l.s4 1983009808
    %v2892 = vunpack.c.0.s8 %v2891
    %v2893 = vlaneseq
    %v2894 = vshrl.u32 %v2893, 7
    %v2895 = vsub.s32 %v2892, %v2894
    %v2896 = vrot.slane %v2882, %v2895
    %v2897 = vcombine.high %v2889, %v2889
    %v2898 = vcombine.high %v2896, %v2896
    %v2903 = vadd.f32 %v2869, %v2889
    %v2904 = vadd.f32 %v2870, %v2897
    %v2905 = vadd.f32 %v2871, %v2896
    %v2906 = vadd.f32 %v2872, %v2898
    %v2907 = vadd.f32 %v2873, %v2889
    %v2908 = vadd.f32 %v2874, %v2897
    %v2909 = vadd.f32 %v2875, %v2896
    %v2910 = vadd.f32 %v2876, %v2898
    %s2911 = scalar_lea.vmem %s12, 16
    %v2912 = vld [vmem:[%s2911] sm:$0xf]
    %v2913 = vld [vmem:[%s2911 + $0x4] sm:$0xf]
    %v2914 = vld [vmem:[%s2911 + $0x8] sm:$0xf]
    %v2915 = vld [vmem:[%s2911 + $0xc] sm:$0xf]
    %s2916 = scalar_lea.vmem %s13, 1
    %v2917 = vld [vmem:[%s2916] sm:$0x1]
    %v2926 = vcombine.low %v2903, %v2904
    %v2927 = vcombine.low %v2905, %v2906
    %v2929 = vunpack.c.l.s4 1983009808
    %v2930 = vunpack.c.0.s8 %v2929
    %v2931 = vlaneseq
    %v2932 = vshrl.u32 %v2931, 7
    %v2933 = vsub.s32 %v2930, %v2932
    %v2934 = vrot.slane %v2926, %v2933
    %v2936 = vunpack.c.l.s4 1983009808
    %v2937 = vunpack.c.0.s8 %v2936
    %v2938 = vlaneseq
    %v2939 = vshrl.u32 %v2938, 7
    %v2940 = vsub.s32 %v2937, %v2939
    %v2941 = vrot.slane %v2927, %v2940
    %v2942 = vcombine.low %v2934, %v2941
    %v2943 = vcombine.low %v2907, %v2908
    %v2944 = vcombine.low %v2909, %v2910
    %v2946 = vunpack.c.l.s4 1983009808
    %v2947 = vunpack.c.0.s8 %v2946
    %v2948 = vlaneseq
    %v2949 = vshrl.u32 %v2948, 7
    %v2950 = vsub.s32 %v2947, %v2949
    %v2951 = vrot.slane %v2943, %v2950
    %v2953 = vunpack.c.l.s4 1983009808
    %v2954 = vunpack.c.0.s8 %v2953
    %v2955 = vlaneseq
    %v2956 = vshrl.u32 %v2955, 7
    %v2957 = vsub.s32 %v2954, %v2956
    %v2958 = vrot.slane %v2944, %v2957
    %v2959 = vcombine.low %v2951, %v2958
    %v2962 = vpack.c.bf16 %v2959, %v2942
    %v2964 = vlaneseq
    %v2965 = vshrl.u32 %v2964, 7
    %v2966 = vsub.s32 0, %v2965
    %v2967 = vrot.slane %v2917, %v2966
    %v2973 = vunpack.c.l.b16 %v2912
    %v2974 = vunpack.c.l.b16 %v2913
    %v2975 = vunpack.c.l.b16 %v2914
    %v2976 = vunpack.c.l.b16 %v2915
    %v2977 = vpack.c.b16 %v2974, %v2973
    %v2978 = vpack.c.b16 %v2976, %v2975
    %v2982 = vsel %vm233, %v2962, 0
    %2984 = vmatprep.subr.bf16.mxu0 0
    %2985 = vmatpush1.bf16.msra.mxu0 0
    %2986 = vmatprep.subr.bf16.mxu0 0
    %2987 = vmatpush1.bf16.msra.mxu0 0
    %2988 = vmatprep.subr.bf16.mxu0 0
    %2989 = vmatpush1.bf16.msra.mxu0 0
    %2990 = vmatprep.subr.bf16.mxu0 0
    %2991 = vmatpush1.bf16.msra.mxu0 0
    %2992 = vmatprep.subr.bf16.mxu0 0
    %2993 = vmatpush1.bf16.msra.mxu0 0
    %2994 = vmatprep.subr.bf16.mxu0 0
    %2995 = vmatpush1.bf16.msra.mxu0 0
    %2996 = vmatprep.subr.bf16.mxu0 0
    %2997 = vmatpush1.bf16.msra.mxu0 %v2978
    %2998 = vmatprep.subr.bf16.mxu0 0
    %2999 = vmatpush1.bf16.msra.mxu0 %v2977
    %3000 = vmatprep.subr.bf16.mxu0 0
    %3001 = vmatpush2.bf16.msra.mxu0 0
    %3002 = vmatprep.subr.bf16.mxu0 0
    %3003 = vmatpush2.bf16.msra.mxu0 0
    %3004 = vmatprep.subr.bf16.mxu0 0
    %3005 = vmatpush2.bf16.msra.mxu0 0
    %3006 = vmatprep.subr.bf16.mxu0 0
    %3007 = vmatpush2.bf16.msra.mxu0 0
    %3008 = vmatprep.subr.bf16.mxu0 0
    %3009 = vmatpush2.bf16.msra.mxu0 0
    %3010 = vmatprep.subr.bf16.mxu0 0
    %3011 = vmatpush2.bf16.msra.mxu0 0
    %3012 = vmatprep.subr.bf16.mxu0 0
    %3013 = vmatpush2.bf16.msra.mxu0 0
    %3014 = vmatprep.subr.bf16.mxu0 0
    %3015 = vmatpush2.bf16.msra.mxu0 0
    %3016 = vmatprep.mubr.bf16.mxu0 0
    %3017 = vmatmul.mubr.bf16.gmra.mxu0 %v2982
    %v3018 = vpop.f32.mrf.mxu0
    %v3019 = vadd.f32 %v2967, %v3018
    %v3020 = vpop.f32.mrf.mxu0
    %v3021 = vpop.f32.mrf.mxu0
    %v3022 = vadd.f32 %v2967, %v3021
    %v3023 = vpop.f32.mrf.mxu0
    %3024 = vdwg.mxu0
    %v3025 = vmul.f32 %v3019, 0.5
    %v3026 = vmul.f32 %v3022, 0.5
    %v3027 = vmul.f32 %v3019, 0.70710677
    %v3028 = vmul.f32 %v3022, 0.70710677
    %v3029 = verf.f32.pop %v3027
    %v3030 = verf.f32.pop %v3028
    %v3031 = vadd.f32 %v3029, 1.0
    %v3032 = vadd.f32 %v3030, 1.0
    %v3033 = vmul.f32 %v3025, %v3031
    %v3034 = vmul.f32 %v3026, %v3032
    %s3035 = scalar_lea.vmem %s14, 32
    %v3036 = vld [vmem:[%s3035] sm:$0xf]
    %v3037 = vld [vmem:[%s3035 + $0x4] sm:$0xf]
    %v3038 = vld [vmem:[%s3035 + $0x8] sm:$0xf]
    %v3039 = vld [vmem:[%s3035 + $0xc] sm:$0xf]
    %v3040 = vld [vmem:[%s3035 + $0x10] sm:$0xf]
    %v3041 = vld [vmem:[%s3035 + $0x14] sm:$0xf]
    %v3042 = vld [vmem:[%s3035 + $0x18] sm:$0xf]
    %v3043 = vld [vmem:[%s3035 + $0x1c] sm:$0xf]
    %s3044 = scalar_lea.vmem %s15, 1
    %v3045 = vld [vmem:[%s3044] sm:$0x1]
    %v3046 = vpack.c.bf16 %v3034, %v3033
    %v3048 = vlaneseq
    %v3049 = vshrl.u32 %v3048, 7
    %v3050 = vsub.s32 0, %v3049
    %v3051 = vrot.slane %v3045, %v3050
    %v3061 = vunpack.c.l.b16 %v3036
    %v3062 = vunpack.c.l.b16 %v3037
    %v3063 = vunpack.c.l.b16 %v3038
    %v3064 = vunpack.c.l.b16 %v3039
    %v3065 = vunpack.c.l.b16 %v3040
    %v3066 = vunpack.c.l.b16 %v3041
    %v3067 = vunpack.c.l.b16 %v3042
    %v3068 = vunpack.c.l.b16 %v3043
    %v3069 = vpack.c.b16 %v3062, %v3061
    %v3070 = vpack.c.b16 %v3064, %v3063
    %v3071 = vpack.c.b16 %v3066, %v3065
    %v3072 = vpack.c.b16 %v3068, %v3067
    %v3078 = vsel %vm1402, %v3046, 0
    %3080 = vmatprep.subr.bf16.mxu0 0
    %3081 = vmatpush1.bf16.msra.mxu0 0
    %3082 = vmatprep.subr.bf16.mxu0 0
    %3083 = vmatpush1.bf16.msra.mxu0 0
    %3084 = vmatprep.subr.bf16.mxu0 0
    %3085 = vmatpush1.bf16.msra.mxu0 0
    %3086 = vmatprep.subr.bf16.mxu0 0
    %3087 = vmatpush1.bf16.msra.mxu0 0
    %3088 = vmatprep.subr.bf16.mxu0 0
    %3089 = vmatpush1.bf16.msra.mxu0 %v3072
    %3090 = vmatprep.subr.bf16.mxu0 0
    %3091 = vmatpush1.bf16.msra.mxu0 %v3071
    %3092 = vmatprep.subr.bf16.mxu0 0
    %3093 = vmatpush1.bf16.msra.mxu0 %v3070
    %3094 = vmatprep.subr.bf16.mxu0 0
    %3095 = vmatpush1.bf16.msra.mxu0 %v3069
    %3096 = vmatprep.subr.bf16.mxu0 0
    %3097 = vmatpush2.bf16.msra.mxu0 0
    %3098 = vmatprep.subr.bf16.mxu0 0
    %3099 = vmatpush2.bf16.msra.mxu0 0
    %3100 = vmatprep.subr.bf16.mxu0 0
    %3101 = vmatpush2.bf16.msra.mxu0 0
    %3102 = vmatprep.subr.bf16.mxu0 0
    %3103 = vmatpush2.bf16.msra.mxu0 0
    %3104 = vmatprep.subr.bf16.mxu0 0
    %3105 = vmatpush2.bf16.msra.mxu0 0
    %3106 = vmatprep.subr.bf16.mxu0 0
    %3107 = vmatpush2.bf16.msra.mxu0 0
    %3108 = vmatprep.subr.bf16.mxu0 0
    %3109 = vmatpush2.bf16.msra.mxu0 0
    %3110 = vmatprep.subr.bf16.mxu0 0
    %3111 = vmatpush2.bf16.msra.mxu0 0
    %3112 = vmatprep.mubr.bf16.mxu0 0
    %3113 = vmatmul.mubr.bf16.gmra.mxu0 %v3078
    %v3114 = vpop.f32.mrf.mxu0
    %v3115 = vadd.f32 %v3051, %v3114
    %v3116 = vpop.f32.mrf.mxu0
    %v3117 = vpop.f32.mrf.mxu0
    %v3118 = vadd.f32 %v3051, %v3117
    %v3119 = vpop.f32.mrf.mxu0
    %3120 = vdwg.mxu0
    %v3123 = vcombine.high %v3115, %v3115
    %v3125 = vunpack.c.l.s4 1983009808
    %v3126 = vunpack.c.0.s8 %v3125
    %v3127 = vlaneseq
    %v3128 = vshrl.u32 %v3127, 7
    %v3129 = vsub.s32 %v3126, %v3128
    %v3130 = vrot.slane %v3115, %v3129
    %v3132 = vunpack.c.l.s4 1983009808
    %v3133 = vunpack.c.0.s8 %v3132
    %v3134 = vlaneseq
    %v3135 = vshrl.u32 %v3134, 7
    %v3136 = vsub.s32 %v3133, %v3135
    %v3137 = vrot.slane %v3123, %v3136
    %v3138 = vcombine.high %v3130, %v3130
    %v3139 = vcombine.high %v3137, %v3137
    %v3140 = vcombine.high %v3118, %v3118
    %v3142 = vunpack.c.l.s4 1983009808
    %v3143 = vunpack.c.0.s8 %v3142
    %v3144 = vlaneseq
    %v3145 = vshrl.u32 %v3144, 7
    %v3146 = vsub.s32 %v3143, %v3145
    %v3147 = vrot.slane %v3118, %v3146
    %v3149 = vunpack.c.l.s4 1983009808
    %v3150 = vunpack.c.0.s8 %v3149
    %v3151 = vlaneseq
    %v3152 = vshrl.u32 %v3151, 7
    %v3153 = vsub.s32 %v3150, %v3152
    %v3154 = vrot.slane %v3140, %v3153
    %v3155 = vcombine.high %v3147, %v3147
    %v3156 = vcombine.high %v3154, %v3154
    %v3165 = vadd.f32 %v2903, %v3130
    %v3166 = vadd.f32 %v2904, %v3138
    %v3167 = vadd.f32 %v2905, %v3137
    %v3168 = vadd.f32 %v2906, %v3139
    %v3169 = vadd.f32 %v2907, %v3147
    %v3170 = vadd.f32 %v2908, %v3155
    %v3171 = vadd.f32 %v2909, %v3154
    %v3172 = vadd.f32 %v2910, %v3156
    %s3173 = scalar_lea.vmem %s10, 1
    %v3174 = vld [vmem:[%s3173] sm:$0x1]
    %s3175 = scalar_lea.vmem %s11, 1
    %v3176 = vld [vmem:[%s3175] sm:$0x1]
    %v3185 = vcombine.low %v3165, %v3166
    %v3186 = vcombine.low %v3167, %v3168
    %v3188 = vunpack.c.l.s4 1983009808
    %v3189 = vunpack.c.0.s8 %v3188
    %v3190 = vlaneseq
    %v3191 = vshrl.u32 %v3190, 7
    %v3192 = vsub.s32 %v3189, %v3191
    %v3193 = vrot.slane %v3185, %v3192
    %v3195 = vunpack.c.l.s4 1983009808
    %v3196 = vunpack.c.0.s8 %v3195
    %v3197 = vlaneseq
    %v3198 = vshrl.u32 %v3197, 7
    %v3199 = vsub.s32 %v3196, %v3198
    %v3200 = vrot.slane %v3186, %v3199
    %v3201 = vcombine.low %v3193, %v3200
    %v3202 = vcombine.low %v3169, %v3170
    %v3203 = vcombine.low %v3171, %v3172
    %v3205 = vunpack.c.l.s4 1983009808
    %v3206 = vunpack.c.0.s8 %v3205
    %v3207 = vlaneseq
    %v3208 = vshrl.u32 %v3207, 7
    %v3209 = vsub.s32 %v3206, %v3208
    %v3210 = vrot.slane %v3202, %v3209
    %v3212 = vunpack.c.l.s4 1983009808
    %v3213 = vunpack.c.0.s8 %v3212
    %v3214 = vlaneseq
    %v3215 = vshrl.u32 %v3214, 7
    %v3216 = vsub.s32 %v3213, %v3215
    %v3217 = vrot.slane %v3203, %v3216
    %v3218 = vcombine.low %v3210, %v3217
    %v3221 = vsel %vm233, %v3201, 0.0
    %3222 = vadd.xlane.f32.xlu0 %v3221
    %v3223 = vpop.xlane.xlu0 %3222
    %v3224 = vsel %vm233, %v3218, 0.0
    %3225 = vadd.xlane.f32.xlu0 %v3224
    %v3226 = vpop.xlane.xlu0 %3225
    %v3227 = vmul.f32 %v3223, %v957
    %v3228 = vmul.f32 %v3226, %v957
    %v3232 = vunpack.c.l.s4 269488144
    %v3233 = vunpack.c.0.s8 %v3232
    %v3234 = vlaneseq
    %v3235 = vshrl.u32 %v3234, 7
    %v3236 = vsub.s32 %v3233, %v3235
    %v3237 = vrot.slane %v3227, %v3236
    %v3239 = vunpack.c.l.s4 842150450
    %v3240 = vunpack.c.0.s8 %v3239
    %v3241 = vlaneseq
    %v3242 = vshrl.u32 %v3241, 7
    %v3243 = vsub.s32 %v3240, %v3242
    %v3244 = vrot.slane %v3227, %v3243
    %v3246 = vunpack.c.l.s4 1414812756
    %v3247 = vunpack.c.0.s8 %v3246
    %v3248 = vlaneseq
    %v3249 = vshrl.u32 %v3248, 7
    %v3250 = vsub.s32 %v3247, %v3249
    %v3251 = vrot.slane %v3227, %v3250
    %v3253 = vunpack.c.l.s4 1987475062
    %v3254 = vunpack.c.0.s8 %v3253
    %v3255 = vlaneseq
    %v3256 = vshrl.u32 %v3255, 7
    %v3257 = vsub.s32 %v3254, %v3256
    %v3258 = vrot.slane %v3227, %v3257
    %v3260 = vunpack.c.l.s4 269488144
    %v3261 = vunpack.c.0.s8 %v3260
    %v3262 = vlaneseq
    %v3263 = vshrl.u32 %v3262, 7
    %v3264 = vsub.s32 %v3261, %v3263
    %v3265 = vrot.slane %v3228, %v3264
    %v3267 = vunpack.c.l.s4 842150450
    %v3268 = vunpack.c.0.s8 %v3267
    %v3269 = vlaneseq
    %v3270 = vshrl.u32 %v3269, 7
    %v3271 = vsub.s32 %v3268, %v3270
    %v3272 = vrot.slane %v3228, %v3271
    %v3274 = vunpack.c.l.s4 1414812756
    %v3275 = vunpack.c.0.s8 %v3274
    %v3276 = vlaneseq
    %v3277 = vshrl.u32 %v3276, 7
    %v3278 = vsub.s32 %v3275, %v3277
    %v3279 = vrot.slane %v3228, %v3278
    %v3281 = vunpack.c.l.s4 1987475062
    %v3282 = vunpack.c.0.s8 %v3281
    %v3283 = vlaneseq
    %v3284 = vshrl.u32 %v3283, 7
    %v3285 = vsub.s32 %v3282, %v3284
    %v3286 = vrot.slane %v3228, %v3285
    %v3295 = vsub.f32 %v3165, %v3237
    %v3296 = vsub.f32 %v3166, %v3244
    %v3297 = vsub.f32 %v3167, %v3251
    %v3298 = vsub.f32 %v3168, %v3258
    %v3299 = vsub.f32 %v3169, %v3265
    %v3300 = vsub.f32 %v3170, %v3272
    %v3301 = vsub.f32 %v3171, %v3279
    %v3302 = vsub.f32 %v3172, %v3286
    %v3303 = vmul.f32 %v3295, %v3295
    %v3304 = vmul.f32 %v3296, %v3296
    %v3305 = vmul.f32 %v3297, %v3297
    %v3306 = vmul.f32 %v3298, %v3298
    %v3307 = vmul.f32 %v3299, %v3299
    %v3308 = vmul.f32 %v3300, %v3300
    %v3309 = vmul.f32 %v3301, %v3301
    %v3310 = vmul.f32 %v3302, %v3302
    %v3319 = vcombine.low %v3303, %v3304
    %v3320 = vcombine.low %v3305, %v3306
    %v3322 = vunpack.c.l.s4 1983009808
    %v3323 = vunpack.c.0.s8 %v3322
    %v3324 = vlaneseq
    %v3325 = vshrl.u32 %v3324, 7
    %v3326 = vsub.s32 %v3323, %v3325
    %v3327 = vrot.slane %v3319, %v3326
    %v3329 = vunpack.c.l.s4 1983009808
    %v3330 = vunpack.c.0.s8 %v3329
    %v3331 = vlaneseq
    %v3332 = vshrl.u32 %v3331, 7
    %v3333 = vsub.s32 %v3330, %v3332
    %v3334 = vrot.slane %v3320, %v3333
    %v3335 = vcombine.low %v3327, %v3334
    %v3336 = vcombine.low %v3307, %v3308
    %v3337 = vcombine.low %v3309, %v3310
    %v3339 = vunpack.c.l.s4 1983009808
    %v3340 = vunpack.c.0.s8 %v3339
    %v3341 = vlaneseq
    %v3342 = vshrl.u32 %v3341, 7
    %v3343 = vsub.s32 %v3340, %v3342
    %v3344 = vrot.slane %v3336, %v3343
    %v3346 = vunpack.c.l.s4 1983009808
    %v3347 = vunpack.c.0.s8 %v3346
    %v3348 = vlaneseq
    %v3349 = vshrl.u32 %v3348, 7
    %v3350 = vsub.s32 %v3347, %v3349
    %v3351 = vrot.slane %v3337, %v3350
    %v3352 = vcombine.low %v3344, %v3351
    %v3355 = vsel %vm233, %v3335, 0.0
    %3356 = vadd.xlane.f32.xlu0 %v3355
    %v3357 = vpop.xlane.xlu0 %3356
    %v3358 = vsel %vm233, %v3352, 0.0
    %3359 = vadd.xlane.f32.xlu0 %v3358
    %v3360 = vpop.xlane.xlu0 %3359
    %v3361 = vmul.f32 %v3357, %v957
    %v3362 = vmul.f32 %v3360, %v957
    %v3363 = vadd.f32 %v3361, 1e-05
    %v3364 = vadd.f32 %v3362, 1e-05
    %v3365 = vrsqrt.pop %v3363
    %v3366 = vrsqrt.pop %v3364
    %v3370 = vunpack.c.l.s4 269488144
    %v3371 = vunpack.c.0.s8 %v3370
    %v3372 = vlaneseq
    %v3373 = vshrl.u32 %v3372, 7
    %v3374 = vsub.s32 %v3371, %v3373
    %v3375 = vrot.slane %v3365, %v3374
    %v3377 = vunpack.c.l.s4 842150450
    %v3378 = vunpack.c.0.s8 %v3377
    %v3379 = vlaneseq
    %v3380 = vshrl.u32 %v3379, 7
    %v3381 = vsub.s32 %v3378, %v3380
    %v3382 = vrot.slane %v3365, %v3381
    %v3384 = vunpack.c.l.s4 1414812756
    %v3385 = vunpack.c.0.s8 %v3384
    %v3386 = vlaneseq
    %v3387 = vshrl.u32 %v3386, 7
    %v3388 = vsub.s32 %v3385, %v3387
    %v3389 = vrot.slane %v3365, %v3388
    %v3391 = vunpack.c.l.s4 1987475062
    %v3392 = vunpack.c.0.s8 %v3391
    %v3393 = vlaneseq
    %v3394 = vshrl.u32 %v3393, 7
    %v3395 = vsub.s32 %v3392, %v3394
    %v3396 = vrot.slane %v3365, %v3395
    %v3398 = vunpack.c.l.s4 269488144
    %v3399 = vunpack.c.0.s8 %v3398
    %v3400 = vlaneseq
    %v3401 = vshrl.u32 %v3400, 7
    %v3402 = vsub.s32 %v3399, %v3401
    %v3403 = vrot.slane %v3366, %v3402
    %v3405 = vunpack.c.l.s4 842150450
    %v3406 = vunpack.c.0.s8 %v3405
    %v3407 = vlaneseq
    %v3408 = vshrl.u32 %v3407, 7
    %v3409 = vsub.s32 %v3406, %v3408
    %v3410 = vrot.slane %v3366, %v3409
    %v3412 = vunpack.c.l.s4 1414812756
    %v3413 = vunpack.c.0.s8 %v3412
    %v3414 = vlaneseq
    %v3415 = vshrl.u32 %v3414, 7
    %v3416 = vsub.s32 %v3413, %v3415
    %v3417 = vrot.slane %v3366, %v3416
    %v3419 = vunpack.c.l.s4 1987475062
    %v3420 = vunpack.c.0.s8 %v3419
    %v3421 = vlaneseq
    %v3422 = vshrl.u32 %v3421, 7
    %v3423 = vsub.s32 %v3420, %v3422
    %v3424 = vrot.slane %v3366, %v3423
    %v3433 = vmul.f32 %v3295, %v3375
    %v3434 = vmul.f32 %v3296, %v3382
    %v3435 = vmul.f32 %v3297, %v3389
    %v3436 = vmul.f32 %v3298, %v3396
    %v3437 = vmul.f32 %v3299, %v3403
    %v3438 = vmul.f32 %v3300, %v3410
    %v3439 = vmul.f32 %v3301, %v3417
    %v3440 = vmul.f32 %v3302, %v3424
    %v3442 = vlaneseq
    %v3443 = vshrl.u32 %v3442, 7
    %v3444 = vsub.s32 0, %v3443
    %v3445 = vrot.slane %v3174, %v3444
    %v3446 = vcombine.high %v3445, %v3445
    %v3448 = vunpack.c.l.s4 1983009808
    %v3449 = vunpack.c.0.s8 %v3448
    %v3450 = vlaneseq
    %v3451 = vshrl.u32 %v3450, 7
    %v3452 = vsub.s32 %v3449, %v3451
    %v3453 = vrot.slane %v3445, %v3452
    %v3455 = vunpack.c.l.s4 1983009808
    %v3456 = vunpack.c.0.s8 %v3455
    %v3457 = vlaneseq
    %v3458 = vshrl.u32 %v3457, 7
    %v3459 = vsub.s32 %v3456, %v3458
    %v3460 = vrot.slane %v3446, %v3459
    %v3461 = vcombine.high %v3453, %v3453
    %v3462 = vcombine.high %v3460, %v3460
    %v3467 = vmul.f32 %v3433, %v3453
    %v3468 = vmul.f32 %v3434, %v3461
    %v3469 = vmul.f32 %v3435, %v3460
    %v3470 = vmul.f32 %v3436, %v3462
    %v3471 = vmul.f32 %v3437, %v3453
    %v3472 = vmul.f32 %v3438, %v3461
    %v3473 = vmul.f32 %v3439, %v3460
    %v3474 = vmul.f32 %v3440, %v3462
    %v3476 = vlaneseq
    %v3477 = vshrl.u32 %v3476, 7
    %v3478 = vsub.s32 0, %v3477
    %v3479 = vrot.slane %v3176, %v3478
    %v3480 = vcombine.high %v3479, %v3479
    %v3482 = vunpack.c.l.s4 1983009808
    %v3483 = vunpack.c.0.s8 %v3482
    %v3484 = vlaneseq
    %v3485 = vshrl.u32 %v3484, 7
    %v3486 = vsub.s32 %v3483, %v3485
    %v3487 = vrot.slane %v3479, %v3486
    %v3489 = vunpack.c.l.s4 1983009808
    %v3490 = vunpack.c.0.s8 %v3489
    %v3491 = vlaneseq
    %v3492 = vshrl.u32 %v3491, 7
    %v3493 = vsub.s32 %v3490, %v3492
    %v3494 = vrot.slane %v3480, %v3493
    %v3495 = vcombine.high %v3487, %v3487
    %v3496 = vcombine.high %v3494, %v3494
    %v3501 = vadd.f32 %v3467, %v3487
    %v3502 = vadd.f32 %v3468, %v3495
    %v3503 = vadd.f32 %v3469, %v3494
    %v3504 = vadd.f32 %v3470, %v3496
    %v3505 = vadd.f32 %v3471, %v3487
    %v3506 = vadd.f32 %v3472, %v3495
    %v3507 = vadd.f32 %v3473, %v3494
    %v3508 = vadd.f32 %v3474, %v3496
    %v3509 = vld [vmem:[%s16] sm:$0xf]
    %v3510 = vld [vmem:[%s16 + $0x4] sm:$0xf]
    %v3511 = vld [vmem:[%s16 + $0x8] sm:$0xf]
    %v3512 = vld [vmem:[%s16 + $0xc] sm:$0xf]
    %v3513 = vld [vmem:[%s17] sm:$0x1]
    %v3522 = vcombine.low %v3501, %v3502
    %v3523 = vcombine.low %v3503, %v3504
    %v3525 = vunpack.c.l.s4 1983009808
    %v3526 = vunpack.c.0.s8 %v3525
    %v3527 = vlaneseq
    %v3528 = vshrl.u32 %v3527, 7
    %v3529 = vsub.s32 %v3526, %v3528
    %v3530 = vrot.slane %v3522, %v3529
    %v3532 = vunpack.c.l.s4 1983009808
    %v3533 = vunpack.c.0.s8 %v3532
    %v3534 = vlaneseq
    %v3535 = vshrl.u32 %v3534, 7
    %v3536 = vsub.s32 %v3533, %v3535
    %v3537 = vrot.slane %v3523, %v3536
    %v3538 = vcombine.low %v3530, %v3537
    %v3539 = vcombine.low %v3505, %v3506
    %v3540 = vcombine.low %v3507, %v3508
    %v3542 = vunpack.c.l.s4 1983009808
    %v3543 = vunpack.c.0.s8 %v3542
    %v3544 = vlaneseq
    %v3545 = vshrl.u32 %v3544, 7
    %v3546 = vsub.s32 %v3543, %v3545
    %v3547 = vrot.slane %v3539, %v3546
    %v3549 = vunpack.c.l.s4 1983009808
    %v3550 = vunpack.c.0.s8 %v3549
    %v3551 = vlaneseq
    %v3552 = vshrl.u32 %v3551, 7
    %v3553 = vsub.s32 %v3550, %v3552
    %v3554 = vrot.slane %v3540, %v3553
    %v3555 = vcombine.low %v3547, %v3554
    %v3558 = vpack.c.bf16 %v3555, %v3538
    %v3560 = vlaneseq
    %v3561 = vshrl.u32 %v3560, 7
    %v3562 = vsub.s32 0, %v3561
    %v3563 = vrot.slane %v3513, %v3562
    %v3569 = vunpack.c.l.b16 %v3509
    %v3570 = vunpack.c.l.b16 %v3510
    %v3571 = vunpack.c.l.b16 %v3511
    %v3572 = vunpack.c.l.b16 %v3512
    %v3573 = vpack.c.b16 %v3570, %v3569
    %v3574 = vpack.c.b16 %v3572, %v3571
    %v3578 = vsel %vm233, %v3558, 0
    %3580 = vmatprep.subr.bf16.mxu0 0
    %3581 = vmatpush1.bf16.msra.mxu0 0
    %3582 = vmatprep.subr.bf16.mxu0 0
    %3583 = vmatpush1.bf16.msra.mxu0 0
    %3584 = vmatprep.subr.bf16.mxu0 0
    %3585 = vmatpush1.bf16.msra.mxu0 0
    %3586 = vmatprep.subr.bf16.mxu0 0
    %3587 = vmatpush1.bf16.msra.mxu0 0
    %3588 = vmatprep.subr.bf16.mxu0 0
    %3589 = vmatpush1.bf16.msra.mxu0 0
    %3590 = vmatprep.subr.bf16.mxu0 0
    %3591 = vmatpush1.bf16.msra.mxu0 0
    %3592 = vmatprep.subr.bf16.mxu0 0
    %3593 = vmatpush1.bf16.msra.mxu0 %v3574
    %3594 = vmatprep.subr.bf16.mxu0 0
    %3595 = vmatpush1.bf16.msra.mxu0 %v3573
    %3596 = vmatprep.subr.bf16.mxu0 0
    %3597 = vmatpush2.bf16.msra.mxu0 0
    %3598 = vmatprep.subr.bf16.mxu0 0
    %3599 = vmatpush2.bf16.msra.mxu0 0
    %3600 = vmatprep.subr.bf16.mxu0 0
    %3601 = vmatpush2.bf16.msra.mxu0 0
    %3602 = vmatprep.subr.bf16.mxu0 0
    %3603 = vmatpush2.bf16.msra.mxu0 0
    %3604 = vmatprep.subr.bf16.mxu0 0
    %3605 = vmatpush2.bf16.msra.mxu0 0
    %3606 = vmatprep.subr.bf16.mxu0 0
    %3607 = vmatpush2.bf16.msra.mxu0 0
    %3608 = vmatprep.subr.bf16.mxu0 0
    %3609 = vmatpush2.bf16.msra.mxu0 0
    %3610 = vmatprep.subr.bf16.mxu0 0
    %3611 = vmatpush2.bf16.msra.mxu0 0
    %3612 = vmatprep.mubr.bf16.mxu0 0
    %3613 = vmatmul.mubr.bf16.gmra.mxu0 %v3578
    %v3614 = vpop.f32.mrf.mxu0
    %v3615 = vadd.f32 %v3563, %v3614
    %v3616 = vpop.f32.mrf.mxu0
    %v3617 = vpop.f32.mrf.mxu0
    %v3618 = vadd.f32 %v3563, %v3617
    %v3619 = vpop.f32.mrf.mxu0
    %3620 = vdwg.mxu0
    %v3623 = vcombine.high %v3615, %v3615
    %v3625 = vunpack.c.l.s4 1983009808
    %v3626 = vunpack.c.0.s8 %v3625
    %v3627 = vlaneseq
    %v3628 = vshrl.u32 %v3627, 7
    %v3629 = vsub.s32 %v3626, %v3628
    %v3630 = vrot.slane %v3615, %v3629
    %v3632 = vunpack.c.l.s4 1983009808
    %v3633 = vunpack.c.0.s8 %v3632
    %v3634 = vlaneseq
    %v3635 = vshrl.u32 %v3634, 7
    %v3636 = vsub.s32 %v3633, %v3635
    %v3637 = vrot.slane %v3623, %v3636
    %v3638 = vcombine.high %v3630, %v3630
    %v3639 = vcombine.high %v3637, %v3637
    %v3640 = vcombine.high %v3618, %v3618
    %v3642 = vunpack.c.l.s4 1983009808
    %v3643 = vunpack.c.0.s8 %v3642
    %v3644 = vlaneseq
    %v3645 = vshrl.u32 %v3644, 7
    %v3646 = vsub.s32 %v3643, %v3645
    %v3647 = vrot.slane %v3618, %v3646
    %v3649 = vunpack.c.l.s4 1983009808
    %v3650 = vunpack.c.0.s8 %v3649
    %v3651 = vlaneseq
    %v3652 = vshrl.u32 %v3651, 7
    %v3653 = vsub.s32 %v3650, %v3652
    %v3654 = vrot.slane %v3640, %v3653
    %v3655 = vcombine.high %v3647, %v3647
    %v3656 = vcombine.high %v3654, %v3654
    %vm3665 = vcmask 254976
    %3666 = vst.msk [vmem:[#allocation2] sm:$0x3] %vm3665, %v3630
    %3667 = vst.msk [vmem:[#allocation2 + $0x2] sm:$0x3] %vm3665, %v3638
    %3668 = vst.msk [vmem:[#allocation2 + $0x4] sm:$0x3] %vm3665, %v3637
    %3669 = vst.msk [vmem:[#allocation2 + $0x6] sm:$0x3] %vm3665, %v3639
    %3670 = vst.msk [vmem:[#allocation2 + $0x8] sm:$0x3] %vm3665, %v3647
    %3671 = vst.msk [vmem:[#allocation2 + $0xa] sm:$0x3] %vm3665, %v3655
    %3672 = vst.msk [vmem:[#allocation2 + $0xc] sm:$0x3] %vm3665, %v3654
    %3673 = vst.msk [vmem:[#allocation2 + $0xe] sm:$0x3] %vm3665, %v3656
    // Predicated region
    $region74: #{tpu_custom_call.1} parent=1 // pred_check
      _
    $region75: #{tpu_custom_call.1} parent=1 // pred_check_branch
      %3675 = sbr.rel (0) target = $region77
    $region76: #{tpu_custom_call.1} parent=1 // pred_region
      %s3677 = ssub.s32 256, 256
      %3678 = vsyncadd [#allocation3], %s3677
      %s3679 = sshll.u32 [#allocation2], 4
      %s3680 = int_to_ptr.vmem [resolvable:$true] %s3679
      %3685 = dma.vmem_to_hbm [thread:$0]  %s3680, 256, %s18, [#allocation3], 32, 32, 2
    $region77: #{tpu_custom_call.1} parent=1 // pred_fallthru
      _
    // Predicated region
    $region78: #{tpu_custom_call.1} parent=1 // pred_check
      _
    $region79: #{tpu_custom_call.1} parent=1 // pred_check_branch
      %3687 = sbr.rel (0) target = $region81
    $region80: #{tpu_custom_call.1} parent=1 // pred_region
      %3688 = dma.done [#allocation3], 256
    $region81: #{tpu_custom_call.1} parent=1 // pred_fallthru
      _
    %3689 = vsyncpa [#allocation3], 1

</llo_original>
